<compile_context>
chip_gen: v6e
topology: v6e:2x2x1
jax: 0.10.0
libtpu: 0.0.40
codegen_flags: <defaults>
</compile_context>

<pallas_src>
import functools

import jax
import jax.numpy as jnp
from jax.experimental import pallas as pl
from jax.experimental.pallas import tpu as pltpu

_NEG_BIG = -1e15
_VMEM_LIMIT = 64 * 1024 * 1024


# ----------------------------------------------------------------------------
# Kernels
# ----------------------------------------------------------------------------
def _mha_ln_kernel(q_ref, kv_ref, mask_ref,
                   wq_ref, bq_ref, wkv_ref, bkv_ref, wo_ref, bo_ref,
                   g_ref, b_ref, *outs, num_heads, head_dim, emit_scores):
    """One (batch, Lq-tile) grid step:
       fused Q / (K|V) projections -> per-head masked softmax attention written
       into a head-major context slab -> ONE full-K output projection ->
       +residual -> LayerNorm."""
    if emit_scores:
        out_ref, attn_ref, ctx_ref = outs
    else:
        out_ref, ctx_ref = outs
        attn_ref = None

    D = q_ref.shape[2]
    xq = q_ref[0]                        # (tq, D) f32 (also the residual)
    xkv = kv_ref[0]                      # (Lk, D) f32
    # Hoisted mask test: computed ONCE per grid step, reused (select) per head.
    mask_is_zero = mask_ref[0] == 0.0    # (tq, Lk) or (1, Lk) broadcast row mask

    inv_scale = jnp.float32(1.0 / (float(head_dim) ** 0.5))

    # Projections: bf16 MXU inputs, f32 accumulation. Scale folded into Q.
    q = (jnp.dot(xq.astype(jnp.bfloat16), wq_ref[...],
                 preferred_element_type=jnp.float32) + bq_ref[...]) * inv_scale
    kv = jnp.dot(xkv.astype(jnp.bfloat16), wkv_ref[...],
                 preferred_element_type=jnp.float32) + bkv_ref[...]   # (Lk, 2D)

    for h in range(num_heads):                     # static unroll over heads
        lo = h * head_dim
        qh = q[:, lo:lo + head_dim].astype(jnp.bfloat16)            # (tq, hd)
        kh = kv[:, lo:lo + head_dim].astype(jnp.bfloat16)           # (Lk, hd)
        vh = kv[:, D + lo:D + lo + head_dim].astype(jnp.bfloat16)   # (Lk, hd)

        energy = jax.lax.dot_general(qh, kh, (((1,), (1,)), ((), ())),
                                     preferred_element_type=jnp.float32)
        energy = jnp.where(mask_is_zero, jnp.float32(_NEG_BIG), energy)

        m = jnp.max(energy, axis=-1, keepdims=True)
        p = jnp.exp(energy - m)
        s = jnp.sum(p, axis=-1, keepdims=True)

        if emit_scores:
            attn = p * (jnp.float32(1.0) / s)      # (tq,1) reciprocal, bcast mul
            attn_ref[0, h] = attn
        else:
            attn = p * pl.reciprocal(s, approx=True)   # EUP slot, context only

        # Head-major column slice of the context slab (no concat, no per-head
        # output-projection matmul).
        ctx_ref[:, lo:lo + head_dim] = jnp.dot(attn.astype(jnp.bfloat16), vh,
                                               preferred_element_type=jnp.float32)

    # ONE full-K output projection, then + bias + residual, then LayerNorm.
    y = jnp.dot(ctx_ref[...].astype(jnp.bfloat16), wo_ref[...],
                preferred_element_type=jnp.float32) + bo_ref[...] + xq
    mean = jnp.mean(y, axis=-1, keepdims=True)
    var = jnp.mean(jnp.square(y - mean), axis=-1, keepdims=True)
    out_ref[0] = (y - mean) * jax.lax.rsqrt(var + 1e-5) * g_ref[...] + b_ref[...]


def _ffn_ln_kernel(x_ref, w1_ref, b1_ref, w2_ref, b2_ref, g_ref, b_ref,
                   o_ref, acc_ref):
    """out = LayerNorm(x + relu(x @ W1 + b1) @ W2 + b2), with the hidden dim F
       tiled as a reduction grid axis (accumulator init/finalize via pl.when)."""
    f = pl.program_id(1)

    @pl.when(f == 0)
    def _():
        acc_ref[...] = jnp.zeros_like(acc_ref)

    x = x_ref[...]                                                  # (rb, D) f32
    h = jnp.dot(x.astype(jnp.bfloat16), w1_ref[...],
                preferred_element_type=jnp.float32) + b1_ref[...]   # (rb, tf)
    h = jnp.maximum(h, 0.0)
    acc_ref[...] += jnp.dot(h.astype(jnp.bfloat16), w2_ref[...],
                            preferred_element_type=jnp.float32)     # (rb, D)

    @pl.when(f == pl.num_programs(1) - 1)
    def _():
        y = acc_ref[...] + b2_ref[...] + x                          # residual
        mean = jnp.mean(y, axis=-1, keepdims=True)
        var = jnp.mean(jnp.square(y - mean), axis=-1, keepdims=True)
        o_ref[...] = (y - mean) * jax.lax.rsqrt(var + 1e-5) * g_ref[...] + b_ref[...]


# ----------------------------------------------------------------------------
# Wrappers (pallas_call plumbing)
# ----------------------------------------------------------------------------
def mha_ln(q_in, kv_in, mask, p, gamma, beta, num_heads, emit_scores):
    B, Lq, D = q_in.shape
    Lk = kv_in.shape[1]
    hd = D // num_heads

    tq = Lq                                   # Lq row-tile (second parallel axis)
    for cand in (256, 128):
        if Lq % cand == 0:
            tq = cand
            break

    kernel = functools.partial(_mha_ln_kernel, num_heads=num_heads,
                               head_dim=hd, emit_scores=emit_scores)

    if mask.shape[1] == 1:                    # (B,1,Lk) padding row mask
        mask_spec = pl.BlockSpec((1, 1, Lk), lambda b, qi: (b, 0, 0))
    else:                                     # (B,Lq,Lk) dense mask
        mask_spec = pl.BlockSpec((1, tq, Lk), lambda b, qi: (b, qi, 0))

    in_specs = [
        pl.BlockSpec((1, tq, D), lambda b, qi: (b, qi, 0)),         # q / residual
        pl.BlockSpec((1, Lk, D), lambda b, qi: (b, 0, 0)),          # kv source
        mask_spec,                                                  # mask
        pl.BlockSpec((D, D), lambda b, qi: (0, 0)),                 # wq (bf16)
        pl.BlockSpec((1, D), lambda b, qi: (0, 0)),                 # bq
        pl.BlockSpec((D, 2 * D), lambda b, qi: (0, 0)),             # wkv (bf16)
        pl.BlockSpec((1, 2 * D), lambda b, qi: (0, 0)),             # bkv
        pl.BlockSpec((D, D), lambda b, qi: (0, 0)),                 # wo (bf16)
        pl.BlockSpec((1, D), lambda b, qi: (0, 0)),                 # bo
        pl.BlockSpec((1, D), lambda b, qi: (0, 0)),                 # ln gamma
        pl.BlockSpec((1, D), lambda b, qi: (0, 0)),                 # ln beta
    ]

    if emit_scores:
        out_shape = (jax.ShapeDtypeStruct((B, Lq, D), jnp.float32),
                     jax.ShapeDtypeStruct((B, num_heads, Lq, Lk), jnp.float32))
        out_specs = (pl.BlockSpec((1, tq, D), lambda b, qi: (b, qi, 0)),
                     pl.BlockSpec((1, num_heads, tq, Lk),
                                  lambda b, qi: (b, 0, qi, 0)))
    else:
        out_shape = jax.ShapeDtypeStruct((B, Lq, D), jnp.float32)
        out_specs = pl.BlockSpec((1, tq, D), lambda b, qi: (b, qi, 0))

    return pl.pallas_call(
        kernel,
        out_shape=out_shape,
        grid=(B, Lq // tq),
        in_specs=in_specs,
        out_specs=out_specs,
        scratch_shapes=[pltpu.VMEM((tq, D), jnp.float32)],          # context slab
        compiler_params=pltpu.CompilerParams(
            dimension_semantics=("parallel", "parallel"),
            vmem_limit_bytes=_VMEM_LIMIT),
    )(q_in, kv_in, mask, p["wq"], p["bq"], p["wkv"], p["bkv"], p["wo"], p["bo"],
      gamma, beta)


def ffn_ln(x, p, gamma, beta):
    B, L, D = x.shape
    F = p["w1"].shape[1]
    rows = B * L

    rb = 512                                  # generation-agnostic row block
    if rows < rb:
        rb = -(-rows // 8) * 8                # round tiny row counts up to 8
    rows_pad = -(-rows // rb) * rb            # pad instead of ragged fallback

    tf = F                                    # F reduction tile
    for cand in (2048, 1024, 512):
        if F % cand == 0:
            tf = cand
            break

    x2 = x.reshape(rows, D)
    if rows_pad != rows:
        x2 = jnp.pad(x2, ((0, rows_pad - rows), (0, 0)))

    out = pl.pallas_call(
        _ffn_ln_kernel,
        out_shape=jax.ShapeDtypeStruct((rows_pad, D), jnp.float32),
        grid=(rows_pad // rb, F // tf),
        in_specs=[pl.BlockSpec((rb, D), lambda r, f: (r, 0)),       # x / residual
                  pl.BlockSpec((D, tf), lambda r, f: (0, f)),       # w1 tile (bf16)
                  pl.BlockSpec((1, tf), lambda r, f: (0, f)),       # b1 tile
                  pl.BlockSpec((tf, D), lambda r, f: (f, 0)),       # w2 tile (bf16)
                  pl.BlockSpec((1, D), lambda r, f: (0, 0)),        # b2
                  pl.BlockSpec((1, D), lambda r, f: (0, 0)),        # ln gamma
                  pl.BlockSpec((1, D), lambda r, f: (0, 0))],       # ln beta
        out_specs=pl.BlockSpec((rb, D), lambda r, f: (r, 0)),
        scratch_shapes=[pltpu.VMEM((rb, D), jnp.float32)],
        compiler_params=pltpu.CompilerParams(
            dimension_semantics=("parallel", "arbitrary"),
            vmem_limit_bytes=_VMEM_LIMIT),
    )(x2, p["w1"], p["b1"], p["w2"], p["b2"], gamma, beta)
    return out[:rows].reshape(B, L, D)


def pack_params(params, hidden):
    """One-time weight packing (call once, reuse across forward calls):
    fused K|V weight, bf16 casts for MXU inputs, (1, D) bias/LN layouts."""
    def pack_attn(p):
        return {
            "wq": p["wq"].astype(jnp.bfloat16),
            "bq": p["bq"].reshape(1, hidden).astype(jnp.float32),
            "wkv": jnp.concatenate([p["wk"], p["wv"]], axis=1).astype(jnp.bfloat16),
            "bkv": jnp.concatenate([p["bk"], p["bv"]]).reshape(1, 2 * hidden)
                     .astype(jnp.float32),
            "wo": p["wo"].astype(jnp.bfloat16),
            "bo": p["bo"].reshape(1, hidden).astype(jnp.float32),
        }
    F = params["ffn"]["w1"].shape[1]
    return {
        "self_attn": pack_attn(params["self_attn"]),
        "cross_attn": pack_attn(params["cross_attn"]),
        "ffn": {"w1": params["ffn"]["w1"].astype(jnp.bfloat16),
                "b1": params["ffn"]["b1"].reshape(1, F).astype(jnp.float32),
                "w2": params["ffn"]["w2"].astype(jnp.bfloat16),
                "b2": params["ffn"]["b2"].reshape(1, hidden).astype(jnp.float32)},
        "ln1_g": params["ln1_g"].reshape(1, hidden),
        "ln1_b": params["ln1_b"].reshape(1, hidden),
        "ln2_g": params["ln2_g"].reshape(1, hidden),
        "ln2_b": params["ln2_b"].reshape(1, hidden),
        "ln3_g": params["ln3_g"].reshape(1, hidden),
        "ln3_b": params["ln3_b"].reshape(1, hidden),
    }


def decoder_block(target, encoder_source, source_mask, target_mask, packed,
                  num_heads):
    B, Lt, D = target.shape
    Ls = encoder_source.shape[1]

    # Self-attention mask (B,1,Lt,Lt) -> dense per-batch (B,Lt,Lt) (general).
    tmask = jnp.broadcast_to(target_mask, (B, 1, Lt, Lt))[:, 0].astype(jnp.float32)
    # Cross-attention padding mask (B,1,1,Ls) -> compact (B,1,Ls) row mask,
    # broadcast inside the kernel (avoids streaming a dense (Lt,Ls) mask).
    if source_mask.shape[-2] == 1:
        smask = source_mask.reshape(B, 1, Ls).astype(jnp.float32)
    else:
        smask = jnp.broadcast_to(source_mask, (B, 1, Lt, Ls))[:, 0].astype(jnp.float32)

    # 1) masked self-attention + residual + LN (scores discarded -> not emitted)
    target = mha_ln(target, target, tmask, packed["self_attn"],
                    packed["ln1_g"], packed["ln1_b"], num_heads, emit_scores=False)

    # 2) cross-attention over encoder output + residual + LN (emits scores)
    target, cross_scores = mha_ln(target, encoder_source, smask,
                                  packed["cross_attn"], packed["ln2_g"],
                                  packed["ln2_b"], num_heads, emit_scores=True)

    # 3) pointwise feed-forward + residual + LN
    target = ffn_ln(target, packed["ffn"], packed["ln3_g"], packed["ln3_b"])

    return target, cross_scores


# ----------------------------------------------------------------------------
# Pure-JAX f32 reference (mirrors the PyTorch forward, for correctness check)
# ----------------------------------------------------------------------------
def _ref_mha(q_in, kv_in, mask, p, num_heads):
    B, Lq, D = q_in.shape
    Lk = kv_in.shape[1]
    hd = D // num_heads
    Q = q_in @ p["wq"] + p["bq"]
    K = kv_in @ p["wk"] + p["bk"]
    V = kv_in @ p["wv"] + p["bv"]
    def split(x, L):
        return x.reshape(B, L, num_heads, hd).transpose(0, 2, 1, 3)
    Qh, Kh, Vh = split(Q, Lq), split(K, Lk), split(V, Lk)
    energy = jnp.einsum("bhqd,bhkd->bhqk", Qh, Kh) / jnp.sqrt(jnp.float32(hd))
    energy = jnp.where(mask[:, None, :, :] == 0, -1e15, energy)
    attn = jax.nn.softmax(energy, axis=-1)
    ctx = jnp.einsum("bhqk,bhkd->bhqd", attn, Vh).transpose(0, 2, 1, 3).reshape(B, Lq, D)
    return ctx @ p["wo"] + p["bo"], attn


def _ref_ln(y, g, b):
    mean = jnp.mean(y, axis=-1, keepdims=True)
    var = jnp.mean(jnp.square(y - mean), axis=-1, keepdims=True)
    return (y - mean) * jax.lax.rsqrt(var + 1e-5) * g + b


def _ref_decoder(target, enc, smask4, tmask4, params, num_heads):
    B, Lt, D = target.shape
    Ls = enc.shape[1]
    tmask = jnp.broadcast_to(tmask4, (B, 1, Lt, Lt))[:, 0]
    smask = jnp.broadcast_to(smask4, (B, 1, Lt, Ls))[:, 0]
    sc, _ = _ref_mha(target, target, tmask, params["self_attn"], num_heads)
    target = _ref_ln(target + sc, params["ln1_g"], params["ln1_b"])
    cc, scores = _ref_mha(target, enc, smask, params["cross_attn"], num_heads)
    target = _ref_ln(target + cc, params["ln2_g"], params["ln2_b"])
    ff = jnp.maximum(target @ params["ffn"]["w1"] + params["ffn"]["b1"], 0.0)
    ff = ff @ params["ffn"]["w2"] + params["ffn"]["b2"]
    target = _ref_ln(target + ff, params["ln3_g"], params["ln3_b"])
    return target, scores


# ----------------------------------------------------------------------------
# Deterministic parameter init + main
# ----------------------------------------------------------------------------
def init_params(key, hidden, heads, ff_dim):
    ks = jax.random.split(key, 12)
    def lin(k, din, dout):
        return 0.05 * jax.random.normal(k, (din, dout), jnp.float32)
    def attn_params(kset):
        return {"wq": lin(kset[0], hidden, hidden), "bq": jnp.zeros((hidden,), jnp.float32),
                "wk": lin(kset[1], hidden, hidden), "bk": jnp.zeros((hidden,), jnp.float32),
                "wv": lin(kset[2], hidden, hidden), "bv": jnp.zeros((hidden,), jnp.float32),
                "wo": lin(kset[3], hidden, hidden), "bo": jnp.zeros((hidden,), jnp.float32)}
    return {
        "self_attn": attn_params(ks[0:4]),
        "cross_attn": attn_params(ks[4:8]),
        "ffn": {"w1": lin(ks[8], hidden, ff_dim), "b1": 0.01 * jnp.ones((ff_dim,), jnp.float32),
                "w2": lin(ks[9], ff_dim, hidden), "b2": 0.01 * jnp.ones((hidden,), jnp.float32)},
        "ln1_g": jnp.ones((hidden,), jnp.float32), "ln1_b": jnp.zeros((hidden,), jnp.float32),
        "ln2_g": jnp.ones((hidden,), jnp.float32), "ln2_b": jnp.zeros((hidden,), jnp.float32),
        "ln3_g": jnp.ones((hidden,), jnp.float32), "ln3_b": jnp.zeros((hidden,), jnp.float32),
    }


if __name__ == "__main__":
    B, Lt, Ls, D, H, FF = 2, 8, 8, 32, 4, 64

    key = jax.random.PRNGKey(0)
    k_tgt, k_src, k_par = jax.random.split(key, 3)
    target = jax.random.normal(k_tgt, (B, Lt, D), jnp.float32)
    encoder_source = jax.random.normal(k_src, (B, Ls, D), jnp.float32)

    # PyTorch-style masks: target = causal (B,1,Lt,Lt), source = all-valid (B,1,1,Ls)
    target_mask = jnp.tril(jnp.ones((Lt, Lt), jnp.float32))[None, None]
    target_mask = jnp.broadcast_to(target_mask, (B, 1, Lt, Lt))
    source_mask = jnp.ones((B, 1, 1, Ls), jnp.float32)

    params = init_params(k_par, D, H, FF)
    packed = pack_params(params, D)     # one-time packing, reused every call

    fwd = jax.jit(decoder_block, static_argnames=("num_heads",))
    out, cross_scores = fwd(target, encoder_source, source_mask, target_mask,
                            packed, num_heads=H)
    out = jax.block_until_ready(out)
    cross_scores = jax.block_until_ready(cross_scores)

    # Correctness check vs. pure-f32 reference. Kernels use bf16 MXU inputs
    # (f32 accumulation, f32 softmax/LN stats), so tolerances are sized for
    # bf16 rounding (~1e-2 on LN-normalized activations, ~1e-3 on probs).
    ref_out, ref_scores = _ref_decoder(target, encoder_source, source_mask,
                                       target_mask, params, H)
    assert out.shape == (B, Lt, D) and cross_scores.shape == (B, H, Lt, Ls)
    assert jnp.allclose(out, ref_out, atol=5e-2), "output mismatch"
    assert jnp.allclose(cross_scores, ref_scores, atol=2e-2), "attention mismatch"

    print("KERNEL_OK")
</pallas_src>

<mosaic_0001>
module attributes {stable_mosaic.version = 11 : i64} {
  func.func @_ffn_ln_kernel(%arg0: i32, %arg1: i32, %arg2: memref<16x32xf32, #tpu.memory_space<vmem>>, %arg3: memref<32x64xbf16, #tpu.memory_space<vmem>>, %arg4: memref<1x64xf32, #tpu.memory_space<vmem>>, %arg5: memref<64x32xbf16, #tpu.memory_space<vmem>>, %arg6: memref<1x32xf32, #tpu.memory_space<vmem>>, %arg7: memref<1x32xf32, #tpu.memory_space<vmem>>, %arg8: memref<1x32xf32, #tpu.memory_space<vmem>>, %arg9: memref<16x32xf32, #tpu.memory_space<vmem>>, %arg10: memref<16x32xf32, #tpu.memory_space<vmem>>) attributes {dimension_semantics = [#tpu.dimension_semantics<parallel>, #tpu.dimension_semantics<arbitrary>], iteration_bounds = array<i64: 1, 1>, scalar_prefetch = 0 : i64, scratch_operands = 1 : i64, tpu.core_type = #tpu.core_type<tc>, window_params = [{transform_indices = @transform_0, window_bounds = array<i64: 16, 32>}, {transform_indices = @transform_1, window_bounds = array<i64: 32, 64>}, {transform_indices = @transform_2, window_bounds = array<i64: 1, 64>}, {transform_indices = @transform_3, window_bounds = array<i64: 64, 32>}, {pipeline_mode = #tpu.pipeline_mode<synchronous>, transform_indices = @transform_4, window_bounds = array<i64: 1, 32>}, {pipeline_mode = #tpu.pipeline_mode<synchronous>, transform_indices = @transform_5, window_bounds = array<i64: 1, 32>}, {pipeline_mode = #tpu.pipeline_mode<synchronous>, transform_indices = @transform_6, window_bounds = array<i64: 1, 32>}, {transform_indices = @transform_7, window_bounds = array<i64: 16, 32>}]} {
    %c0_i32 = arith.constant 0 : i32
    %0 = arith.cmpi eq, %arg1, %c0_i32 : i32
    %1 = arith.extui %0 : i1 to i32
    %c0_i32_0 = arith.constant 0 : i32
    %2 = arith.cmpi ne, %1, %c0_i32_0 : i32
    scf.if %2 {
      %cst_16 = arith.constant 0.000000e+00 : f32
      %21 = vector.broadcast %cst_16 : f32 to vector<16x32xf32>
      %c0_17 = arith.constant 0 : index
      %c0_18 = arith.constant 0 : index
      %22 = vector.load %arg10[%c0_17, %c0_18] : memref<16x32xf32, #tpu.memory_space<vmem>>, vector<16x32xf32>
      tpu.vector_store %arg10[%c0_17, %c0_18], %21 {strides = array<i32>} : memref<16x32xf32, #tpu.memory_space<vmem>>, vector<16x32xf32>,
    } else {
    }
    %c0 = arith.constant 0 : index
    %c0_1 = arith.constant 0 : index
    %3 = vector.load %arg2[%c0, %c0_1] : memref<16x32xf32, #tpu.memory_space<vmem>>, vector<16x32xf32>
    %4 = arith.truncf %3 : vector<16x32xf32> to vector<16x32xbf16>
    %c0_2 = arith.constant 0 : index
    %c0_3 = arith.constant 0 : index
    %5 = vector.load %arg3[%c0_2, %c0_3] : memref<32x64xbf16, #tpu.memory_space<vmem>>, vector<32x64xbf16>
    %cst = arith.constant dense<0.000000e+00> : vector<16x64xf32>
    %6 = tpu.matmul %4, %5, %cst {dimension_numbers = #tpu.dot_dimension_numbers<[1], [0], [0], [1], [0, 0, 1, 1], [], []>} : vector<16x32xbf16>, vector<32x64xbf16>, vector<16x64xf32> -> vector<16x64xf32>
    %c0_4 = arith.constant 0 : index
    %c0_5 = arith.constant 0 : index
    %7 = vector.load %arg4[%c0_4, %c0_5] : memref<1x64xf32, #tpu.memory_space<vmem>>, vector<1x64xf32>
    %8 = vector.broadcast %7 : vector<1x64xf32> to vector<16x64xf32>
    %9 = arith.addf %6, %8 : vector<16x64xf32>
    %cst_6 = arith.constant 0.000000e+00 : f32
    %10 = vector.broadcast %cst_6 : f32 to vector<16x64xf32>
    %11 = arith.maximumf %9, %10 : vector<16x64xf32>
    %c0_7 = arith.constant 0 : index
    %c0_8 = arith.constant 0 : index
    %12 = vector.load %arg10[%c0_7, %c0_8] : memref<16x32xf32, #tpu.memory_space<vmem>>, vector<16x32xf32>
    %13 = arith.truncf %11 : vector<16x64xf32> to vector<16x64xbf16>
    %c0_9 = arith.constant 0 : index
    %c0_10 = arith.constant 0 : index
    %14 = vector.load %arg5[%c0_9, %c0_10] : memref<64x32xbf16, #tpu.memory_space<vmem>>, vector<64x32xbf16>
    %cst_11 = arith.constant dense<0.000000e+00> : vector<16x32xf32>
    %15 = tpu.matmul %13, %14, %cst_11 {dimension_numbers = #tpu.dot_dimension_numbers<[1], [0], [0], [1], [0, 0, 1, 1], [], []>} : vector<16x64xbf16>, vector<64x32xbf16>, vector<16x32xf32> -> vector<16x32xf32>
    %16 = arith.addf %12, %15 : vector<16x32xf32>
    %c0_12 = arith.constant 0 : index
    %c0_13 = arith.constant 0 : index
    %17 = vector.load %arg10[%c0_12, %c0_13] : memref<16x32xf32, #tpu.memory_space<vmem>>, vector<16x32xf32>
    tpu.vector_store %arg10[%c0_12, %c0_13], %16 {strides = array<i32>} : memref<16x32xf32, #tpu.memory_space<vmem>>, vector<16x32xf32>,
    %c0_i32_14 = arith.constant 0 : i32
    %18 = arith.cmpi eq, %arg1, %c0_i32_14 : i32
    %19 = arith.extui %18 : i1 to i32
    %c0_i32_15 = arith.constant 0 : i32
    %20 = arith.cmpi ne, %19, %c0_i32_15 : i32
    scf.if %20 {
      %c0_16 = arith.constant 0 : index
      %c0_17 = arith.constant 0 : index
      %21 = vector.load %arg10[%c0_16, %c0_17] : memref<16x32xf32, #tpu.memory_space<vmem>>, vector<16x32xf32>
      %c0_18 = arith.constant 0 : index
      %c0_19 = arith.constant 0 : index
      %22 = vector.load %arg6[%c0_18, %c0_19] : memref<1x32xf32, #tpu.memory_space<vmem>>, vector<1x32xf32>
      %23 = vector.broadcast %22 : vector<1x32xf32> to vector<16x32xf32>
      %24 = arith.addf %21, %23 : vector<16x32xf32>
      %25 = arith.addf %24, %3 : vector<16x32xf32>
      %cst_20 = arith.constant dense<0.000000e+00> : vector<16xf32>
      %26 = vector.multi_reduction <add>, %25, %cst_20 [1] : vector<16x32xf32> to vector<16xf32>
      %27 = vector.shape_cast %26 : vector<16xf32> to vector<16x1xf32>
      %cst_21 = arith.constant 3.200000e+01 : f32
      %28 = vector.broadcast %cst_21 : f32 to vector<16x1xf32>
      %29 = arith.divf %27, %28 : vector<16x1xf32>
      %30 = vector.broadcast %29 : vector<16x1xf32> to vector<16x32xf32>
      %31 = arith.subf %25, %30 : vector<16x32xf32>
      %32 = arith.mulf %31, %31 : vector<16x32xf32>
      %cst_22 = arith.constant dense<0.000000e+00> : vector<16xf32>
      %33 = vector.multi_reduction <add>, %32, %cst_22 [1] : vector<16x32xf32> to vector<16xf32>
      %34 = vector.shape_cast %33 : vector<16xf32> to vector<16x1xf32>
      %cst_23 = arith.constant 3.200000e+01 : f32
      %35 = vector.broadcast %cst_23 : f32 to vector<16x1xf32>
      %36 = arith.divf %34, %35 : vector<16x1xf32>
      %37 = vector.broadcast %29 : vector<16x1xf32> to vector<16x32xf32>
      %38 = arith.subf %25, %37 : vector<16x32xf32>
      %cst_24 = arith.constant 9.99999974E-6 : f32
      %39 = vector.broadcast %cst_24 : f32 to vector<16x1xf32>
      %40 = arith.addf %36, %39 : vector<16x1xf32>
      %41 = math.rsqrt %40 : vector<16x1xf32>
      %42 = vector.broadcast %41 : vector<16x1xf32> to vector<16x32xf32>
      %43 = arith.mulf %38, %42 : vector<16x32xf32>
      %c0_25 = arith.constant 0 : index
      %c0_26 = arith.constant 0 : index
      %44 = vector.load %arg7[%c0_25, %c0_26] : memref<1x32xf32, #tpu.memory_space<vmem>>, vector<1x32xf32>
      %45 = vector.broadcast %44 : vector<1x32xf32> to vector<16x32xf32>
      %46 = arith.mulf %43, %45 : vector<16x32xf32>
      %c0_27 = arith.constant 0 : index
      %c0_28 = arith.constant 0 : index
      %47 = vector.load %arg8[%c0_27, %c0_28] : memref<1x32xf32, #tpu.memory_space<vmem>>, vector<1x32xf32>
      %48 = vector.broadcast %47 : vector<1x32xf32> to vector<16x32xf32>
      %49 = arith.addf %46, %48 : vector<16x32xf32>
      %c0_29 = arith.constant 0 : index
      %c0_30 = arith.constant 0 : index
      %50 = vector.load %arg9[%c0_29, %c0_30] : memref<16x32xf32, #tpu.memory_space<vmem>>, vector<16x32xf32>
      tpu.vector_store %arg9[%c0_29, %c0_30], %49 {strides = array<i32>} : memref<16x32xf32, #tpu.memory_space<vmem>>, vector<16x32xf32>,
    } else {
    }
    return
  }
  func.func @transform_0(%arg0: i32, %arg1: i32) -> (i32, i32) {
    %c0_i32 = arith.constant 0 : i32
    %c0_i32_0 = arith.constant 0 : i32
    return %arg0, %c0_i32 : i32, i32
  }
  func.func @transform_1(%arg0: i32, %arg1: i32) -> (i32, i32) {
    %c0_i32 = arith.constant 0 : i32
    %c0_i32_0 = arith.constant 0 : i32
    return %c0_i32, %arg1 : i32, i32
  }
  func.func @transform_2(%arg0: i32, %arg1: i32) -> (i32, i32) {
    %c0_i32 = arith.constant 0 : i32
    %c0_i32_0 = arith.constant 0 : i32
    return %c0_i32, %arg1 : i32, i32
  }
  func.func @transform_3(%arg0: i32, %arg1: i32) -> (i32, i32) {
    %c0_i32 = arith.constant 0 : i32
    %c0_i32_0 = arith.constant 0 : i32
    return %arg1, %c0_i32 : i32, i32
  }
  func.func @transform_4(%arg0: i32, %arg1: i32) -> (i32, i32) {
    %c0_i32 = arith.constant 0 : i32
    %c0_i32_0 = arith.constant 0 : i32
    %c0_i32_1 = arith.constant 0 : i32
    return %c0_i32, %c0_i32_0 : i32, i32
  }
  func.func @transform_5(%arg0: i32, %arg1: i32) -> (i32, i32) {
    %c0_i32 = arith.constant 0 : i32
    %c0_i32_0 = arith.constant 0 : i32
    %c0_i32_1 = arith.constant 0 : i32
    return %c0_i32, %c0_i32_0 : i32, i32
  }
  func.func @transform_6(%arg0: i32, %arg1: i32) -> (i32, i32) {
    %c0_i32 = arith.constant 0 : i32
    %c0_i32_0 = arith.constant 0 : i32
    %c0_i32_1 = arith.constant 0 : i32
    return %c0_i32, %c0_i32_0 : i32, i32
  }
  func.func @transform_7(%arg0: i32, %arg1: i32) -> (i32, i32) {
    %c0_i32 = arith.constant 0 : i32
    %c0_i32_0 = arith.constant 0 : i32
    return %arg0, %c0_i32 : i32, i32
  }
}

module attributes {stable_mosaic.version = 11 : i64} {
  func.func @_mha_ln_kernel(%arg0: i32, %arg1: i32, %arg2: memref<1x8x32xf32, #tpu.memory_space<vmem>>, %arg3: memref<1x8x32xf32, #tpu.memory_space<vmem>>, %arg4: memref<1x1x8xf32, #tpu.memory_space<vmem>>, %arg5: memref<32x32xbf16, #tpu.memory_space<vmem>>, %arg6: memref<1x32xf32, #tpu.memory_space<vmem>>, %arg7: memref<32x64xbf16, #tpu.memory_space<vmem>>, %arg8: memref<1x64xf32, #tpu.memory_space<vmem>>, %arg9: memref<32x32xbf16, #tpu.memory_space<vmem>>, %arg10: memref<1x32xf32, #tpu.memory_space<vmem>>, %arg11: memref<1x32xf32, #tpu.memory_space<vmem>>, %arg12: memref<1x32xf32, #tpu.memory_space<vmem>>, %arg13: memref<1x8x32xf32, #tpu.memory_space<vmem>>, %arg14: memref<1x4x8x8xf32, #tpu.memory_space<vmem>>, %arg15: memref<8x32xf32, #tpu.memory_space<vmem>>) attributes {dimension_semantics = [#tpu.dimension_semantics<parallel>, #tpu.dimension_semantics<parallel>], iteration_bounds = array<i64: 2, 1>, scalar_prefetch = 0 : i64, scratch_operands = 1 : i64, tpu.core_type = #tpu.core_type<tc>, window_params = [{transform_indices = @transform_0, window_bounds = array<i64: 1, 8, 32>}, {transform_indices = @transform_1, window_bounds = array<i64: 1, 8, 32>}, {transform_indices = @transform_2, window_bounds = array<i64: 1, 1, 8>}, {pipeline_mode = #tpu.pipeline_mode<synchronous>, transform_indices = @transform_3, window_bounds = array<i64: 32, 32>}, {pipeline_mode = #tpu.pipeline_mode<synchronous>, transform_indices = @transform_4, window_bounds = array<i64: 1, 32>}, {pipeline_mode = #tpu.pipeline_mode<synchronous>, transform_indices = @transform_5, window_bounds = array<i64: 32, 64>}, {pipeline_mode = #tpu.pipeline_mode<synchronous>, transform_indices = @transform_6, window_bounds = array<i64: 1, 64>}, {pipeline_mode = #tpu.pipeline_mode<synchronous>, transform_indices = @transform_7, window_bounds = array<i64: 32, 32>}, {pipeline_mode = #tpu.pipeline_mode<synchronous>, transform_indices = @transform_8, window_bounds = array<i64: 1, 32>}, {pipeline_mode = #tpu.pipeline_mode<synchronous>, transform_indices = @transform_9, window_bounds = array<i64: 1, 32>}, {pipeline_mode = #tpu.pipeline_mode<synchronous>, transform_indices = @transform_10, window_bounds = array<i64: 1, 32>}, {transform_indices = @transform_11, window_bounds = array<i64: 1, 8, 32>}, {transform_indices = @transform_12, window_bounds = array<i64: 1, 4, 8, 8>}]} {
    %c0 = arith.constant 0 : index
    %c0_0 = arith.constant 0 : index
    %c0_1 = arith.constant 0 : index
    %0 = vector.load %arg2[%c0, %c0_0, %c0_1] : memref<1x8x32xf32, #tpu.memory_space<vmem>>, vector<1x8x32xf32>
    %1 = vector.shape_cast %0 : vector<1x8x32xf32> to vector<8x32xf32>
    %c0_2 = arith.constant 0 : index
    %c0_3 = arith.constant 0 : index
    %c0_4 = arith.constant 0 : index
    %2 = vector.load %arg3[%c0_2, %c0_3, %c0_4] : memref<1x8x32xf32, #tpu.memory_space<vmem>>, vector<1x8x32xf32>
    %3 = vector.shape_cast %2 : vector<1x8x32xf32> to vector<8x32xf32>
    %c0_5 = arith.constant 0 : index
    %c0_6 = arith.constant 0 : index
    %c0_7 = arith.constant 0 : index
    %4 = vector.load %arg4[%c0_5, %c0_6, %c0_7] : memref<1x1x8xf32, #tpu.memory_space<vmem>>, vector<1x1x8xf32>
    %5 = vector.shape_cast %4 : vector<1x1x8xf32> to vector<1x8xf32>
    %cst = arith.constant 0.000000e+00 : f32
    %6 = vector.broadcast %cst : f32 to vector<1x8xf32>
    %7 = arith.cmpf oeq, %5, %6 : vector<1x8xf32>
    %8 = arith.truncf %1 : vector<8x32xf32> to vector<8x32xbf16>
    %c0_8 = arith.constant 0 : index
    %c0_9 = arith.constant 0 : index
    %9 = vector.load %arg5[%c0_8, %c0_9] : memref<32x32xbf16, #tpu.memory_space<vmem>>, vector<32x32xbf16>
    %cst_10 = arith.constant dense<0.000000e+00> : vector<8x32xf32>
    %10 = tpu.matmul %8, %9, %cst_10 {dimension_numbers = #tpu.dot_dimension_numbers<[1], [0], [0], [1], [0, 0, 1, 1], [], []>} : vector<8x32xbf16>, vector<32x32xbf16>, vector<8x32xf32> -> vector<8x32xf32>
    %c0_11 = arith.constant 0 : index
    %c0_12 = arith.constant 0 : index
    %11 = vector.load %arg6[%c0_11, %c0_12] : memref<1x32xf32, #tpu.memory_space<vmem>>, vector<1x32xf32>
    %12 = vector.broadcast %11 : vector<1x32xf32> to vector<8x32xf32>
    %13 = arith.addf %10, %12 : vector<8x32xf32>
    %cst_13 = arith.constant 0.353553385 : f32
    %14 = vector.broadcast %cst_13 : f32 to vector<8x32xf32>
    %15 = arith.mulf %13, %14 : vector<8x32xf32>
    %16 = arith.truncf %3 : vector<8x32xf32> to vector<8x32xbf16>
    %c0_14 = arith.constant 0 : index
    %c0_15 = arith.constant 0 : index
    %17 = vector.load %arg7[%c0_14, %c0_15] : memref<32x64xbf16, #tpu.memory_space<vmem>>, vector<32x64xbf16>
    %cst_16 = arith.constant dense<0.000000e+00> : vector<8x64xf32>
    %18 = tpu.matmul %16, %17, %cst_16 {dimension_numbers = #tpu.dot_dimension_numbers<[1], [0], [0], [1], [0, 0, 1, 1], [], []>} : vector<8x32xbf16>, vector<32x64xbf16>, vector<8x64xf32> -> vector<8x64xf32>
    %c0_17 = arith.constant 0 : index
    %c0_18 = arith.constant 0 : index
    %19 = vector.load %arg8[%c0_17, %c0_18] : memref<1x64xf32, #tpu.memory_space<vmem>>, vector<1x64xf32>
    %20 = vector.broadcast %19 : vector<1x64xf32> to vector<8x64xf32>
    %21 = arith.addf %18, %20 : vector<8x64xf32>
    %22 = vector.extract_strided_slice %15 {offsets = [0, 0], sizes = [8, 8], strides = [1, 1]} : vector<8x32xf32> to vector<8x8xf32>
    %23 = arith.truncf %22 : vector<8x8xf32> to vector<8x8xbf16>
    %24 = vector.extract_strided_slice %21 {offsets = [0, 0], sizes = [8, 8], strides = [1, 1]} : vector<8x64xf32> to vector<8x8xf32>
    %25 = arith.truncf %24 : vector<8x8xf32> to vector<8x8xbf16>
    %26 = vector.extract_strided_slice %21 {offsets = [0, 32], sizes = [8, 8], strides = [1, 1]} : vector<8x64xf32> to vector<8x8xf32>
    %27 = arith.truncf %26 : vector<8x8xf32> to vector<8x8xbf16>
    %cst_19 = arith.constant dense<0.000000e+00> : vector<8x8xf32>
    %28 = tpu.matmul %23, %25, %cst_19 {dimension_numbers = #tpu.dot_dimension_numbers<[1], [1], [0], [0], [0, 0, 1, 0], [], []>} : vector<8x8xbf16>, vector<8x8xbf16>, vector<8x8xf32> -> vector<8x8xf32>
    %cst_20 = arith.constant -9.99999986E+14 : f32
    %29 = vector.shape_cast %7 : vector<1x8xi1> to vector<1x8xi1>
    %30 = vector.broadcast %29 : vector<1x8xi1> to vector<8x8xi1>
    %31 = vector.broadcast %cst_20 : f32 to vector<8x8xf32>
    %32 = arith.select %30, %31, %28 : vector<8x8xi1>, vector<8x8xf32>
    %cst_21 = arith.constant dense<0xFF800000> : vector<8xf32>
    %33 = vector.multi_reduction <maximumf>, %32, %cst_21 [1] : vector<8x8xf32> to vector<8xf32>
    %34 = vector.shape_cast %33 : vector<8xf32> to vector<8x1xf32>
    %35 = vector.broadcast %34 : vector<8x1xf32> to vector<8x8xf32>
    %36 = arith.subf %32, %35 : vector<8x8xf32>
    %37 = math.exp %36 : vector<8x8xf32>
    %cst_22 = arith.constant dense<0.000000e+00> : vector<8xf32>
    %38 = vector.multi_reduction <add>, %37, %cst_22 [1] : vector<8x8xf32> to vector<8xf32>
    %39 = vector.shape_cast %38 : vector<8xf32> to vector<8x1xf32>
    %cst_23 = arith.constant 1.000000e+00 : f32
    %40 = vector.broadcast %cst_23 : f32 to vector<8x1xf32>
    %41 = arith.divf %40, %39 : vector<8x1xf32>
    %42 = vector.broadcast %41 : vector<8x1xf32> to vector<8x8xf32>
    %43 = arith.mulf %37, %42 : vector<8x8xf32>
    %c0_24 = arith.constant 0 : index
    %c0_25 = arith.constant 0 : index
    %c0_26 = arith.constant 0 : index
    %c0_27 = arith.constant 0 : index
    %44 = vector.load %arg14[%c0_24, %c0_25, %c0_26, %c0_27] : memref<1x4x8x8xf32, #tpu.memory_space<vmem>>, vector<1x1x8x8xf32>
    %45 = vector.shape_cast %44 : vector<1x1x8x8xf32> to vector<8x8xf32>
    %46 = vector.shape_cast %43 : vector<8x8xf32> to vector<1x1x8x8xf32>
    tpu.vector_store %arg14[%c0_24, %c0_25, %c0_26, %c0_27], %46 {strides = array<i32>} : memref<1x4x8x8xf32, #tpu.memory_space<vmem>>, vector<1x1x8x8xf32>,
    %47 = arith.truncf %43 : vector<8x8xf32> to vector<8x8xbf16>
    %cst_28 = arith.constant dense<0.000000e+00> : vector<8x8xf32>
    %48 = tpu.matmul %47, %27, %cst_28 {dimension_numbers = #tpu.dot_dimension_numbers<[1], [0], [0], [1], [0, 0, 1, 1], [], []>} : vector<8x8xbf16>, vector<8x8xbf16>, vector<8x8xf32> -> vector<8x8xf32>
    %c0_29 = arith.constant 0 : index
    %c0_30 = arith.constant 0 : index
    %49 = vector.load %arg15[%c0_29, %c0_30] : memref<8x32xf32, #tpu.memory_space<vmem>>, vector<8x8xf32>
    tpu.vector_store %arg15[%c0_29, %c0_30], %48 {strides = array<i32>} : memref<8x32xf32, #tpu.memory_space<vmem>>, vector<8x8xf32>,
    %50 = vector.extract_strided_slice %15 {offsets = [0, 8], sizes = [8, 8], strides = [1, 1]} : vector<8x32xf32> to vector<8x8xf32>
    %51 = arith.truncf %50 : vector<8x8xf32> to vector<8x8xbf16>
    %52 = vector.extract_strided_slice %21 {offsets = [0, 8], sizes = [8, 8], strides = [1, 1]} : vector<8x64xf32> to vector<8x8xf32>
    %53 = arith.truncf %52 : vector<8x8xf32> to vector<8x8xbf16>
    %54 = vector.extract_strided_slice %21 {offsets = [0, 40], sizes = [8, 8], strides = [1, 1]} : vector<8x64xf32> to vector<8x8xf32>
    %55 = arith.truncf %54 : vector<8x8xf32> to vector<8x8xbf16>
    %cst_31 = arith.constant dense<0.000000e+00> : vector<8x8xf32>
    %56 = tpu.matmul %51, %53, %cst_31 {dimension_numbers = #tpu.dot_dimension_numbers<[1], [1], [0], [0], [0, 0, 1, 0], [], []>} : vector<8x8xbf16>, vector<8x8xbf16>, vector<8x8xf32> -> vector<8x8xf32>
    %cst_32 = arith.constant -9.99999986E+14 : f32
    %57 = vector.shape_cast %7 : vector<1x8xi1> to vector<1x8xi1>
    %58 = vector.broadcast %57 : vector<1x8xi1> to vector<8x8xi1>
    %59 = vector.broadcast %cst_32 : f32 to vector<8x8xf32>
    %60 = arith.select %58, %59, %56 : vector<8x8xi1>, vector<8x8xf32>
    %cst_33 = arith.constant dense<0xFF800000> : vector<8xf32>
    %61 = vector.multi_reduction <maximumf>, %60, %cst_33 [1] : vector<8x8xf32> to vector<8xf32>
    %62 = vector.shape_cast %61 : vector<8xf32> to vector<8x1xf32>
    %63 = vector.broadcast %62 : vector<8x1xf32> to vector<8x8xf32>
    %64 = arith.subf %60, %63 : vector<8x8xf32>
    %65 = math.exp %64 : vector<8x8xf32>
    %cst_34 = arith.constant dense<0.000000e+00> : vector<8xf32>
    %66 = vector.multi_reduction <add>, %65, %cst_34 [1] : vector<8x8xf32> to vector<8xf32>
    %67 = vector.shape_cast %66 : vector<8xf32> to vector<8x1xf32>
    %cst_35 = arith.constant 1.000000e+00 : f32
    %68 = vector.broadcast %cst_35 : f32 to vector<8x1xf32>
    %69 = arith.divf %68, %67 : vector<8x1xf32>
    %70 = vector.broadcast %69 : vector<8x1xf32> to vector<8x8xf32>
    %71 = arith.mulf %65, %70 : vector<8x8xf32>
    %c0_36 = arith.constant 0 : index
    %c1 = arith.constant 1 : index
    %c0_37 = arith.constant 0 : index
    %c0_38 = arith.constant 0 : index
    %72 = vector.load %arg14[%c0_36, %c1, %c0_37, %c0_38] : memref<1x4x8x8xf32, #tpu.memory_space<vmem>>, vector<1x1x8x8xf32>
    %73 = vector.shape_cast %72 : vector<1x1x8x8xf32> to vector<8x8xf32>
    %74 = vector.shape_cast %71 : vector<8x8xf32> to vector<1x1x8x8xf32>
    tpu.vector_store %arg14[%c0_36, %c1, %c0_37, %c0_38], %74 {strides = array<i32>} : memref<1x4x8x8xf32, #tpu.memory_space<vmem>>, vector<1x1x8x8xf32>,
    %75 = arith.truncf %71 : vector<8x8xf32> to vector<8x8xbf16>
    %cst_39 = arith.constant dense<0.000000e+00> : vector<8x8xf32>
    %76 = tpu.matmul %75, %55, %cst_39 {dimension_numbers = #tpu.dot_dimension_numbers<[1], [0], [0], [1], [0, 0, 1, 1], [], []>} : vector<8x8xbf16>, vector<8x8xbf16>, vector<8x8xf32> -> vector<8x8xf32>
    %c0_40 = arith.constant 0 : index
    %c8 = arith.constant 8 : index
    %77 = vector.load %arg15[%c0_40, %c8] : memref<8x32xf32, #tpu.memory_space<vmem>>, vector<8x8xf32>
    tpu.vector_store %arg15[%c0_40, %c8], %76 {strides = array<i32>} : memref<8x32xf32, #tpu.memory_space<vmem>>, vector<8x8xf32>,
    %78 = vector.extract_strided_slice %15 {offsets = [0, 16], sizes = [8, 8], strides = [1, 1]} : vector<8x32xf32> to vector<8x8xf32>
    %79 = arith.truncf %78 : vector<8x8xf32> to vector<8x8xbf16>
    %80 = vector.extract_strided_slice %21 {offsets = [0, 16], sizes = [8, 8], strides = [1, 1]} : vector<8x64xf32> to vector<8x8xf32>
    %81 = arith.truncf %80 : vector<8x8xf32> to vector<8x8xbf16>
    %82 = vector.extract_strided_slice %21 {offsets = [0, 48], sizes = [8, 8], strides = [1, 1]} : vector<8x64xf32> to vector<8x8xf32>
    %83 = arith.truncf %82 : vector<8x8xf32> to vector<8x8xbf16>
    %cst_41 = arith.constant dense<0.000000e+00> : vector<8x8xf32>
    %84 = tpu.matmul %79, %81, %cst_41 {dimension_numbers = #tpu.dot_dimension_numbers<[1], [1], [0], [0], [0, 0, 1, 0], [], []>} : vector<8x8xbf16>, vector<8x8xbf16>, vector<8x8xf32> -> vector<8x8xf32>
    %cst_42 = arith.constant -9.99999986E+14 : f32
    %85 = vector.shape_cast %7 : vector<1x8xi1> to vector<1x8xi1>
    %86 = vector.broadcast %85 : vector<1x8xi1> to vector<8x8xi1>
    %87 = vector.broadcast %cst_42 : f32 to vector<8x8xf32>
    %88 = arith.select %86, %87, %84 : vector<8x8xi1>, vector<8x8xf32>
    %cst_43 = arith.constant dense<0xFF800000> : vector<8xf32>
    %89 = vector.multi_reduction <maximumf>, %88, %cst_43 [1] : vector<8x8xf32> to vector<8xf32>
    %90 = vector.shape_cast %89 : vector<8xf32> to vector<8x1xf32>
    %91 = vector.broadcast %90 : vector<8x1xf32> to vector<8x8xf32>
    %92 = arith.subf %88, %91 : vector<8x8xf32>
    %93 = math.exp %92 : vector<8x8xf32>
    %cst_44 = arith.constant dense<0.000000e+00> : vector<8xf32>
    %94 = vector.multi_reduction <add>, %93, %cst_44 [1] : vector<8x8xf32> to vector<8xf32>
    %95 = vector.shape_cast %94 : vector<8xf32> to vector<8x1xf32>
    %cst_45 = arith.constant 1.000000e+00 : f32
    %96 = vector.broadcast %cst_45 : f32 to vector<8x1xf32>
    %97 = arith.divf %96, %95 : vector<8x1xf32>
    %98 = vector.broadcast %97 : vector<8x1xf32> to vector<8x8xf32>
    %99 = arith.mulf %93, %98 : vector<8x8xf32>
    %c0_46 = arith.constant 0 : index
    %c2 = arith.constant 2 : index
    %c0_47 = arith.constant 0 : index
    %c0_48 = arith.constant 0 : index
    %100 = vector.load %arg14[%c0_46, %c2, %c0_47, %c0_48] : memref<1x4x8x8xf32, #tpu.memory_space<vmem>>, vector<1x1x8x8xf32>
    %101 = vector.shape_cast %100 : vector<1x1x8x8xf32> to vector<8x8xf32>
    %102 = vector.shape_cast %99 : vector<8x8xf32> to vector<1x1x8x8xf32>
    tpu.vector_store %arg14[%c0_46, %c2, %c0_47, %c0_48], %102 {strides = array<i32>} : memref<1x4x8x8xf32, #tpu.memory_space<vmem>>, vector<1x1x8x8xf32>,
    %103 = arith.truncf %99 : vector<8x8xf32> to vector<8x8xbf16>
    %cst_49 = arith.constant dense<0.000000e+00> : vector<8x8xf32>
    %104 = tpu.matmul %103, %83, %cst_49 {dimension_numbers = #tpu.dot_dimension_numbers<[1], [0], [0], [1], [0, 0, 1, 1], [], []>} : vector<8x8xbf16>, vector<8x8xbf16>, vector<8x8xf32> -> vector<8x8xf32>
    %c0_50 = arith.constant 0 : index
    %c16 = arith.constant 16 : index
    %105 = vector.load %arg15[%c0_50, %c16] : memref<8x32xf32, #tpu.memory_space<vmem>>, vector<8x8xf32>
    tpu.vector_store %arg15[%c0_50, %c16], %104 {strides = array<i32>} : memref<8x32xf32, #tpu.memory_space<vmem>>, vector<8x8xf32>,
    %106 = vector.extract_strided_slice %15 {offsets = [0, 24], sizes = [8, 8], strides = [1, 1]} : vector<8x32xf32> to vector<8x8xf32>
    %107 = arith.truncf %106 : vector<8x8xf32> to vector<8x8xbf16>
    %108 = vector.extract_strided_slice %21 {offsets = [0, 24], sizes = [8, 8], strides = [1, 1]} : vector<8x64xf32> to vector<8x8xf32>
    %109 = arith.truncf %108 : vector<8x8xf32> to vector<8x8xbf16>
    %110 = vector.extract_strided_slice %21 {offsets = [0, 56], sizes = [8, 8], strides = [1, 1]} : vector<8x64xf32> to vector<8x8xf32>
    %111 = arith.truncf %110 : vector<8x8xf32> to vector<8x8xbf16>
    %cst_51 = arith.constant dense<0.000000e+00> : vector<8x8xf32>
    %112 = tpu.matmul %107, %109, %cst_51 {dimension_numbers = #tpu.dot_dimension_numbers<[1], [1], [0], [0], [0, 0, 1, 0], [], []>} : vector<8x8xbf16>, vector<8x8xbf16>, vector<8x8xf32> -> vector<8x8xf32>
    %cst_52 = arith.constant -9.99999986E+14 : f32
    %113 = vector.shape_cast %7 : vector<1x8xi1> to vector<1x8xi1>
    %114 = vector.broadcast %113 : vector<1x8xi1> to vector<8x8xi1>
    %115 = vector.broadcast %cst_52 : f32 to vector<8x8xf32>
    %116 = arith.select %114, %115, %112 : vector<8x8xi1>, vector<8x8xf32>
    %cst_53 = arith.constant dense<0xFF800000> : vector<8xf32>
    %117 = vector.multi_reduction <maximumf>, %116, %cst_53 [1] : vector<8x8xf32> to vector<8xf32>
    %118 = vector.shape_cast %117 : vector<8xf32> to vector<8x1xf32>
    %119 = vector.broadcast %118 : vector<8x1xf32> to vector<8x8xf32>
    %120 = arith.subf %116, %119 : vector<8x8xf32>
    %121 = math.exp %120 : vector<8x8xf32>
    %cst_54 = arith.constant dense<0.000000e+00> : vector<8xf32>
    %122 = vector.multi_reduction <add>, %121, %cst_54 [1] : vector<8x8xf32> to vector<8xf32>
    %123 = vector.shape_cast %122 : vector<8xf32> to vector<8x1xf32>
    %cst_55 = arith.constant 1.000000e+00 : f32
    %124 = vector.broadcast %cst_55 : f32 to vector<8x1xf32>
    %125 = arith.divf %124, %123 : vector<8x1xf32>
    %126 = vector.broadcast %125 : vector<8x1xf32> to vector<8x8xf32>
    %127 = arith.mulf %121, %126 : vector<8x8xf32>
    %c0_56 = arith.constant 0 : index
    %c3 = arith.constant 3 : index
    %c0_57 = arith.constant 0 : index
    %c0_58 = arith.constant 0 : index
    %128 = vector.load %arg14[%c0_56, %c3, %c0_57, %c0_58] : memref<1x4x8x8xf32, #tpu.memory_space<vmem>>, vector<1x1x8x8xf32>
    %129 = vector.shape_cast %128 : vector<1x1x8x8xf32> to vector<8x8xf32>
    %130 = vector.shape_cast %127 : vector<8x8xf32> to vector<1x1x8x8xf32>
    tpu.vector_store %arg14[%c0_56, %c3, %c0_57, %c0_58], %130 {strides = array<i32>} : memref<1x4x8x8xf32, #tpu.memory_space<vmem>>, vector<1x1x8x8xf32>,
    %131 = arith.truncf %127 : vector<8x8xf32> to vector<8x8xbf16>
    %cst_59 = arith.constant dense<0.000000e+00> : vector<8x8xf32>
    %132 = tpu.matmul %131, %111, %cst_59 {dimension_numbers = #tpu.dot_dimension_numbers<[1], [0], [0], [1], [0, 0, 1, 1], [], []>} : vector<8x8xbf16>, vector<8x8xbf16>, vector<8x8xf32> -> vector<8x8xf32>
    %c0_60 = arith.constant 0 : index
    %c24 = arith.constant 24 : index
    %133 = vector.load %arg15[%c0_60, %c24] : memref<8x32xf32, #tpu.memory_space<vmem>>, vector<8x8xf32>
    tpu.vector_store %arg15[%c0_60, %c24], %132 {strides = array<i32>} : memref<8x32xf32, #tpu.memory_space<vmem>>, vector<8x8xf32>,
    %c0_61 = arith.constant 0 : index
    %c0_62 = arith.constant 0 : index
    %134 = vector.load %arg15[%c0_61, %c0_62] : memref<8x32xf32, #tpu.memory_space<vmem>>, vector<8x32xf32>
    %135 = arith.truncf %134 : vector<8x32xf32> to vector<8x32xbf16>
    %c0_63 = arith.constant 0 : index
    %c0_64 = arith.constant 0 : index
    %136 = vector.load %arg9[%c0_63, %c0_64] : memref<32x32xbf16, #tpu.memory_space<vmem>>, vector<32x32xbf16>
    %cst_65 = arith.constant dense<0.000000e+00> : vector<8x32xf32>
    %137 = tpu.matmul %135, %136, %cst_65 {dimension_numbers = #tpu.dot_dimension_numbers<[1], [0], [0], [1], [0, 0, 1, 1], [], []>} : vector<8x32xbf16>, vector<32x32xbf16>, vector<8x32xf32> -> vector<8x32xf32>
    %c0_66 = arith.constant 0 : index
    %c0_67 = arith.constant 0 : index
    %138 = vector.load %arg10[%c0_66, %c0_67] : memref<1x32xf32, #tpu.memory_space<vmem>>, vector<1x32xf32>
    %139 = vector.broadcast %138 : vector<1x32xf32> to vector<8x32xf32>
    %140 = arith.addf %137, %139 : vector<8x32xf32>
    %141 = arith.addf %140, %1 : vector<8x32xf32>
    %cst_68 = arith.constant dense<0.000000e+00> : vector<8xf32>
    %142 = vector.multi_reduction <add>, %141, %cst_68 [1] : vector<8x32xf32> to vector<8xf32>
    %143 = vector.shape_cast %142 : vector<8xf32> to vector<8x1xf32>
    %cst_69 = arith.constant 3.200000e+01 : f32
    %144 = vector.broadcast %cst_69 : f32 to vector<8x1xf32>
    %145 = arith.divf %143, %144 : vector<8x1xf32>
    %146 = vector.broadcast %145 : vector<8x1xf32> to vector<8x32xf32>
    %147 = arith.subf %141, %146 : vector<8x32xf32>
    %148 = arith.mulf %147, %147 : vector<8x32xf32>
    %cst_70 = arith.constant dense<0.000000e+00> : vector<8xf32>
    %149 = vector.multi_reduction <add>, %148, %cst_70 [1] : vector<8x32xf32> to vector<8xf32>
    %150 = vector.shape_cast %149 : vector<8xf32> to vector<8x1xf32>
    %cst_71 = arith.constant 3.200000e+01 : f32
    %151 = vector.broadcast %cst_71 : f32 to vector<8x1xf32>
    %152 = arith.divf %150, %151 : vector<8x1xf32>
    %153 = vector.broadcast %145 : vector<8x1xf32> to vector<8x32xf32>
    %154 = arith.subf %141, %153 : vector<8x32xf32>
    %cst_72 = arith.constant 9.99999974E-6 : f32
    %155 = vector.broadcast %cst_72 : f32 to vector<8x1xf32>
    %156 = arith.addf %152, %155 : vector<8x1xf32>
    %157 = math.rsqrt %156 : vector<8x1xf32>
    %158 = vector.broadcast %157 : vector<8x1xf32> to vector<8x32xf32>
    %159 = arith.mulf %154, %158 : vector<8x32xf32>
    %c0_73 = arith.constant 0 : index
    %c0_74 = arith.constant 0 : index
    %160 = vector.load %arg11[%c0_73, %c0_74] : memref<1x32xf32, #tpu.memory_space<vmem>>, vector<1x32xf32>
    %161 = vector.broadcast %160 : vector<1x32xf32> to vector<8x32xf32>
    %162 = arith.mulf %159, %161 : vector<8x32xf32>
    %c0_75 = arith.constant 0 : index
    %c0_76 = arith.constant 0 : index
    %163 = vector.load %arg12[%c0_75, %c0_76] : memref<1x32xf32, #tpu.memory_space<vmem>>, vector<1x32xf32>
    %164 = vector.broadcast %163 : vector<1x32xf32> to vector<8x32xf32>
    %165 = arith.addf %162, %164 : vector<8x32xf32>
    %c0_77 = arith.constant 0 : index
    %c0_78 = arith.constant 0 : index
    %c0_79 = arith.constant 0 : index
    %166 = vector.load %arg13[%c0_77, %c0_78, %c0_79] : memref<1x8x32xf32, #tpu.memory_space<vmem>>, vector<1x8x32xf32>
    %167 = vector.shape_cast %166 : vector<1x8x32xf32> to vector<8x32xf32>
    %168 = vector.shape_cast %165 : vector<8x32xf32> to vector<1x8x32xf32>
    tpu.vector_store %arg13[%c0_77, %c0_78, %c0_79], %168 {strides = array<i32>} : memref<1x8x32xf32, #tpu.memory_space<vmem>>, vector<1x8x32xf32>,
    return
  }
  func.func @transform_0(%arg0: i32, %arg1: i32) -> (i32, i32, i32) {
    %c0_i32 = arith.constant 0 : i32
    %c0_i32_0 = arith.constant 0 : i32
    return %arg0, %arg1, %c0_i32 : i32, i32, i32
  }
  func.func @transform_1(%arg0: i32, %arg1: i32) -> (i32, i32, i32) {
    %c0_i32 = arith.constant 0 : i32
    %c0_i32_0 = arith.constant 0 : i32
    %c0_i32_1 = arith.constant 0 : i32
    return %arg0, %c0_i32, %c0_i32_0 : i32, i32, i32
  }
  func.func @transform_2(%arg0: i32, %arg1: i32) -> (i32, i32, i32) {
    %c0_i32 = arith.constant 0 : i32
    %c0_i32_0 = arith.constant 0 : i32
    %c0_i32_1 = arith.constant 0 : i32
    return %arg0, %c0_i32, %c0_i32_0 : i32, i32, i32
  }
  func.func @transform_3(%arg0: i32, %arg1: i32) -> (i32, i32) {
    %c0_i32 = arith.constant 0 : i32
    %c0_i32_0 = arith.constant 0 : i32
    %c0_i32_1 = arith.constant 0 : i32
    return %c0_i32, %c0_i32_0 : i32, i32
  }
  func.func @transform_4(%arg0: i32, %arg1: i32) -> (i32, i32) {
    %c0_i32 = arith.constant 0 : i32
    %c0_i32_0 = arith.constant 0 : i32
    %c0_i32_1 = arith.constant 0 : i32
    return %c0_i32, %c0_i32_0 : i32, i32
  }
  func.func @transform_5(%arg0: i32, %arg1: i32) -> (i32, i32) {
    %c0_i32 = arith.constant 0 : i32
    %c0_i32_0 = arith.constant 0 : i32
    %c0_i32_1 = arith.constant 0 : i32
    return %c0_i32, %c0_i32_0 : i32, i32
  }
  func.func @transform_6(%arg0: i32, %arg1: i32) -> (i32, i32) {
    %c0_i32 = arith.constant 0 : i32
    %c0_i32_0 = arith.constant 0 : i32
    %c0_i32_1 = arith.constant 0 : i32
    return %c0_i32, %c0_i32_0 : i32, i32
  }
  func.func @transform_7(%arg0: i32, %arg1: i32) -> (i32, i32) {
    %c0_i32 = arith.constant 0 : i32
    %c0_i32_0 = arith.constant 0 : i32
    %c0_i32_1 = arith.constant 0 : i32
    return %c0_i32, %c0_i32_0 : i32, i32
  }
  func.func @transform_8(%arg0: i32, %arg1: i32) -> (i32, i32) {
    %c0_i32 = arith.constant 0 : i32
    %c0_i32_0 = arith.constant 0 : i32
    %c0_i32_1 = arith.constant 0 : i32
    return %c0_i32, %c0_i32_0 : i32, i32
  }
  func.func @transform_9(%arg0: i32, %arg1: i32) -> (i32, i32) {
    %c0_i32 = arith.constant 0 : i32
    %c0_i32_0 = arith.constant 0 : i32
    %c0_i32_1 = arith.constant 0 : i32
    return %c0_i32, %c0_i32_0 : i32, i32
  }
  func.func @transform_10(%arg0: i32, %arg1: i32) -> (i32, i32) {
    %c0_i32 = arith.constant 0 : i32
    %c0_i32_0 = arith.constant 0 : i32
    %c0_i32_1 = arith.constant 0 : i32
    return %c0_i32, %c0_i32_0 : i32, i32
  }
  func.func @transform_11(%arg0: i32, %arg1: i32) -> (i32, i32, i32) {
    %c0_i32 = arith.constant 0 : i32
    %c0_i32_0 = arith.constant 0 : i32
    return %arg0, %arg1, %c0_i32 : i32, i32, i32
  }
  func.func @transform_12(%arg0: i32, %arg1: i32) -> (i32, i32, i32, i32) {
    %c0_i32 = arith.constant 0 : i32
    %c0_i32_0 = arith.constant 0 : i32
    %c0_i32_1 = arith.constant 0 : i32
    return %arg0, %c0_i32, %arg1, %c0_i32_0 : i32, i32, i32, i32
  }
}

module attributes {stable_mosaic.version = 11 : i64} {
  func.func @_mha_ln_kernel(%arg0: i32, %arg1: i32, %arg2: memref<1x8x32xf32, #tpu.memory_space<vmem>>, %arg3: memref<1x8x32xf32, #tpu.memory_space<vmem>>, %arg4: memref<1x8x8xf32, #tpu.memory_space<vmem>>, %arg5: memref<32x32xbf16, #tpu.memory_space<vmem>>, %arg6: memref<1x32xf32, #tpu.memory_space<vmem>>, %arg7: memref<32x64xbf16, #tpu.memory_space<vmem>>, %arg8: memref<1x64xf32, #tpu.memory_space<vmem>>, %arg9: memref<32x32xbf16, #tpu.memory_space<vmem>>, %arg10: memref<1x32xf32, #tpu.memory_space<vmem>>, %arg11: memref<1x32xf32, #tpu.memory_space<vmem>>, %arg12: memref<1x32xf32, #tpu.memory_space<vmem>>, %arg13: memref<1x8x32xf32, #tpu.memory_space<vmem>>, %arg14: memref<8x32xf32, #tpu.memory_space<vmem>>) attributes {dimension_semantics = [#tpu.dimension_semantics<parallel>, #tpu.dimension_semantics<parallel>], iteration_bounds = array<i64: 2, 1>, scalar_prefetch = 0 : i64, scratch_operands = 1 : i64, tpu.core_type = #tpu.core_type<tc>, window_params = [{transform_indices = @transform_0, window_bounds = array<i64: 1, 8, 32>}, {transform_indices = @transform_1, window_bounds = array<i64: 1, 8, 32>}, {transform_indices = @transform_2, window_bounds = array<i64: 1, 8, 8>}, {pipeline_mode = #tpu.pipeline_mode<synchronous>, transform_indices = @transform_3, window_bounds = array<i64: 32, 32>}, {pipeline_mode = #tpu.pipeline_mode<synchronous>, transform_indices = @transform_4, window_bounds = array<i64: 1, 32>}, {pipeline_mode = #tpu.pipeline_mode<synchronous>, transform_indices = @transform_5, window_bounds = array<i64: 32, 64>}, {pipeline_mode = #tpu.pipeline_mode<synchronous>, transform_indices = @transform_6, window_bounds = array<i64: 1, 64>}, {pipeline_mode = #tpu.pipeline_mode<synchronous>, transform_indices = @transform_7, window_bounds = array<i64: 32, 32>}, {pipeline_mode = #tpu.pipeline_mode<synchronous>, transform_indices = @transform_8, window_bounds = array<i64: 1, 32>}, {pipeline_mode = #tpu.pipeline_mode<synchronous>, transform_indices = @transform_9, window_bounds = array<i64: 1, 32>}, {pipeline_mode = #tpu.pipeline_mode<synchronous>, transform_indices = @transform_10, window_bounds = array<i64: 1, 32>}, {transform_indices = @transform_11, window_bounds = array<i64: 1, 8, 32>}]} {
    %c0 = arith.constant 0 : index
    %c0_0 = arith.constant 0 : index
    %c0_1 = arith.constant 0 : index
    %0 = vector.load %arg2[%c0, %c0_0, %c0_1] : memref<1x8x32xf32, #tpu.memory_space<vmem>>, vector<1x8x32xf32>
    %1 = vector.shape_cast %0 : vector<1x8x32xf32> to vector<8x32xf32>
    %c0_2 = arith.constant 0 : index
    %c0_3 = arith.constant 0 : index
    %c0_4 = arith.constant 0 : index
    %2 = vector.load %arg3[%c0_2, %c0_3, %c0_4] : memref<1x8x32xf32, #tpu.memory_space<vmem>>, vector<1x8x32xf32>
    %3 = vector.shape_cast %2 : vector<1x8x32xf32> to vector<8x32xf32>
    %c0_5 = arith.constant 0 : index
    %c0_6 = arith.constant 0 : index
    %c0_7 = arith.constant 0 : index
    %4 = vector.load %arg4[%c0_5, %c0_6, %c0_7] : memref<1x8x8xf32, #tpu.memory_space<vmem>>, vector<1x8x8xf32>
    %5 = vector.shape_cast %4 : vector<1x8x8xf32> to vector<8x8xf32>
    %cst = arith.constant 0.000000e+00 : f32
    %6 = vector.broadcast %cst : f32 to vector<8x8xf32>
    %7 = arith.cmpf oeq, %5, %6 : vector<8x8xf32>
    %8 = arith.truncf %1 : vector<8x32xf32> to vector<8x32xbf16>
    %c0_8 = arith.constant 0 : index
    %c0_9 = arith.constant 0 : index
    %9 = vector.load %arg5[%c0_8, %c0_9] : memref<32x32xbf16, #tpu.memory_space<vmem>>, vector<32x32xbf16>
    %cst_10 = arith.constant dense<0.000000e+00> : vector<8x32xf32>
    %10 = tpu.matmul %8, %9, %cst_10 {dimension_numbers = #tpu.dot_dimension_numbers<[1], [0], [0], [1], [0, 0, 1, 1], [], []>} : vector<8x32xbf16>, vector<32x32xbf16>, vector<8x32xf32> -> vector<8x32xf32>
    %c0_11 = arith.constant 0 : index
    %c0_12 = arith.constant 0 : index
    %11 = vector.load %arg6[%c0_11, %c0_12] : memref<1x32xf32, #tpu.memory_space<vmem>>, vector<1x32xf32>
    %12 = vector.broadcast %11 : vector<1x32xf32> to vector<8x32xf32>
    %13 = arith.addf %10, %12 : vector<8x32xf32>
    %cst_13 = arith.constant 0.353553385 : f32
    %14 = vector.broadcast %cst_13 : f32 to vector<8x32xf32>
    %15 = arith.mulf %13, %14 : vector<8x32xf32>
    %16 = arith.truncf %3 : vector<8x32xf32> to vector<8x32xbf16>
    %c0_14 = arith.constant 0 : index
    %c0_15 = arith.constant 0 : index
    %17 = vector.load %arg7[%c0_14, %c0_15] : memref<32x64xbf16, #tpu.memory_space<vmem>>, vector<32x64xbf16>
    %cst_16 = arith.constant dense<0.000000e+00> : vector<8x64xf32>
    %18 = tpu.matmul %16, %17, %cst_16 {dimension_numbers = #tpu.dot_dimension_numbers<[1], [0], [0], [1], [0, 0, 1, 1], [], []>} : vector<8x32xbf16>, vector<32x64xbf16>, vector<8x64xf32> -> vector<8x64xf32>
    %c0_17 = arith.constant 0 : index
    %c0_18 = arith.constant 0 : index
    %19 = vector.load %arg8[%c0_17, %c0_18] : memref<1x64xf32, #tpu.memory_space<vmem>>, vector<1x64xf32>
    %20 = vector.broadcast %19 : vector<1x64xf32> to vector<8x64xf32>
    %21 = arith.addf %18, %20 : vector<8x64xf32>
    %22 = vector.extract_strided_slice %15 {offsets = [0, 0], sizes = [8, 8], strides = [1, 1]} : vector<8x32xf32> to vector<8x8xf32>
    %23 = arith.truncf %22 : vector<8x8xf32> to vector<8x8xbf16>
    %24 = vector.extract_strided_slice %21 {offsets = [0, 0], sizes = [8, 8], strides = [1, 1]} : vector<8x64xf32> to vector<8x8xf32>
    %25 = arith.truncf %24 : vector<8x8xf32> to vector<8x8xbf16>
    %26 = vector.extract_strided_slice %21 {offsets = [0, 32], sizes = [8, 8], strides = [1, 1]} : vector<8x64xf32> to vector<8x8xf32>
    %27 = arith.truncf %26 : vector<8x8xf32> to vector<8x8xbf16>
    %cst_19 = arith.constant dense<0.000000e+00> : vector<8x8xf32>
    %28 = tpu.matmul %23, %25, %cst_19 {dimension_numbers = #tpu.dot_dimension_numbers<[1], [1], [0], [0], [0, 0, 1, 0], [], []>} : vector<8x8xbf16>, vector<8x8xbf16>, vector<8x8xf32> -> vector<8x8xf32>
    %cst_20 = arith.constant -9.99999986E+14 : f32
    %29 = vector.broadcast %cst_20 : f32 to vector<8x8xf32>
    %30 = arith.select %7, %29, %28 : vector<8x8xi1>, vector<8x8xf32>
    %cst_21 = arith.constant dense<0xFF800000> : vector<8xf32>
    %31 = vector.multi_reduction <maximumf>, %30, %cst_21 [1] : vector<8x8xf32> to vector<8xf32>
    %32 = vector.shape_cast %31 : vector<8xf32> to vector<8x1xf32>
    %33 = vector.broadcast %32 : vector<8x1xf32> to vector<8x8xf32>
    %34 = arith.subf %30, %33 : vector<8x8xf32>
    %35 = math.exp %34 : vector<8x8xf32>
    %cst_22 = arith.constant dense<0.000000e+00> : vector<8xf32>
    %36 = vector.multi_reduction <add>, %35, %cst_22 [1] : vector<8x8xf32> to vector<8xf32>
    %37 = vector.shape_cast %36 : vector<8xf32> to vector<8x1xf32>
    %38 = tpu.reciprocal %37 {approx = true} : vector<8x1xf32> -> vector<8x1xf32>
    %39 = vector.broadcast %38 : vector<8x1xf32> to vector<8x8xf32>
    %40 = arith.mulf %35, %39 : vector<8x8xf32>
    %41 = arith.truncf %40 : vector<8x8xf32> to vector<8x8xbf16>
    %cst_23 = arith.constant dense<0.000000e+00> : vector<8x8xf32>
    %42 = tpu.matmul %41, %27, %cst_23 {dimension_numbers = #tpu.dot_dimension_numbers<[1], [0], [0], [1], [0, 0, 1, 1], [], []>} : vector<8x8xbf16>, vector<8x8xbf16>, vector<8x8xf32> -> vector<8x8xf32>
    %c0_24 = arith.constant 0 : index
    %c0_25 = arith.constant 0 : index
    %43 = vector.load %arg14[%c0_24, %c0_25] : memref<8x32xf32, #tpu.memory_space<vmem>>, vector<8x8xf32>
    tpu.vector_store %arg14[%c0_24, %c0_25], %42 {strides = array<i32>} : memref<8x32xf32, #tpu.memory_space<vmem>>, vector<8x8xf32>,
    %44 = vector.extract_strided_slice %15 {offsets = [0, 8], sizes = [8, 8], strides = [1, 1]} : vector<8x32xf32> to vector<8x8xf32>
    %45 = arith.truncf %44 : vector<8x8xf32> to vector<8x8xbf16>
    %46 = vector.extract_strided_slice %21 {offsets = [0, 8], sizes = [8, 8], strides = [1, 1]} : vector<8x64xf32> to vector<8x8xf32>
    %47 = arith.truncf %46 : vector<8x8xf32> to vector<8x8xbf16>
    %48 = vector.extract_strided_slice %21 {offsets = [0, 40], sizes = [8, 8], strides = [1, 1]} : vector<8x64xf32> to vector<8x8xf32>
    %49 = arith.truncf %48 : vector<8x8xf32> to vector<8x8xbf16>
    %cst_26 = arith.constant dense<0.000000e+00> : vector<8x8xf32>
    %50 = tpu.matmul %45, %47, %cst_26 {dimension_numbers = #tpu.dot_dimension_numbers<[1], [1], [0], [0], [0, 0, 1, 0], [], []>} : vector<8x8xbf16>, vector<8x8xbf16>, vector<8x8xf32> -> vector<8x8xf32>
    %cst_27 = arith.constant -9.99999986E+14 : f32
    %51 = vector.broadcast %cst_27 : f32 to vector<8x8xf32>
    %52 = arith.select %7, %51, %50 : vector<8x8xi1>, vector<8x8xf32>
    %cst_28 = arith.constant dense<0xFF800000> : vector<8xf32>
    %53 = vector.multi_reduction <maximumf>, %52, %cst_28 [1] : vector<8x8xf32> to vector<8xf32>
    %54 = vector.shape_cast %53 : vector<8xf32> to vector<8x1xf32>
    %55 = vector.broadcast %54 : vector<8x1xf32> to vector<8x8xf32>
    %56 = arith.subf %52, %55 : vector<8x8xf32>
    %57 = math.exp %56 : vector<8x8xf32>
    %cst_29 = arith.constant dense<0.000000e+00> : vector<8xf32>
    %58 = vector.multi_reduction <add>, %57, %cst_29 [1] : vector<8x8xf32> to vector<8xf32>
    %59 = vector.shape_cast %58 : vector<8xf32> to vector<8x1xf32>
    %60 = tpu.reciprocal %59 {approx = true} : vector<8x1xf32> -> vector<8x1xf32>
    %61 = vector.broadcast %60 : vector<8x1xf32> to vector<8x8xf32>
    %62 = arith.mulf %57, %61 : vector<8x8xf32>
    %63 = arith.truncf %62 : vector<8x8xf32> to vector<8x8xbf16>
    %cst_30 = arith.constant dense<0.000000e+00> : vector<8x8xf32>
    %64 = tpu.matmul %63, %49, %cst_30 {dimension_numbers = #tpu.dot_dimension_numbers<[1], [0], [0], [1], [0, 0, 1, 1], [], []>} : vector<8x8xbf16>, vector<8x8xbf16>, vector<8x8xf32> -> vector<8x8xf32>
    %c0_31 = arith.constant 0 : index
    %c8 = arith.constant 8 : index
    %65 = vector.load %arg14[%c0_31, %c8] : memref<8x32xf32, #tpu.memory_space<vmem>>, vector<8x8xf32>
    tpu.vector_store %arg14[%c0_31, %c8], %64 {strides = array<i32>} : memref<8x32xf32, #tpu.memory_space<vmem>>, vector<8x8xf32>,
    %66 = vector.extract_strided_slice %15 {offsets = [0, 16], sizes = [8, 8], strides = [1, 1]} : vector<8x32xf32> to vector<8x8xf32>
    %67 = arith.truncf %66 : vector<8x8xf32> to vector<8x8xbf16>
    %68 = vector.extract_strided_slice %21 {offsets = [0, 16], sizes = [8, 8], strides = [1, 1]} : vector<8x64xf32> to vector<8x8xf32>
    %69 = arith.truncf %68 : vector<8x8xf32> to vector<8x8xbf16>
    %70 = vector.extract_strided_slice %21 {offsets = [0, 48], sizes = [8, 8], strides = [1, 1]} : vector<8x64xf32> to vector<8x8xf32>
    %71 = arith.truncf %70 : vector<8x8xf32> to vector<8x8xbf16>
    %cst_32 = arith.constant dense<0.000000e+00> : vector<8x8xf32>
    %72 = tpu.matmul %67, %69, %cst_32 {dimension_numbers = #tpu.dot_dimension_numbers<[1], [1], [0], [0], [0, 0, 1, 0], [], []>} : vector<8x8xbf16>, vector<8x8xbf16>, vector<8x8xf32> -> vector<8x8xf32>
    %cst_33 = arith.constant -9.99999986E+14 : f32
    %73 = vector.broadcast %cst_33 : f32 to vector<8x8xf32>
    %74 = arith.select %7, %73, %72 : vector<8x8xi1>, vector<8x8xf32>
    %cst_34 = arith.constant dense<0xFF800000> : vector<8xf32>
    %75 = vector.multi_reduction <maximumf>, %74, %cst_34 [1] : vector<8x8xf32> to vector<8xf32>
    %76 = vector.shape_cast %75 : vector<8xf32> to vector<8x1xf32>
    %77 = vector.broadcast %76 : vector<8x1xf32> to vector<8x8xf32>
    %78 = arith.subf %74, %77 : vector<8x8xf32>
    %79 = math.exp %78 : vector<8x8xf32>
    %cst_35 = arith.constant dense<0.000000e+00> : vector<8xf32>
    %80 = vector.multi_reduction <add>, %79, %cst_35 [1] : vector<8x8xf32> to vector<8xf32>
    %81 = vector.shape_cast %80 : vector<8xf32> to vector<8x1xf32>
    %82 = tpu.reciprocal %81 {approx = true} : vector<8x1xf32> -> vector<8x1xf32>
    %83 = vector.broadcast %82 : vector<8x1xf32> to vector<8x8xf32>
    %84 = arith.mulf %79, %83 : vector<8x8xf32>
    %85 = arith.truncf %84 : vector<8x8xf32> to vector<8x8xbf16>
    %cst_36 = arith.constant dense<0.000000e+00> : vector<8x8xf32>
    %86 = tpu.matmul %85, %71, %cst_36 {dimension_numbers = #tpu.dot_dimension_numbers<[1], [0], [0], [1], [0, 0, 1, 1], [], []>} : vector<8x8xbf16>, vector<8x8xbf16>, vector<8x8xf32> -> vector<8x8xf32>
    %c0_37 = arith.constant 0 : index
    %c16 = arith.constant 16 : index
    %87 = vector.load %arg14[%c0_37, %c16] : memref<8x32xf32, #tpu.memory_space<vmem>>, vector<8x8xf32>
    tpu.vector_store %arg14[%c0_37, %c16], %86 {strides = array<i32>} : memref<8x32xf32, #tpu.memory_space<vmem>>, vector<8x8xf32>,
    %88 = vector.extract_strided_slice %15 {offsets = [0, 24], sizes = [8, 8], strides = [1, 1]} : vector<8x32xf32> to vector<8x8xf32>
    %89 = arith.truncf %88 : vector<8x8xf32> to vector<8x8xbf16>
    %90 = vector.extract_strided_slice %21 {offsets = [0, 24], sizes = [8, 8], strides = [1, 1]} : vector<8x64xf32> to vector<8x8xf32>
    %91 = arith.truncf %90 : vector<8x8xf32> to vector<8x8xbf16>
    %92 = vector.extract_strided_slice %21 {offsets = [0, 56], sizes = [8, 8], strides = [1, 1]} : vector<8x64xf32> to vector<8x8xf32>
    %93 = arith.truncf %92 : vector<8x8xf32> to vector<8x8xbf16>
    %cst_38 = arith.constant dense<0.000000e+00> : vector<8x8xf32>
    %94 = tpu.matmul %89, %91, %cst_38 {dimension_numbers = #tpu.dot_dimension_numbers<[1], [1], [0], [0], [0, 0, 1, 0], [], []>} : vector<8x8xbf16>, vector<8x8xbf16>, vector<8x8xf32> -> vector<8x8xf32>
    %cst_39 = arith.constant -9.99999986E+14 : f32
    %95 = vector.broadcast %cst_39 : f32 to vector<8x8xf32>
    %96 = arith.select %7, %95, %94 : vector<8x8xi1>, vector<8x8xf32>
    %cst_40 = arith.constant dense<0xFF800000> : vector<8xf32>
    %97 = vector.multi_reduction <maximumf>, %96, %cst_40 [1] : vector<8x8xf32> to vector<8xf32>
    %98 = vector.shape_cast %97 : vector<8xf32> to vector<8x1xf32>
    %99 = vector.broadcast %98 : vector<8x1xf32> to vector<8x8xf32>
    %100 = arith.subf %96, %99 : vector<8x8xf32>
    %101 = math.exp %100 : vector<8x8xf32>
    %cst_41 = arith.constant dense<0.000000e+00> : vector<8xf32>
    %102 = vector.multi_reduction <add>, %101, %cst_41 [1] : vector<8x8xf32> to vector<8xf32>
    %103 = vector.shape_cast %102 : vector<8xf32> to vector<8x1xf32>
    %104 = tpu.reciprocal %103 {approx = true} : vector<8x1xf32> -> vector<8x1xf32>
    %105 = vector.broadcast %104 : vector<8x1xf32> to vector<8x8xf32>
    %106 = arith.mulf %101, %105 : vector<8x8xf32>
    %107 = arith.truncf %106 : vector<8x8xf32> to vector<8x8xbf16>
    %cst_42 = arith.constant dense<0.000000e+00> : vector<8x8xf32>
    %108 = tpu.matmul %107, %93, %cst_42 {dimension_numbers = #tpu.dot_dimension_numbers<[1], [0], [0], [1], [0, 0, 1, 1], [], []>} : vector<8x8xbf16>, vector<8x8xbf16>, vector<8x8xf32> -> vector<8x8xf32>
    %c0_43 = arith.constant 0 : index
    %c24 = arith.constant 24 : index
    %109 = vector.load %arg14[%c0_43, %c24] : memref<8x32xf32, #tpu.memory_space<vmem>>, vector<8x8xf32>
    tpu.vector_store %arg14[%c0_43, %c24], %108 {strides = array<i32>} : memref<8x32xf32, #tpu.memory_space<vmem>>, vector<8x8xf32>,
    %c0_44 = arith.constant 0 : index
    %c0_45 = arith.constant 0 : index
    %110 = vector.load %arg14[%c0_44, %c0_45] : memref<8x32xf32, #tpu.memory_space<vmem>>, vector<8x32xf32>
    %111 = arith.truncf %110 : vector<8x32xf32> to vector<8x32xbf16>
    %c0_46 = arith.constant 0 : index
    %c0_47 = arith.constant 0 : index
    %112 = vector.load %arg9[%c0_46, %c0_47] : memref<32x32xbf16, #tpu.memory_space<vmem>>, vector<32x32xbf16>
    %cst_48 = arith.constant dense<0.000000e+00> : vector<8x32xf32>
    %113 = tpu.matmul %111, %112, %cst_48 {dimension_numbers = #tpu.dot_dimension_numbers<[1], [0], [0], [1], [0, 0, 1, 1], [], []>} : vector<8x32xbf16>, vector<32x32xbf16>, vector<8x32xf32> -> vector<8x32xf32>
    %c0_49 = arith.constant 0 : index
    %c0_50 = arith.constant 0 : index
    %114 = vector.load %arg10[%c0_49, %c0_50] : memref<1x32xf32, #tpu.memory_space<vmem>>, vector<1x32xf32>
    %115 = vector.broadcast %114 : vector<1x32xf32> to vector<8x32xf32>
    %116 = arith.addf %113, %115 : vector<8x32xf32>
    %117 = arith.addf %116, %1 : vector<8x32xf32>
    %cst_51 = arith.constant dense<0.000000e+00> : vector<8xf32>
    %118 = vector.multi_reduction <add>, %117, %cst_51 [1] : vector<8x32xf32> to vector<8xf32>
    %119 = vector.shape_cast %118 : vector<8xf32> to vector<8x1xf32>
    %cst_52 = arith.constant 3.200000e+01 : f32
    %120 = vector.broadcast %cst_52 : f32 to vector<8x1xf32>
    %121 = arith.divf %119, %120 : vector<8x1xf32>
    %122 = vector.broadcast %121 : vector<8x1xf32> to vector<8x32xf32>
    %123 = arith.subf %117, %122 : vector<8x32xf32>
    %124 = arith.mulf %123, %123 : vector<8x32xf32>
    %cst_53 = arith.constant dense<0.000000e+00> : vector<8xf32>
    %125 = vector.multi_reduction <add>, %124, %cst_53 [1] : vector<8x32xf32> to vector<8xf32>
    %126 = vector.shape_cast %125 : vector<8xf32> to vector<8x1xf32>
    %cst_54 = arith.constant 3.200000e+01 : f32
    %127 = vector.broadcast %cst_54 : f32 to vector<8x1xf32>
    %128 = arith.divf %126, %127 : vector<8x1xf32>
    %129 = vector.broadcast %121 : vector<8x1xf32> to vector<8x32xf32>
    %130 = arith.subf %117, %129 : vector<8x32xf32>
    %cst_55 = arith.constant 9.99999974E-6 : f32
    %131 = vector.broadcast %cst_55 : f32 to vector<8x1xf32>
    %132 = arith.addf %128, %131 : vector<8x1xf32>
    %133 = math.rsqrt %132 : vector<8x1xf32>
    %134 = vector.broadcast %133 : vector<8x1xf32> to vector<8x32xf32>
    %135 = arith.mulf %130, %134 : vector<8x32xf32>
    %c0_56 = arith.constant 0 : index
    %c0_57 = arith.constant 0 : index
    %136 = vector.load %arg11[%c0_56, %c0_57] : memref<1x32xf32, #tpu.memory_space<vmem>>, vector<1x32xf32>
    %137 = vector.broadcast %136 : vector<1x32xf32> to vector<8x32xf32>
    %138 = arith.mulf %135, %137 : vector<8x32xf32>
    %c0_58 = arith.constant 0 : index
    %c0_59 = arith.constant 0 : index
    %139 = vector.load %arg12[%c0_58, %c0_59] : memref<1x32xf32, #tpu.memory_space<vmem>>, vector<1x32xf32>
    %140 = vector.broadcast %139 : vector<1x32xf32> to vector<8x32xf32>
    %141 = arith.addf %138, %140 : vector<8x32xf32>
    %c0_60 = arith.constant 0 : index
    %c0_61 = arith.constant 0 : index
    %c0_62 = arith.constant 0 : index
    %142 = vector.load %arg13[%c0_60, %c0_61, %c0_62] : memref<1x8x32xf32, #tpu.memory_space<vmem>>, vector<1x8x32xf32>
    %143 = vector.shape_cast %142 : vector<1x8x32xf32> to vector<8x32xf32>
    %144 = vector.shape_cast %141 : vector<8x32xf32> to vector<1x8x32xf32>
    tpu.vector_store %arg13[%c0_60, %c0_61, %c0_62], %144 {strides = array<i32>} : memref<1x8x32xf32, #tpu.memory_space<vmem>>, vector<1x8x32xf32>,
    return
  }
  func.func @transform_0(%arg0: i32, %arg1: i32) -> (i32, i32, i32) {
    %c0_i32 = arith.constant 0 : i32
    %c0_i32_0 = arith.constant 0 : i32
    return %arg0, %arg1, %c0_i32 : i32, i32, i32
  }
  func.func @transform_1(%arg0: i32, %arg1: i32) -> (i32, i32, i32) {
    %c0_i32 = arith.constant 0 : i32
    %c0_i32_0 = arith.constant 0 : i32
    %c0_i32_1 = arith.constant 0 : i32
    return %arg0, %c0_i32, %c0_i32_0 : i32, i32, i32
  }
  func.func @transform_2(%arg0: i32, %arg1: i32) -> (i32, i32, i32) {
    %c0_i32 = arith.constant 0 : i32
    %c0_i32_0 = arith.constant 0 : i32
    return %arg0, %arg1, %c0_i32 : i32, i32, i32
  }
  func.func @transform_3(%arg0: i32, %arg1: i32) -> (i32, i32) {
    %c0_i32 = arith.constant 0 : i32
    %c0_i32_0 = arith.constant 0 : i32
    %c0_i32_1 = arith.constant 0 : i32
    return %c0_i32, %c0_i32_0 : i32, i32
  }
  func.func @transform_4(%arg0: i32, %arg1: i32) -> (i32, i32) {
    %c0_i32 = arith.constant 0 : i32
    %c0_i32_0 = arith.constant 0 : i32
    %c0_i32_1 = arith.constant 0 : i32
    return %c0_i32, %c0_i32_0 : i32, i32
  }
  func.func @transform_5(%arg0: i32, %arg1: i32) -> (i32, i32) {
    %c0_i32 = arith.constant 0 : i32
    %c0_i32_0 = arith.constant 0 : i32
    %c0_i32_1 = arith.constant 0 : i32
    return %c0_i32, %c0_i32_0 : i32, i32
  }
  func.func @transform_6(%arg0: i32, %arg1: i32) -> (i32, i32) {
    %c0_i32 = arith.constant 0 : i32
    %c0_i32_0 = arith.constant 0 : i32
    %c0_i32_1 = arith.constant 0 : i32
    return %c0_i32, %c0_i32_0 : i32, i32
  }
  func.func @transform_7(%arg0: i32, %arg1: i32) -> (i32, i32) {
    %c0_i32 = arith.constant 0 : i32
    %c0_i32_0 = arith.constant 0 : i32
    %c0_i32_1 = arith.constant 0 : i32
    return %c0_i32, %c0_i32_0 : i32, i32
  }
  func.func @transform_8(%arg0: i32, %arg1: i32) -> (i32, i32) {
    %c0_i32 = arith.constant 0 : i32
    %c0_i32_0 = arith.constant 0 : i32
    %c0_i32_1 = arith.constant 0 : i32
    return %c0_i32, %c0_i32_0 : i32, i32
  }
  func.func @transform_9(%arg0: i32, %arg1: i32) -> (i32, i32) {
    %c0_i32 = arith.constant 0 : i32
    %c0_i32_0 = arith.constant 0 : i32
    %c0_i32_1 = arith.constant 0 : i32
    return %c0_i32, %c0_i32_0 : i32, i32
  }
  func.func @transform_10(%arg0: i32, %arg1: i32) -> (i32, i32) {
    %c0_i32 = arith.constant 0 : i32
    %c0_i32_0 = arith.constant 0 : i32
    %c0_i32_1 = arith.constant 0 : i32
    return %c0_i32, %c0_i32_0 : i32, i32
  }
  func.func @transform_11(%arg0: i32, %arg1: i32) -> (i32, i32, i32) {
    %c0_i32 = arith.constant 0 : i32
    %c0_i32_0 = arith.constant 0 : i32
    return %arg0, %arg1, %c0_i32 : i32, i32, i32
  }
}

</mosaic_0001>

<llo_original>
// kernel: decoder_block.5
$region0: #{decoder_block.5}
  #allocation0 [shape = 'u32[]', space=smem, size = 0x4, offset = 0x4, fixed_abs, tag = 'smem constant byte address 0x4 - core index']
  #allocation1 [shape = 'u32[144,128]{1,0:T(1,128)}', space=vmem, size = 0x12000, scoped, tag = 'internal scratch']
  #allocation2 [shape = 'f32[16,32]{1,0:T(8,128)}', space=vmem, size = 0x2000, scoped, tag = 'scratch operand']
  %s0 = inlined_call_operand.vmem [shape: f32[16,32], index: 0, kind: input, shape index: {}]
  %s1 = inlined_call_operand.vmem [shape: bf16[32,64], index: 1, kind: input, shape index: {}]
  %s2 = inlined_call_operand.vmem [shape: f32[1,64], index: 2, kind: input, shape index: {}]
  %s3 = inlined_call_operand.vmem [shape: bf16[64,32], index: 3, kind: input, shape index: {}]
  %s4 = inlined_call_operand.vmem [shape: f32[1,32], index: 4, kind: input, shape index: {}]
  %s5 = inlined_call_operand.vmem [shape: f32[1,32], index: 5, kind: input, shape index: {}]
  %s6 = inlined_call_operand.vmem [shape: f32[1,32], index: 6, kind: input, shape index: {}]
  %s7 = inlined_call_operand.hbm [shape: f32[16,32], index: 7, kind: output, shape index: {}]
  %s8 = sld [smem:[#allocation0]]
  $region46: #{decoder_block.5} parent=0
    _
  %s10 = ssub.s32 1, %s8
  %s11 = scalar_select 0, %s10, %s8
  $region1: #{decoder_block.5} parent=0
    #allocation3 [shape = 'u8[8192]{0}', space=vmem, size = 0x2000, scoped, tag = 'output window, operand 0, single buffered']
    #allocation4 [shape = 's32[1]{0}', space=sflag, size = 0x4, scoped, tag = 'scoped memory for decoder_block.5']
    %12 = vsyncpa [#allocation4], 0
    // Predicated region
    $region2: #{decoder_block.5} parent=1 // pred_check
      _
    $region3: #{decoder_block.5} parent=1 // pred_check_branch
      %14 = sbr.rel (0) target = $region5
    $region4: #{decoder_block.5} parent=1 // pred_region
      _
    $region5: #{decoder_block.5} parent=1 // pred_fallthru
      _
    // Predicated region
    $region6: #{decoder_block.5} parent=1 // pred_check
      _
    $region7: #{decoder_block.5} parent=1 // pred_check_branch
      %16 = sbr.rel (0) target = $region9
    $region8: #{decoder_block.5} parent=1 // pred_region
      _
    $region9: #{decoder_block.5} parent=1 // pred_fallthru
      _
    // Predicated region
    $region10: #{decoder_block.5} parent=1 // pred_check
      _
    $region11: #{decoder_block.5} parent=1 // pred_check_branch
      %18 = sbr.rel (0) target = $region13
    $region12: #{decoder_block.5} parent=1 // pred_region
      _
    $region13: #{decoder_block.5} parent=1 // pred_fallthru
      _
    // Predicated region
    $region14: #{decoder_block.5} parent=1 // pred_check
      _
    $region15: #{decoder_block.5} parent=1 // pred_check_branch
      %20 = sbr.rel (0) target = $region17
    $region16: #{decoder_block.5} parent=1 // pred_region
      _
    $region17: #{decoder_block.5} parent=1 // pred_fallthru
      _
    // Predicated region
    $region18: #{decoder_block.5} parent=1 // pred_check
      _
    $region19: #{decoder_block.5} parent=1 // pred_check_branch
      %22 = sbr.rel (0) target = $region21
    $region20: #{decoder_block.5} parent=1 // pred_region
      _
    $region21: #{decoder_block.5} parent=1 // pred_fallthru
      _
    // Predicated region
    $region22: #{decoder_block.5} parent=1 // pred_check
      _
    $region23: #{decoder_block.5} parent=1 // pred_check_branch
      %24 = sbr.rel (0) target = $region25
    $region24: #{decoder_block.5} parent=1 // pred_region
      _
    $region25: #{decoder_block.5} parent=1 // pred_fallthru
      _
    // Predicated region
    $region26: #{decoder_block.5} parent=1 // pred_check
      _
    $region27: #{decoder_block.5} parent=1 // pred_check_branch
      %26 = sbr.rel (0) target = $region29
    $region28: #{decoder_block.5} parent=1 // pred_region
      _
    $region29: #{decoder_block.5} parent=1 // pred_fallthru
      _
    %p28 = scmp.eq.s32.totalorder 0, 0
    // Predicated region
    $region30: #{decoder_block.5} parent=1 // pred_check
      %p29 = pneg %p28
    $region31: #{decoder_block.5} parent=1 // pred_check_branch
      %31 = sbr.rel (%p29) target = $region33
    $region32: #{decoder_block.5} parent=1 // pred_region
      %vm32 = vcmask 261120
      %33 = vst.msk [vmem:[#allocation2] sm:$0xff] %vm32, 0.0
      %34 = vst.msk [vmem:[#allocation2 + $0x8] sm:$0xff] %vm32, 0.0
    $region33: #{decoder_block.5} parent=1 // pred_fallthru
      _
    %v35 = vld [vmem:[%s0] sm:$0xff]
    %v36 = vld [vmem:[%s0 + $0x8] sm:$0xff]
    %v37 = vpack.c.bf16 %v36, %v35
    %v38 = vld [vmem:[%s1] sm:$0xf]
    %v39 = vld [vmem:[%s1 + $0x4] sm:$0xf]
    %v40 = vld [vmem:[%s1 + $0x8] sm:$0xf]
    %v41 = vld [vmem:[%s1 + $0xc] sm:$0xf]
    %v42 = vld [vmem:[%s2] sm:$0x1]
    %v44 = vlaneseq
    %v45 = vshrl.u32 %v44, 7
    %v46 = vsub.s32 0, %v45
    %v47 = vrot.slane %v42, %v46
    %v53 = vunpack.c.l.b16 %v38
    %v54 = vunpack.c.l.b16 %v39
    %v55 = vunpack.c.l.b16 %v40
    %v56 = vunpack.c.l.b16 %v41
    %v57 = vpack.c.b16 %v54, %v53
    %v58 = vpack.c.b16 %v56, %v55
    %vm61 = vcmask 261120
    %v63 = vsel %vm61, %v37, 0
    %65 = vmatprep.subr.bf16.mxu0 0
    %66 = vmatpush1.bf16.msra.mxu0 0
    %67 = vmatprep.subr.bf16.mxu0 0
    %68 = vmatpush1.bf16.msra.mxu0 0
    %69 = vmatprep.subr.bf16.mxu0 0
    %70 = vmatpush1.bf16.msra.mxu0 0
    %71 = vmatprep.subr.bf16.mxu0 0
    %72 = vmatpush1.bf16.msra.mxu0 0
    %73 = vmatprep.subr.bf16.mxu0 0
    %74 = vmatpush1.bf16.msra.mxu0 0
    %75 = vmatprep.subr.bf16.mxu0 0
    %76 = vmatpush1.bf16.msra.mxu0 0
    %77 = vmatprep.subr.bf16.mxu0 0
    %78 = vmatpush1.bf16.msra.mxu0 %v58
    %79 = vmatprep.subr.bf16.mxu0 0
    %80 = vmatpush1.bf16.msra.mxu0 %v57
    %81 = vmatprep.subr.bf16.mxu0 0
    %82 = vmatpush2.bf16.msra.mxu0 0
    %83 = vmatprep.subr.bf16.mxu0 0
    %84 = vmatpush2.bf16.msra.mxu0 0
    %85 = vmatprep.subr.bf16.mxu0 0
    %86 = vmatpush2.bf16.msra.mxu0 0
    %87 = vmatprep.subr.bf16.mxu0 0
    %88 = vmatpush2.bf16.msra.mxu0 0
    %89 = vmatprep.subr.bf16.mxu0 0
    %90 = vmatpush2.bf16.msra.mxu0 0
    %91 = vmatprep.subr.bf16.mxu0 0
    %92 = vmatpush2.bf16.msra.mxu0 0
    %93 = vmatprep.subr.bf16.mxu0 0
    %94 = vmatpush2.bf16.msra.mxu0 0
    %95 = vmatprep.subr.bf16.mxu0 0
    %96 = vmatpush2.bf16.msra.mxu0 0
    %97 = vmatprep.mubr.bf16.mxu0 0
    %98 = vmatmul.mubr.bf16.gmra.mxu0 %v63
    %v99 = vpop.f32.mrf.mxu0
    %v100 = vadd.f32 %v47, %v99
    %v101 = vpop.f32.mrf.mxu0
    %v102 = vpop.f32.mrf.mxu0
    %v103 = vadd.f32 %v47, %v102
    %v104 = vpop.f32.mrf.mxu0
    %105 = vdwg.mxu0
    %v106 = vmax.f32 %v100, 0.0
    %v107 = vmax.f32 %v103, 0.0
    %v108 = vld [vmem:[#allocation2] sm:$0xff]
    %v109 = vld [vmem:[#allocation2 + $0x8] sm:$0xff]
    %v110 = vpack.c.bf16 %v107, %v106
    %v111 = vld [vmem:[%s3] sm:$0xf]
    %v112 = vld [vmem:[%s3 + $0x4] sm:$0xf]
    %v113 = vld [vmem:[%s3 + $0x8] sm:$0xf]
    %v114 = vld [vmem:[%s3 + $0xc] sm:$0xf]
    %v115 = vld [vmem:[%s3 + $0x10] sm:$0xf]
    %v116 = vld [vmem:[%s3 + $0x14] sm:$0xf]
    %v117 = vld [vmem:[%s3 + $0x18] sm:$0xf]
    %v118 = vld [vmem:[%s3 + $0x1c] sm:$0xf]
    %v127 = vunpack.c.l.b16 %v111
    %v128 = vunpack.c.l.b16 %v112
    %v129 = vunpack.c.l.b16 %v113
    %v130 = vunpack.c.l.b16 %v114
    %v131 = vunpack.c.l.b16 %v115
    %v132 = vunpack.c.l.b16 %v116
    %v133 = vunpack.c.l.b16 %v117
    %v134 = vunpack.c.l.b16 %v118
    %v135 = vpack.c.b16 %v128, %v127
    %v136 = vpack.c.b16 %v130, %v129
    %v137 = vpack.c.b16 %v132, %v131
    %v138 = vpack.c.b16 %v134, %v133
    %vm143 = vcmask 523264
    %v145 = vsel %vm143, %v110, 0
    %147 = vmatprep.subr.bf16.mxu0 0
    %148 = vmatpush1.bf16.msra.mxu0 0
    %149 = vmatprep.subr.bf16.mxu0 0
    %150 = vmatpush1.bf16.msra.mxu0 0
    %151 = vmatprep.subr.bf16.mxu0 0
    %152 = vmatpush1.bf16.msra.mxu0 0
    %153 = vmatprep.subr.bf16.mxu0 0
    %154 = vmatpush1.bf16.msra.mxu0 0
    %155 = vmatprep.subr.bf16.mxu0 0
    %156 = vmatpush1.bf16.msra.mxu0 %v138
    %157 = vmatprep.subr.bf16.mxu0 0
    %158 = vmatpush1.bf16.msra.mxu0 %v137
    %159 = vmatprep.subr.bf16.mxu0 0
    %160 = vmatpush1.bf16.msra.mxu0 %v136
    %161 = vmatprep.subr.bf16.mxu0 0
    %162 = vmatpush1.bf16.msra.mxu0 %v135
    %163 = vmatprep.subr.bf16.mxu0 0
    %164 = vmatpush2.bf16.msra.mxu0 0
    %165 = vmatprep.subr.bf16.mxu0 0
    %166 = vmatpush2.bf16.msra.mxu0 0
    %167 = vmatprep.subr.bf16.mxu0 0
    %168 = vmatpush2.bf16.msra.mxu0 0
    %169 = vmatprep.subr.bf16.mxu0 0
    %170 = vmatpush2.bf16.msra.mxu0 0
    %171 = vmatprep.subr.bf16.mxu0 0
    %172 = vmatpush2.bf16.msra.mxu0 0
    %173 = vmatprep.subr.bf16.mxu0 0
    %174 = vmatpush2.bf16.msra.mxu0 0
    %175 = vmatprep.subr.bf16.mxu0 0
    %176 = vmatpush2.bf16.msra.mxu0 0
    %177 = vmatprep.subr.bf16.mxu0 0
    %178 = vmatpush2.bf16.msra.mxu0 0
    %179 = vmatprep.mubr.bf16.mxu0 0
    %180 = vmatmul.mubr.bf16.gmra.mxu0 %v145
    %v181 = vpop.f32.mrf.mxu0
    %v182 = vadd.f32 0.0, %v181
    %v183 = vpop.f32.mrf.mxu0
    %v184 = vpop.f32.mrf.mxu0
    %v185 = vadd.f32 0.0, %v184
    %v186 = vpop.f32.mrf.mxu0
    %187 = vdwg.mxu0
    %v188 = vadd.f32 %v108, %v182
    %v189 = vadd.f32 %v109, %v185
    %190 = vst.msk [vmem:[#allocation2] sm:$0xff] %vm61, %v188
    %191 = vst.msk [vmem:[#allocation2 + $0x8] sm:$0xff] %vm61, %v189
    // Predicated region
    $region34: #{decoder_block.5} parent=1 // pred_check
      %p192 = pneg %p28
    $region35: #{decoder_block.5} parent=1 // pred_check_branch
      %194 = sbr.rel (%p192) target = $region37
    $region36: #{decoder_block.5} parent=1 // pred_region
      %v195 = vld [vmem:[#allocation2] sm:$0xff]
      %v196 = vld [vmem:[#allocation2 + $0x8] sm:$0xff]
      %v197 = vld [vmem:[%s4] sm:$0x1]
      %v199 = vlaneseq
      %v200 = vshrl.u32 %v199, 7
      %v201 = vsub.s32 0, %v200
      %v202 = vrot.slane %v197, %v201
      %v204 = vadd.f32 %v195, %v202
      %v205 = vadd.f32 %v196, %v202
      %v206 = vadd.f32 %v204, %v35
      %v207 = vadd.f32 %v205, %v36
      %v208 = vsel %vm61, %v206, 0.0
      %209 = vadd.xlane.f32.xlu0 %v208
      %v210 = vpop.xlane.xlu0 %209
      %v211 = vsel %vm61, %v207, 0.0
      %212 = vadd.xlane.f32.xlu0 %v211
      %v213 = vpop.xlane.xlu0 %212
      %v214 = vrcp.pop 32.0
      %v215 = vmul.f32 %v210, %v214
      %v216 = vmul.f32 %v213, %v214
      %v217 = vsub.f32 %v206, %v215
      %v218 = vsub.f32 %v207, %v216
      %v219 = vmul.f32 %v217, %v217
      %v220 = vmul.f32 %v218, %v218
      %v221 = vsel %vm61, %v219, 0.0
      %222 = vadd.xlane.f32.xlu0 %v221
      %v223 = vpop.xlane.xlu0 %222
      %v224 = vsel %vm61, %v220, 0.0
      %225 = vadd.xlane.f32.xlu0 %v224
      %v226 = vpop.xlane.xlu0 %225
      %v227 = vmul.f32 %v223, %v214
      %v228 = vmul.f32 %v226, %v214
      %v229 = vadd.f32 %v227, 1e-05
      %v230 = vadd.f32 %v228, 1e-05
      %v231 = vrsqrt.pop %v229
      %v232 = vrsqrt.pop %v230
      %v233 = vmul.f32 %v217, %v231
      %v234 = vmul.f32 %v218, %v232
      %v235 = vld [vmem:[%s5] sm:$0x1]
      %v237 = vlaneseq
      %v238 = vshrl.u32 %v237, 7
      %v239 = vsub.s32 0, %v238
      %v240 = vrot.slane %v235, %v239
      %v242 = vmul.f32 %v233, %v240
      %v243 = vmul.f32 %v234, %v240
      %v244 = vld [vmem:[%s6] sm:$0x1]
      %v246 = vlaneseq
      %v247 = vshrl.u32 %v246, 7
      %v248 = vsub.s32 0, %v247
      %v249 = vrot.slane %v244, %v248
      %v251 = vadd.f32 %v242, %v249
      %v252 = vadd.f32 %v243, %v249
      %253 = vst.msk [vmem:[#allocation3] sm:$0xff] %vm61, %v251
      %254 = vst.msk [vmem:[#allocation3 + $0x8] sm:$0xff] %vm61, %v252
    $region37: #{decoder_block.5} parent=1 // pred_fallthru
      _
    // Predicated region
    $region38: #{decoder_block.5} parent=1 // pred_check
      _
    $region39: #{decoder_block.5} parent=1 // pred_check_branch
      %256 = sbr.rel (0) target = $region41
    $region40: #{decoder_block.5} parent=1 // pred_region
      %s258 = ssub.s32 256, 256
      %259 = vsyncadd [#allocation4], %s258
      %s260 = sshll.u32 [#allocation3], 4
      %s261 = int_to_ptr.vmem [resolvable:$true] %s260
      %266 = dma.vmem_to_hbm [thread:$0]  %s261, 256, %s7, [#allocation4], 128, 128, 8
    $region41: #{decoder_block.5} parent=1 // pred_fallthru
      _
    // Predicated region
    $region42: #{decoder_block.5} parent=1 // pred_check
      _
    $region43: #{decoder_block.5} parent=1 // pred_check_branch
      %268 = sbr.rel (0) target = $region45
    $region44: #{decoder_block.5} parent=1 // pred_region
      %269 = dma.done [#allocation4], 256
    $region45: #{decoder_block.5} parent=1 // pred_fallthru
      _
    %270 = vsyncpa [#allocation4], 1

// kernel: decoder_block.4
$region0: #{decoder_block.4}
  #allocation0 [shape = 'u32[]', space=smem, size = 0x4, offset = 0x4, fixed_abs, tag = 'smem constant byte address 0x4 - core index']
  #allocation1 [shape = 'u32[144,128]{1,0:T(1,128)}', space=vmem, size = 0x12000, scoped, tag = 'internal scratch']
  #allocation2 [shape = 'f32[8,32]{1,0:T(8,128)}', space=vmem, size = 0x1000, scoped, tag = 'scratch operand']
  %s0 = inlined_call_operand.vmem [shape: f32[2,8,32], index: 0, kind: input, shape index: {}]
  %s1 = inlined_call_operand.vmem [shape: f32[2,8,32], index: 1, kind: input, shape index: {}]
  %s2 = inlined_call_operand.vmem [shape: f32[2,1,8], index: 2, kind: input, shape index: {}]
  %s3 = inlined_call_operand.vmem [shape: bf16[32,32], index: 3, kind: input, shape index: {}]
  %s4 = inlined_call_operand.vmem [shape: f32[1,32], index: 4, kind: input, shape index: {}]
  %s5 = inlined_call_operand.vmem [shape: bf16[32,64], index: 5, kind: input, shape index: {}]
  %s6 = inlined_call_operand.vmem [shape: f32[1,64], index: 6, kind: input, shape index: {}]
  %s7 = inlined_call_operand.vmem [shape: bf16[32,32], index: 7, kind: input, shape index: {}]
  %s8 = inlined_call_operand.vmem [shape: f32[1,32], index: 8, kind: input, shape index: {}]
  %s9 = inlined_call_operand.vmem [shape: f32[1,32], index: 9, kind: input, shape index: {}]
  %s10 = inlined_call_operand.vmem [shape: f32[1,32], index: 10, kind: input, shape index: {}]
  %s11 = inlined_call_operand.vmem [shape: f32[2,8,32], index: 11, kind: output, shape index: {0}]
  %s12 = inlined_call_operand.hbm [shape: f32[2,4,8,8], index: 12, kind: output, shape index: {1}]
  %13 = xla_tuple %s11, %s12
  %s14 = sld [smem:[#allocation0]]
  $region85: #{decoder_block.4} parent=0
    _
  %s16 = ssub.s32 1, %s14
  %s17 = scalar_select 0, %s16, %s14
  $region1: #{decoder_block.4} parent=0
    #allocation3 [shape = 'u8[32768]{0}', space=vmem, size = 0x8000, scoped, tag = 'output window, operand 1']
    #allocation4 [shape = 's32[2]{0}', space=sflag, size = 0x8, scoped, tag = 'scoped memory for decoder_block.4']
    %18 = vsyncpa [#allocation4], 0
    %s19 = scalar_lea.sflag [#allocation4], 1
    %20 = vsyncpa %s19, 0
    loop: start=0, step=1, limit=4
    $region2: #{decoder_block.4} parent=1 // loop_pre_header
      _
    $region3: #{decoder_block.4} parent=1 // loop_header
      %s22 = sphi 0, %s26
      %p23 = scmp.ge.s32.totalorder %s22, 4
      %s29 = sphi 0, %s41
      %s30 = sphi 0, %s37
      %s31 = sphi 0, %s29
      %s32 = sphi 0, %s30
      %s33 = sphi 0, %s31
      %s34 = sphi 0, %s32
      %s46 = sphi 0, %s48
      %s49 = sphi 0, %s46
      %s50 = sphi 0, %s49
      %s66 = sphi 0, %s50
      %s72 = sphi 0, %s74
      %s75 = sphi 0, %s72
      %s76 = sphi 0, %s75
      %s92 = sphi 0, %s76
      %s98 = sphi 0, %s100
      %s101 = sphi 0, %s98
      %s102 = sphi 0, %s101
      %s118 = sphi 0, %s102
      %s122 = sphi 0, %s122
      %s124 = sphi 0, %s122
      %s125 = sphi 0, %s124
      %s139 = sphi 0, %s125
      %s143 = sphi 0, %s143
      %s145 = sphi 0, %s143
      %s146 = sphi 0, %s145
      %s160 = sphi 0, %s146
      %s164 = sphi 0, %s164
      %s166 = sphi 0, %s164
      %s167 = sphi 0, %s166
      %s181 = sphi 0, %s167
      %s185 = sphi 0, %s185
      %s187 = sphi 0, %s185
      %s188 = sphi 0, %s187
      %s202 = sphi 0, %s188
      %s206 = sphi 0, %s206
      %s208 = sphi 0, %s206
      %s209 = sphi 0, %s208
      %s223 = sphi 0, %s209
      %s227 = sphi 0, %s227
      %s229 = sphi 0, %s227
      %s230 = sphi 0, %s229
      %s244 = sphi 0, %s230
      %s248 = sphi 0, %s248
      %s250 = sphi 0, %s248
      %s251 = sphi 0, %s250
      %s265 = sphi 0, %s251
      %s269 = sphi 0, %s269
      %s271 = sphi 0, %s269
      %s272 = sphi 0, %s271
      %s286 = sphi 0, %s272
      %s294 = sphi 0, %s296
      %s297 = sphi 0, %s294
      %s298 = sphi 0, %s297
      %s314 = sphi 0, %s298
      %s322 = sphi 0, %s324
      %s325 = sphi 0, %s322
      %s326 = sphi 0, %s325
      %s342 = sphi 0, %s326
    $region4: #{decoder_block.4} parent=1 // loop_header_branch
      %25 = sbr.rel (%p23) target = $region8
    $region5: #{decoder_block.4} parent=1 // loop_body
      %s27 = ssub.s32 %s22, 1
      %s28 = ssub.s32 %s22, 2
      %s35 = sadd.s32 1, %s30
      %p36 = scmp.ge.s32.totalorder %s35, 1
      %s37 = scalar_select %p36, 0, %s35
      %s38 = sadd.s32 1, %s29
      %s39 = scalar_select %p36, %s38, %s29
      %p40 = scmp.ge.s32.totalorder %s39, 2
      %s41 = scalar_select %p40, 0, %s39
      %s42 = ssub.s32 %s29, %s41
      %s43 = ssub.s32 %s30, %s37
      %s44 = sor.u32 %s42, %s43
      %p45 = scmp.eq.s32.totalorder %s44, 0
      %s47 = sadd.s32 %s46, 1
      %s48 = scalar_select %p45, %s46, %s47
      %p51 = pneg %p45
      %p52 = scmp.eq.s32.totalorder %s22, 1
      %p53 = por %p51, %p52
      %p54 = scmp.ne.s32.totalorder %s46, %s49
      %p55 = scmp.eq.s32.totalorder %s22, 0
      %p56 = por %p54, %p55
      %p57 = scmp.ne.s32.totalorder %s46, %s49
      %p58 = scmp.eq.s32.totalorder %s27, 1
      %p59 = por %p57, %p58
      %p60 = scmp.ne.s32.totalorder %s49, %s50
      %p61 = scmp.eq.s32.totalorder %s27, 0
      %p62 = por %p60, %p61
      %p63 = scmp.ne.s32.totalorder %s49, %s50
      %p64 = scmp.eq.s32.totalorder %s28, 1
      %p65 = por %p63, %p64
      %p67 = scmp.ne.s32.totalorder %s50, %s66
      %p68 = scmp.eq.s32.totalorder %s28, 0
      %p69 = por %p67, %p68
      %s70 = ssub.s32 %s29, %s41
      %p71 = scmp.eq.s32.totalorder %s70, 0
      %s73 = sadd.s32 %s72, 1
      %s74 = scalar_select %p71, %s72, %s73
      %p77 = pneg %p71
      %p78 = scmp.eq.s32.totalorder %s22, 1
      %p79 = por %p77, %p78
      %p80 = scmp.ne.s32.totalorder %s72, %s75
      %p81 = scmp.eq.s32.totalorder %s22, 0
      %p82 = por %p80, %p81
      %p83 = scmp.ne.s32.totalorder %s72, %s75
      %p84 = scmp.eq.s32.totalorder %s27, 1
      %p85 = por %p83, %p84
      %p86 = scmp.ne.s32.totalorder %s75, %s76
      %p87 = scmp.eq.s32.totalorder %s27, 0
      %p88 = por %p86, %p87
      %p89 = scmp.ne.s32.totalorder %s75, %s76
      %p90 = scmp.eq.s32.totalorder %s28, 1
      %p91 = por %p89, %p90
      %p93 = scmp.ne.s32.totalorder %s76, %s92
      %p94 = scmp.eq.s32.totalorder %s28, 0
      %p95 = por %p93, %p94
      %s96 = ssub.s32 %s29, %s41
      %p97 = scmp.eq.s32.totalorder %s96, 0
      %s99 = sadd.s32 %s98, 1
      %s100 = scalar_select %p97, %s98, %s99
      %p103 = pneg %p97
      %p104 = scmp.eq.s32.totalorder %s22, 1
      %p105 = por %p103, %p104
      %p106 = scmp.ne.s32.totalorder %s98, %s101
      %p107 = scmp.eq.s32.totalorder %s22, 0
      %p108 = por %p106, %p107
      %p109 = scmp.ne.s32.totalorder %s98, %s101
      %p110 = scmp.eq.s32.totalorder %s27, 1
      %p111 = por %p109, %p110
      %p112 = scmp.ne.s32.totalorder %s101, %s102
      %p113 = scmp.eq.s32.totalorder %s27, 0
      %p114 = por %p112, %p113
      %p115 = scmp.ne.s32.totalorder %s101, %s102
      %p116 = scmp.eq.s32.totalorder %s28, 1
      %p117 = por %p115, %p116
      %p119 = scmp.ne.s32.totalorder %s102, %s118
      %p120 = scmp.eq.s32.totalorder %s28, 0
      %p121 = por %p119, %p120
      %s123 = sadd.s32 %s122, 1
      %p126 = scmp.eq.s32.totalorder %s22, 1
      %p127 = scmp.ne.s32.totalorder %s122, %s124
      %p128 = scmp.eq.s32.totalorder %s22, 0
      %p129 = por %p127, %p128
      %p130 = scmp.ne.s32.totalorder %s122, %s124
      %p131 = scmp.eq.s32.totalorder %s27, 1
      %p132 = por %p130, %p131
      %p133 = scmp.ne.s32.totalorder %s124, %s125
      %p134 = scmp.eq.s32.totalorder %s27, 0
      %p135 = por %p133, %p134
      %p136 = scmp.ne.s32.totalorder %s124, %s125
      %p137 = scmp.eq.s32.totalorder %s28, 1
      %p138 = por %p136, %p137
      %p140 = scmp.ne.s32.totalorder %s125, %s139
      %p141 = scmp.eq.s32.totalorder %s28, 0
      %p142 = por %p140, %p141
      %s144 = sadd.s32 %s143, 1
      %p147 = scmp.eq.s32.totalorder %s22, 1
      %p148 = scmp.ne.s32.totalorder %s143, %s145
      %p149 = scmp.eq.s32.totalorder %s22, 0
      %p150 = por %p148, %p149
      %p151 = scmp.ne.s32.totalorder %s143, %s145
      %p152 = scmp.eq.s32.totalorder %s27, 1
      %p153 = por %p151, %p152
      %p154 = scmp.ne.s32.totalorder %s145, %s146
      %p155 = scmp.eq.s32.totalorder %s27, 0
      %p156 = por %p154, %p155
      %p157 = scmp.ne.s32.totalorder %s145, %s146
      %p158 = scmp.eq.s32.totalorder %s28, 1
      %p159 = por %p157, %p158
      %p161 = scmp.ne.s32.totalorder %s146, %s160
      %p162 = scmp.eq.s32.totalorder %s28, 0
      %p163 = por %p161, %p162
      %s165 = sadd.s32 %s164, 1
      %p168 = scmp.eq.s32.totalorder %s22, 1
      %p169 = scmp.ne.s32.totalorder %s164, %s166
      %p170 = scmp.eq.s32.totalorder %s22, 0
      %p171 = por %p169, %p170
      %p172 = scmp.ne.s32.totalorder %s164, %s166
      %p173 = scmp.eq.s32.totalorder %s27, 1
      %p174 = por %p172, %p173
      %p175 = scmp.ne.s32.totalorder %s166, %s167
      %p176 = scmp.eq.s32.totalorder %s27, 0
      %p177 = por %p175, %p176
      %p178 = scmp.ne.s32.totalorder %s166, %s167
      %p179 = scmp.eq.s32.totalorder %s28, 1
      %p180 = por %p178, %p179
      %p182 = scmp.ne.s32.totalorder %s167, %s181
      %p183 = scmp.eq.s32.totalorder %s28, 0
      %p184 = por %p182, %p183
      %s186 = sadd.s32 %s185, 1
      %p189 = scmp.eq.s32.totalorder %s22, 1
      %p190 = scmp.ne.s32.totalorder %s185, %s187
      %p191 = scmp.eq.s32.totalorder %s22, 0
      %p192 = por %p190, %p191
      %p193 = scmp.ne.s32.totalorder %s185, %s187
      %p194 = scmp.eq.s32.totalorder %s27, 1
      %p195 = por %p193, %p194
      %p196 = scmp.ne.s32.totalorder %s187, %s188
      %p197 = scmp.eq.s32.totalorder %s27, 0
      %p198 = por %p196, %p197
      %p199 = scmp.ne.s32.totalorder %s187, %s188
      %p200 = scmp.eq.s32.totalorder %s28, 1
      %p201 = por %p199, %p200
      %p203 = scmp.ne.s32.totalorder %s188, %s202
      %p204 = scmp.eq.s32.totalorder %s28, 0
      %p205 = por %p203, %p204
      %s207 = sadd.s32 %s206, 1
      %p210 = scmp.eq.s32.totalorder %s22, 1
      %p211 = scmp.ne.s32.totalorder %s206, %s208
      %p212 = scmp.eq.s32.totalorder %s22, 0
      %p213 = por %p211, %p212
      %p214 = scmp.ne.s32.totalorder %s206, %s208
      %p215 = scmp.eq.s32.totalorder %s27, 1
      %p216 = por %p214, %p215
      %p217 = scmp.ne.s32.totalorder %s208, %s209
      %p218 = scmp.eq.s32.totalorder %s27, 0
      %p219 = por %p217, %p218
      %p220 = scmp.ne.s32.totalorder %s208, %s209
      %p221 = scmp.eq.s32.totalorder %s28, 1
      %p222 = por %p220, %p221
      %p224 = scmp.ne.s32.totalorder %s209, %s223
      %p225 = scmp.eq.s32.totalorder %s28, 0
      %p226 = por %p224, %p225
      %s228 = sadd.s32 %s227, 1
      %p231 = scmp.eq.s32.totalorder %s22, 1
      %p232 = scmp.ne.s32.totalorder %s227, %s229
      %p233 = scmp.eq.s32.totalorder %s22, 0
      %p234 = por %p232, %p233
      %p235 = scmp.ne.s32.totalorder %s227, %s229
      %p236 = scmp.eq.s32.totalorder %s27, 1
      %p237 = por %p235, %p236
      %p238 = scmp.ne.s32.totalorder %s229, %s230
      %p239 = scmp.eq.s32.totalorder %s27, 0
      %p240 = por %p238, %p239
      %p241 = scmp.ne.s32.totalorder %s229, %s230
      %p242 = scmp.eq.s32.totalorder %s28, 1
      %p243 = por %p241, %p242
      %p245 = scmp.ne.s32.totalorder %s230, %s244
      %p246 = scmp.eq.s32.totalorder %s28, 0
      %p247 = por %p245, %p246
      %s249 = sadd.s32 %s248, 1
      %p252 = scmp.eq.s32.totalorder %s22, 1
      %p253 = scmp.ne.s32.totalorder %s248, %s250
      %p254 = scmp.eq.s32.totalorder %s22, 0
      %p255 = por %p253, %p254
      %p256 = scmp.ne.s32.totalorder %s248, %s250
      %p257 = scmp.eq.s32.totalorder %s27, 1
      %p258 = por %p256, %p257
      %p259 = scmp.ne.s32.totalorder %s250, %s251
      %p260 = scmp.eq.s32.totalorder %s27, 0
      %p261 = por %p259, %p260
      %p262 = scmp.ne.s32.totalorder %s250, %s251
      %p263 = scmp.eq.s32.totalorder %s28, 1
      %p264 = por %p262, %p263
      %p266 = scmp.ne.s32.totalorder %s251, %s265
      %p267 = scmp.eq.s32.totalorder %s28, 0
      %p268 = por %p266, %p267
      %s270 = sadd.s32 %s269, 1
      %p273 = scmp.eq.s32.totalorder %s22, 1
      %p274 = scmp.ne.s32.totalorder %s269, %s271
      %p275 = scmp.eq.s32.totalorder %s22, 0
      %p276 = por %p274, %p275
      %p277 = scmp.ne.s32.totalorder %s269, %s271
      %p278 = scmp.eq.s32.totalorder %s27, 1
      %p279 = por %p277, %p278
      %p280 = scmp.ne.s32.totalorder %s271, %s272
      %p281 = scmp.eq.s32.totalorder %s27, 0
      %p282 = por %p280, %p281
      %p283 = scmp.ne.s32.totalorder %s271, %s272
      %p284 = scmp.eq.s32.totalorder %s28, 1
      %p285 = por %p283, %p284
      %p287 = scmp.ne.s32.totalorder %s272, %s286
      %p288 = scmp.eq.s32.totalorder %s28, 0
      %p289 = por %p287, %p288
      %s290 = ssub.s32 %s29, %s41
      %s291 = ssub.s32 %s30, %s37
      %s292 = sor.u32 %s290, %s291
      %p293 = scmp.eq.s32.totalorder %s292, 0
      %s295 = sadd.s32 %s294, 1
      %s296 = scalar_select %p293, %s294, %s295
      %p299 = pneg %p293
      %p300 = scmp.eq.s32.totalorder %s22, 1
      %p301 = por %p299, %p300
      %p302 = scmp.ne.s32.totalorder %s294, %s297
      %p303 = scmp.eq.s32.totalorder %s22, 0
      %p304 = por %p302, %p303
      %p305 = scmp.ne.s32.totalorder %s294, %s297
      %p306 = scmp.eq.s32.totalorder %s27, 1
      %p307 = por %p305, %p306
      %p308 = scmp.ne.s32.totalorder %s297, %s298
      %p309 = scmp.eq.s32.totalorder %s27, 0
      %p310 = por %p308, %p309
      %p311 = scmp.ne.s32.totalorder %s297, %s298
      %p312 = scmp.eq.s32.totalorder %s28, 1
      %p313 = por %p311, %p312
      %p315 = scmp.ne.s32.totalorder %s298, %s314
      %p316 = scmp.eq.s32.totalorder %s28, 0
      %p317 = por %p315, %p316
      %s318 = ssub.s32 %s29, %s41
      %s319 = ssub.s32 %s30, %s37
      %s320 = sor.u32 %s318, %s319
      %p321 = scmp.eq.s32.totalorder %s320, 0
      %s323 = sadd.s32 %s322, 1
      %s324 = scalar_select %p321, %s322, %s323
      %p327 = pneg %p321
      %p328 = scmp.eq.s32.totalorder %s22, 1
      %p329 = por %p327, %p328
      %p330 = scmp.ne.s32.totalorder %s322, %s325
      %p331 = scmp.eq.s32.totalorder %s22, 0
      %p332 = por %p330, %p331
      %p333 = scmp.ne.s32.totalorder %s322, %s325
      %p334 = scmp.eq.s32.totalorder %s27, 1
      %p335 = por %p333, %p334
      %p336 = scmp.ne.s32.totalorder %s325, %s326
      %p337 = scmp.eq.s32.totalorder %s27, 0
      %p338 = por %p336, %p337
      %p339 = scmp.ne.s32.totalorder %s325, %s326
      %p340 = scmp.eq.s32.totalorder %s28, 1
      %p341 = por %p339, %p340
      %p343 = scmp.ne.s32.totalorder %s326, %s342
      %p344 = scmp.eq.s32.totalorder %s28, 0
      %p345 = por %p343, %p344
      %p346 = scmp.le.s32.totalorder 1, %s22
      %p347 = scmp.lt.s32.totalorder %s22, 3
      %p348 = pnand %p346, %p347
      %p349 = pneg %p348
      // Predicated region
      $region9: #{decoder_block.4} parent=5 // pred_check
        _
      $region10: #{decoder_block.4} parent=5 // pred_check_branch
        %351 = sbr.rel (%p348) target = $region12
      $region11: #{decoder_block.4} parent=5 // pred_region
        %s352 = ssub.s32 %s22, 1
        // Predicated region
        $region13: #{decoder_block.4} parent=11 // pred_check
          %p353 = pneg %p135
        $region14: #{decoder_block.4} parent=11 // pred_check_branch
          %355 = sbr.rel (%p353) target = $region16
        $region15: #{decoder_block.4} parent=11 // pred_region
          _
        $region16: #{decoder_block.4} parent=11 // pred_fallthru
          _
        // Predicated region
        $region17: #{decoder_block.4} parent=11 // pred_check
          %p356 = pneg %p156
        $region18: #{decoder_block.4} parent=11 // pred_check_branch
          %358 = sbr.rel (%p356) target = $region20
        $region19: #{decoder_block.4} parent=11 // pred_region
          _
        $region20: #{decoder_block.4} parent=11 // pred_fallthru
          _
        // Predicated region
        $region21: #{decoder_block.4} parent=11 // pred_check
          %p359 = pneg %p177
        $region22: #{decoder_block.4} parent=11 // pred_check_branch
          %361 = sbr.rel (%p359) target = $region24
        $region23: #{decoder_block.4} parent=11 // pred_region
          _
        $region24: #{decoder_block.4} parent=11 // pred_fallthru
          _
        // Predicated region
        $region25: #{decoder_block.4} parent=11 // pred_check
          %p362 = pneg %p198
        $region26: #{decoder_block.4} parent=11 // pred_check_branch
          %364 = sbr.rel (%p362) target = $region28
        $region27: #{decoder_block.4} parent=11 // pred_region
          _
        $region28: #{decoder_block.4} parent=11 // pred_fallthru
          _
        // Predicated region
        $region29: #{decoder_block.4} parent=11 // pred_check
          %p365 = pneg %p219
        $region30: #{decoder_block.4} parent=11 // pred_check_branch
          %367 = sbr.rel (%p365) target = $region32
        $region31: #{decoder_block.4} parent=11 // pred_region
          _
        $region32: #{decoder_block.4} parent=11 // pred_fallthru
          _
        // Predicated region
        $region33: #{decoder_block.4} parent=11 // pred_check
          %p368 = pneg %p240
        $region34: #{decoder_block.4} parent=11 // pred_check_branch
          %370 = sbr.rel (%p368) target = $region36
        $region35: #{decoder_block.4} parent=11 // pred_region
          _
        $region36: #{decoder_block.4} parent=11 // pred_fallthru
          _
        // Predicated region
        $region37: #{decoder_block.4} parent=11 // pred_check
          %p371 = pneg %p261
        $region38: #{decoder_block.4} parent=11 // pred_check_branch
          %373 = sbr.rel (%p371) target = $region40
        $region39: #{decoder_block.4} parent=11 // pred_region
          _
        $region40: #{decoder_block.4} parent=11 // pred_fallthru
          _
        // Predicated region
        $region41: #{decoder_block.4} parent=11 // pred_check
          %p374 = pneg %p282
        $region42: #{decoder_block.4} parent=11 // pred_check_branch
          %376 = sbr.rel (%p374) target = $region44
        $region43: #{decoder_block.4} parent=11 // pred_region
          _
        $region44: #{decoder_block.4} parent=11 // pred_fallthru
          _
      $region12: #{decoder_block.4} parent=5 // pred_fallthru
        _
      %p377 = scmp.lt.s32.totalorder %s22, 2
      // Predicated region
      $region45: #{decoder_block.4} parent=5 // pred_check
        %p378 = pneg %p377
      $region46: #{decoder_block.4} parent=5 // pred_check_branch
        %380 = sbr.rel (%p378) target = $region48
      $region47: #{decoder_block.4} parent=5 // pred_region
        // Predicated region
        $region49: #{decoder_block.4} parent=47 // pred_check
          %p381 = pneg %p56
        $region50: #{decoder_block.4} parent=47 // pred_check_branch
          %383 = sbr.rel (%p381) target = $region52
        $region51: #{decoder_block.4} parent=47 // pred_region
          %p384 = scmp.lt.s32.totalorder %s29, 1
          %s385 = scalar_select %p384, %s29, 1
          %p386 = scmp.lt.s32.totalorder %s30, 0
          %s387 = scalar_select %p386, %s30, 0
          %s388 = sadd.s32 %s387, %s385
          %s389 = smul.addr %s388, 8
          %s390 = scalar_lea.vmem %s0, %s389
        $region52: #{decoder_block.4} parent=47 // pred_fallthru
          _
        // Predicated region
        $region53: #{decoder_block.4} parent=47 // pred_check
          %p391 = pneg %p82
        $region54: #{decoder_block.4} parent=47 // pred_check_branch
          %393 = sbr.rel (%p391) target = $region56
        $region55: #{decoder_block.4} parent=47 // pred_region
          %p394 = scmp.lt.s32.totalorder %s29, 1
          %s395 = scalar_select %p394, %s29, 1
          %s396 = smul.addr %s395, 8
          %s397 = scalar_lea.vmem %s1, %s396
        $region56: #{decoder_block.4} parent=47 // pred_fallthru
          _
        // Predicated region
        $region57: #{decoder_block.4} parent=47 // pred_check
          %p398 = pneg %p108
        $region58: #{decoder_block.4} parent=47 // pred_check_branch
          %400 = sbr.rel (%p398) target = $region60
        $region59: #{decoder_block.4} parent=47 // pred_region
          %p401 = scmp.lt.s32.totalorder %s29, 1
          %s402 = scalar_select %p401, %s29, 1
          %s403 = scalar_lea.vmem %s2, %s402
        $region60: #{decoder_block.4} parent=47 // pred_fallthru
          _
      $region48: #{decoder_block.4} parent=5 // pred_fallthru
        _
      %p404 = scmp.le.s32.totalorder 1, %s22
      %p405 = scmp.lt.s32.totalorder %s22, 3
      %p406 = pnand %p404, %p405
      %p407 = pneg %p406
      // Predicated region
      $region61: #{decoder_block.4} parent=5 // pred_check
        _
      $region62: #{decoder_block.4} parent=5 // pred_check_branch
        %409 = sbr.rel (%p406) target = $region64
      $region63: #{decoder_block.4} parent=5 // pred_region
        %s410 = ssub.s32 %s22, 1
        %p411 = scmp.lt.s32.totalorder %s31, 1
        %s412 = scalar_select %p411, %s31, 1
        %p413 = scmp.lt.s32.totalorder %s32, 0
        %s414 = scalar_select %p413, %s32, 0
        %s415 = sadd.s32 %s414, %s412
        %s416 = smul.addr %s415, 8
        %s417 = scalar_lea.vmem %s0, %s416
        %p418 = pneg %p62
        %p419 = pneg %p59
        %p420 = scmp.lt.s32.totalorder %s31, 1
        %s421 = scalar_select %p420, %s31, 1
        %s422 = smul.addr %s421, 8
        %s423 = scalar_lea.vmem %s1, %s422
        %p424 = pneg %p88
        %p425 = pneg %p85
        %p426 = scmp.lt.s32.totalorder %s31, 1
        %s427 = scalar_select %p426, %s31, 1
        %s428 = scalar_lea.vmem %s2, %s427
        %p429 = pneg %p114
        %p430 = pneg %p111
        %p431 = pneg %p135
        %p432 = pneg %p132
        %p433 = pneg %p156
        %p434 = pneg %p153
        %p435 = pneg %p177
        %p436 = pneg %p174
        %p437 = pneg %p198
        %p438 = pneg %p195
        %p439 = pneg %p219
        %p440 = pneg %p216
        %p441 = pneg %p240
        %p442 = pneg %p237
        %p443 = pneg %p261
        %p444 = pneg %p258
        %p445 = pneg %p282
        %p446 = pneg %p279
        %p447 = pneg %p310
        %p448 = pneg %p307
        %p449 = scmp.lt.s32.totalorder %s31, 1
        %s450 = scalar_select %p449, %s31, 1
        %p451 = scmp.lt.s32.totalorder %s32, 0
        %s452 = scalar_select %p451, %s32, 0
        %s453 = sadd.s32 %s452, %s450
        %s454 = smul.addr %s453, 8
        %s455 = scalar_lea.vmem %s11, %s454
        %p456 = pneg %p338
        %p457 = pneg %p335
        %s458 = sand.u32 %s325, 1
        %s459 = scalar_lea.sflag [#allocation4], %s458
        %s460 = sand.u32 %s325, 1
        %s461 = smul.addr %s460, 32
        %s462 = scalar_lea.vmem [#allocation3], %s461
        %p463 = scmp.lt.s32.totalorder %s31, 1
        %s464 = scalar_select %p463, %s31, 1
        %p465 = scmp.lt.s32.totalorder %s32, 0
        %s466 = scalar_select %p465, %s32, 0
        %s467 = sadd.s32 %s466, %s464
        %s468 = smul.addr %s467, 8
        %s469 = scalar_lea.vmem %s0, %s468
        %p470 = scmp.lt.s32.totalorder %s31, 1
        %s471 = scalar_select %p470, %s31, 1
        %s472 = smul.addr %s471, 8
        %s473 = scalar_lea.vmem %s1, %s472
        %p474 = scmp.lt.s32.totalorder %s31, 1
        %s475 = scalar_select %p474, %s31, 1
        %s476 = scalar_lea.vmem %s2, %s475
        %p477 = scmp.lt.s32.totalorder %s31, 1
        %s478 = scalar_select %p477, %s31, 1
        %p479 = scmp.lt.s32.totalorder %s32, 0
        %s480 = scalar_select %p479, %s32, 0
        %s481 = sadd.s32 %s480, %s478
        %s482 = smul.addr %s481, 8
        %s483 = scalar_lea.vmem %s11, %s482
        %v485 = vld [vmem:[%s469] sm:$0xff]
        %v486 = vld [vmem:[%s473] sm:$0xff]
        %v487 = vld [vmem:[%s476] sm:$0x1]
        %vm488 = vcmp.eq.f32.partialorder %v487, 0.0
        %v489 = vpack.c.bf16 %v485, %v485
        %v490 = vld [vmem:[%s3] sm:$0xf]
        %v491 = vld [vmem:[%s3 + $0x4] sm:$0xf]
        %v492 = vld [vmem:[%s3 + $0x8] sm:$0xf]
        %v493 = vld [vmem:[%s3 + $0xc] sm:$0xf]
        %v494 = vld [vmem:[%s4] sm:$0x1]
        %v496 = vlaneseq
        %v497 = vshrl.u32 %v496, 7
        %v498 = vsub.s32 0, %v497
        %v499 = vrot.slane %v494, %v498
        %v505 = vunpack.c.l.b16 %v490
        %v506 = vunpack.c.l.b16 %v491
        %v507 = vunpack.c.l.b16 %v492
        %v508 = vunpack.c.l.b16 %v493
        %v509 = vpack.c.b16 %v506, %v505
        %v510 = vpack.c.b16 %v508, %v507
        %vm513 = vcmask 261120
        %v515 = vsel %vm513, %v489, 0
        %517 = vmatprep.subr.bf16.mxu0 0
        %518 = vmatpush1.bf16.msra.mxu0 0
        %519 = vmatprep.subr.bf16.mxu0 0
        %520 = vmatpush1.bf16.msra.mxu0 0
        %521 = vmatprep.subr.bf16.mxu0 0
        %522 = vmatpush1.bf16.msra.mxu0 0
        %523 = vmatprep.subr.bf16.mxu0 0
        %524 = vmatpush1.bf16.msra.mxu0 0
        %525 = vmatprep.subr.bf16.mxu0 0
        %526 = vmatpush1.bf16.msra.mxu0 0
        %527 = vmatprep.subr.bf16.mxu0 0
        %528 = vmatpush1.bf16.msra.mxu0 0
        %529 = vmatprep.subr.bf16.mxu0 0
        %530 = vmatpush1.bf16.msra.mxu0 %v510
        %531 = vmatprep.subr.bf16.mxu0 0
        %532 = vmatpush1.bf16.msra.mxu0 %v509
        %533 = vmatprep.subr.bf16.mxu0 0
        %534 = vmatpush2.bf16.msra.mxu0 0
        %535 = vmatprep.subr.bf16.mxu0 0
        %536 = vmatpush2.bf16.msra.mxu0 0
        %537 = vmatprep.subr.bf16.mxu0 0
        %538 = vmatpush2.bf16.msra.mxu0 0
        %539 = vmatprep.subr.bf16.mxu0 0
        %540 = vmatpush2.bf16.msra.mxu0 0
        %541 = vmatprep.subr.bf16.mxu0 0
        %542 = vmatpush2.bf16.msra.mxu0 0
        %543 = vmatprep.subr.bf16.mxu0 0
        %544 = vmatpush2.bf16.msra.mxu0 0
        %545 = vmatprep.subr.bf16.mxu0 0
        %546 = vmatpush2.bf16.msra.mxu0 0
        %547 = vmatprep.subr.bf16.mxu0 0
        %548 = vmatpush2.bf16.msra.mxu0 0
        %549 = vmatprep.mubr.bf16.mxu0 0
        %550 = vmatmul.mubr.bf16.gmra.mxu0 %v515
        %v551 = vpop.f32.mrf.mxu0
        %v552 = vadd.f32 %v499, %v551
        %v553 = vpop.f32.mrf.mxu0
        %v554 = vpop.f32.mrf.mxu0
        %v555 = vpop.f32.mrf.mxu0
        %556 = vdwg.mxu0
        %v557 = vmul.f32 %v552, 0.35355338
        %v558 = vpack.c.bf16 %v486, %v486
        %v559 = vld [vmem:[%s5] sm:$0xf]
        %v560 = vld [vmem:[%s5 + $0x4] sm:$0xf]
        %v561 = vld [vmem:[%s5 + $0x8] sm:$0xf]
        %v562 = vld [vmem:[%s5 + $0xc] sm:$0xf]
        %v563 = vld [vmem:[%s6] sm:$0x1]
        %v565 = vlaneseq
        %v566 = vshrl.u32 %v565, 7
        %v567 = vsub.s32 0, %v566
        %v568 = vrot.slane %v563, %v567
        %v574 = vunpack.c.l.b16 %v559
        %v575 = vunpack.c.l.b16 %v560
        %v576 = vunpack.c.l.b16 %v561
        %v577 = vunpack.c.l.b16 %v562
        %v578 = vpack.c.b16 %v575, %v574
        %v579 = vpack.c.b16 %v577, %v576
        %v583 = vsel %vm513, %v558, 0
        %585 = vmatprep.subr.bf16.mxu0 0
        %586 = vmatpush1.bf16.msra.mxu0 0
        %587 = vmatprep.subr.bf16.mxu0 0
        %588 = vmatpush1.bf16.msra.mxu0 0
        %589 = vmatprep.subr.bf16.mxu0 0
        %590 = vmatpush1.bf16.msra.mxu0 0
        %591 = vmatprep.subr.bf16.mxu0 0
        %592 = vmatpush1.bf16.msra.mxu0 0
        %593 = vmatprep.subr.bf16.mxu0 0
        %594 = vmatpush1.bf16.msra.mxu0 0
        %595 = vmatprep.subr.bf16.mxu0 0
        %596 = vmatpush1.bf16.msra.mxu0 0
        %597 = vmatprep.subr.bf16.mxu0 0
        %598 = vmatpush1.bf16.msra.mxu0 %v579
        %599 = vmatprep.subr.bf16.mxu0 0
        %600 = vmatpush1.bf16.msra.mxu0 %v578
        %601 = vmatprep.subr.bf16.mxu0 0
        %602 = vmatpush2.bf16.msra.mxu0 0
        %603 = vmatprep.subr.bf16.mxu0 0
        %604 = vmatpush2.bf16.msra.mxu0 0
        %605 = vmatprep.subr.bf16.mxu0 0
        %606 = vmatpush2.bf16.msra.mxu0 0
        %607 = vmatprep.subr.bf16.mxu0 0
        %608 = vmatpush2.bf16.msra.mxu0 0
        %609 = vmatprep.subr.bf16.mxu0 0
        %610 = vmatpush2.bf16.msra.mxu0 0
        %611 = vmatprep.subr.bf16.mxu0 0
        %612 = vmatpush2.bf16.msra.mxu0 0
        %613 = vmatprep.subr.bf16.mxu0 0
        %614 = vmatpush2.bf16.msra.mxu0 0
        %615 = vmatprep.subr.bf16.mxu0 0
        %616 = vmatpush2.bf16.msra.mxu0 0
        %617 = vmatprep.mubr.bf16.mxu0 0
        %618 = vmatmul.mubr.bf16.gmra.mxu0 %v583
        %v619 = vpop.f32.mrf.mxu0
        %v620 = vadd.f32 %v568, %v619
        %v621 = vpop.f32.mrf.mxu0
        %v622 = vpop.f32.mrf.mxu0
        %v623 = vpop.f32.mrf.mxu0
        %624 = vdwg.mxu0
        %v625 = vpack.c.bf16 %v557, %v557
        %v626 = vpack.c.bf16 %v620, %v620
        %vm627 = vcmask 64512
        %v629 = vsel %vm627, %v625, 0
        %v632 = vsel %vm627, %v626, 0
        %634 = vmatprep.subr.bf16.mxu0 0
        %635 = vmatpush1.bf16.xpose.msra.mxu0 0
        %636 = vmatprep.subr.bf16.mxu0 0
        %637 = vmatpush1.bf16.xpose.msra.mxu0 0
        %638 = vmatprep.subr.bf16.mxu0 0
        %639 = vmatpush1.bf16.xpose.msra.mxu0 0
        %640 = vmatprep.subr.bf16.mxu0 0
        %641 = vmatpush1.bf16.xpose.msra.mxu0 0
        %642 = vmatprep.subr.bf16.mxu0 0
        %643 = vmatpush1.bf16.xpose.msra.mxu0 0
        %644 = vmatprep.subr.bf16.mxu0 0
        %645 = vmatpush1.bf16.xpose.msra.mxu0 0
        %646 = vmatprep.subr.bf16.mxu0 0
        %647 = vmatpush1.bf16.xpose.msra.mxu0 0
        %648 = vmatprep.subr.bf16.mxu0 0
        %649 = vmatpush1.bf16.xpose.msra.mxu0 %v632
        %650 = vmatprep.subr.bf16.mxu0 0
        %651 = vmatpush2.bf16.xpose.msra.mxu0 0
        %652 = vmatprep.subr.bf16.mxu0 0
        %653 = vmatpush2.bf16.xpose.msra.mxu0 0
        %654 = vmatprep.subr.bf16.mxu0 0
        %655 = vmatpush2.bf16.xpose.msra.mxu0 0
        %656 = vmatprep.subr.bf16.mxu0 0
        %657 = vmatpush2.bf16.xpose.msra.mxu0 0
        %658 = vmatprep.subr.bf16.mxu0 0
        %659 = vmatpush2.bf16.xpose.msra.mxu0 0
        %660 = vmatprep.subr.bf16.mxu0 0
        %661 = vmatpush2.bf16.xpose.msra.mxu0 0
        %662 = vmatprep.subr.bf16.mxu0 0
        %663 = vmatpush2.bf16.xpose.msra.mxu0 0
        %664 = vmatprep.subr.bf16.mxu0 0
        %665 = vmatpush2.bf16.xpose.msra.mxu0 0
        %666 = vmatprep.mubr.bf16.mxu0 0
        %667 = vmatmul.mubr.bf16.gmra.mxu0 %v629
        %v668 = vpop.f32.mrf.mxu0
        %v669 = vadd.f32 0.0, %v668
        %v670 = vpop.f32.mrf.mxu0
        %v671 = vpop.f32.mrf.mxu0
        %v672 = vpop.f32.mrf.mxu0
        %673 = vdwg.mxu0
        %v674 = vsel %vm488, 1, 0
        %v675 = vlaneseq
        %v676 = vshrl.u32 %v675, 7
        %v677 = vsub.s32 0, %v676
        %v678 = vrot.slane %v674, %v677
        %vm679 = vcmp.eq.s32.totalorder %v678, 1
        %v680 = vsel %vm679, -1e+15, %v669
        %v681 = vsel %vm627, %v680, -inf
        %682 = vmax.xlane.f32.xlu0 %v681
        %v683 = vpop.xlane.xlu0 %682
        %v684 = vsub.f32 %v680, %v683
        %v685 = vmul.f32 %v684, 1.442695
        %v686 = vpow.pop %v685
        %v687 = vsel %vm627, %v686, 0.0
        %688 = vadd.xlane.f32.xlu0 %v687
        %v689 = vpop.xlane.xlu0 %688
        %v690 = vrcp.pop %v689
        %v691 = vmul.f32 1.0, %v690
        %v692 = vmul.f32 %v686, %v691
        %693 = vst.msk [vmem:[%s462] sm:$0xff] %vm627, %v692
        %v694 = vpack.c.bf16 %v692, %v692
        %696 = vrot.lane.b32.xlu0 %v626, 96
        %v697 = vpop.permute.xlu0 %696
        %v699 = vsel %vm627, %v694, 0
        %vm701 = vcmask 1043456
        %v703 = vsel %vm701, %v697, 0
        %705 = vmatprep.subr.bf16.mxu0 0
        %706 = vmatpush1.bf16.msra.mxu0 0
        %707 = vmatprep.subr.bf16.mxu0 0
        %708 = vmatpush1.bf16.msra.mxu0 0
        %709 = vmatprep.subr.bf16.mxu0 0
        %710 = vmatpush1.bf16.msra.mxu0 0
        %711 = vmatprep.subr.bf16.mxu0 0
        %712 = vmatpush1.bf16.msra.mxu0 0
        %713 = vmatprep.subr.bf16.mxu0 0
        %714 = vmatpush1.bf16.msra.mxu0 0
        %715 = vmatprep.subr.bf16.mxu0 0
        %716 = vmatpush1.bf16.msra.mxu0 0
        %717 = vmatprep.subr.bf16.mxu0 0
        %718 = vmatpush1.bf16.msra.mxu0 0
        %719 = vmatprep.subr.bf16.mxu0 0
        %720 = vmatpush1.bf16.msra.mxu0 %v703
        %721 = vmatprep.subr.bf16.mxu0 0
        %722 = vmatpush2.bf16.msra.mxu0 0
        %723 = vmatprep.subr.bf16.mxu0 0
        %724 = vmatpush2.bf16.msra.mxu0 0
        %725 = vmatprep.subr.bf16.mxu0 0
        %726 = vmatpush2.bf16.msra.mxu0 0
        %727 = vmatprep.subr.bf16.mxu0 0
        %728 = vmatpush2.bf16.msra.mxu0 0
        %729 = vmatprep.subr.bf16.mxu0 0
        %730 = vmatpush2.bf16.msra.mxu0 0
        %731 = vmatprep.subr.bf16.mxu0 0
        %732 = vmatpush2.bf16.msra.mxu0 0
        %733 = vmatprep.subr.bf16.mxu0 0
        %734 = vmatpush2.bf16.msra.mxu0 0
        %735 = vmatprep.subr.bf16.mxu0 0
        %736 = vmatpush2.bf16.msra.mxu0 0
        %737 = vmatprep.mubr.bf16.mxu0 0
        %738 = vmatmul.mubr.bf16.gmra.mxu0 %v699
        %v739 = vpop.f32.mrf.mxu0
        %v740 = vadd.f32 0.0, %v739
        %v741 = vpop.f32.mrf.mxu0
        %v742 = vpop.f32.mrf.mxu0
        %v743 = vpop.f32.mrf.mxu0
        %744 = vdwg.mxu0
        %745 = vst.msk [vmem:[#allocation2] sm:$0xff] %vm627, %v740
        %747 = vrot.lane.b32.xlu0 %v625, 120
        %v748 = vpop.permute.xlu0 %747
        %749 = vrot.lane.b32.xlu0 %v626, 120
        %v750 = vpop.permute.xlu0 %749
        %v752 = vsel %vm627, %v748, 0
        %v755 = vsel %vm627, %v750, 0
        %757 = vmatprep.subr.bf16.mxu0 0
        %758 = vmatpush1.bf16.xpose.msra.mxu0 0
        %759 = vmatprep.subr.bf16.mxu0 0
        %760 = vmatpush1.bf16.xpose.msra.mxu0 0
        %761 = vmatprep.subr.bf16.mxu0 0
        %762 = vmatpush1.bf16.xpose.msra.mxu0 0
        %763 = vmatprep.subr.bf16.mxu0 0
        %764 = vmatpush1.bf16.xpose.msra.mxu0 0
        %765 = vmatprep.subr.bf16.mxu0 0
        %766 = vmatpush1.bf16.xpose.msra.mxu0 0
        %767 = vmatprep.subr.bf16.mxu0 0
        %768 = vmatpush1.bf16.xpose.msra.mxu0 0
        %769 = vmatprep.subr.bf16.mxu0 0
        %770 = vmatpush1.bf16.xpose.msra.mxu0 0
        %771 = vmatprep.subr.bf16.mxu0 0
        %772 = vmatpush1.bf16.xpose.msra.mxu0 %v755
        %773 = vmatprep.subr.bf16.mxu0 0
        %774 = vmatpush2.bf16.xpose.msra.mxu0 0
        %775 = vmatprep.subr.bf16.mxu0 0
        %776 = vmatpush2.bf16.xpose.msra.mxu0 0
        %777 = vmatprep.subr.bf16.mxu0 0
        %778 = vmatpush2.bf16.xpose.msra.mxu0 0
        %779 = vmatprep.subr.bf16.mxu0 0
        %780 = vmatpush2.bf16.xpose.msra.mxu0 0
        %781 = vmatprep.subr.bf16.mxu0 0
        %782 = vmatpush2.bf16.xpose.msra.mxu0 0
        %783 = vmatprep.subr.bf16.mxu0 0
        %784 = vmatpush2.bf16.xpose.msra.mxu0 0
        %785 = vmatprep.subr.bf16.mxu0 0
        %786 = vmatpush2.bf16.xpose.msra.mxu0 0
        %787 = vmatprep.subr.bf16.mxu0 0
        %788 = vmatpush2.bf16.xpose.msra.mxu0 0
        %789 = vmatprep.mubr.bf16.mxu0 0
        %790 = vmatmul.mubr.bf16.gmra.mxu0 %v752
        %v791 = vpop.f32.mrf.mxu0
        %v792 = vadd.f32 0.0, %v791
        %v793 = vpop.f32.mrf.mxu0
        %v794 = vpop.f32.mrf.mxu0
        %v795 = vpop.f32.mrf.mxu0
        %796 = vdwg.mxu0
        %v797 = vsel %vm679, -1e+15, %v792
        %v798 = vsel %vm627, %v797, -inf
        %799 = vmax.xlane.f32.xlu0 %v798
        %v800 = vpop.xlane.xlu0 %799
        %v801 = vsub.f32 %v797, %v800
        %v802 = vmul.f32 %v801, 1.442695
        %v803 = vpow.pop %v802
        %v804 = vsel %vm627, %v803, 0.0
        %805 = vadd.xlane.f32.xlu0 %v804
        %v806 = vpop.xlane.xlu0 %805
        %v807 = vrcp.pop %v806
        %v808 = vmul.f32 1.0, %v807
        %v809 = vmul.f32 %v803, %v808
        %s810 = scalar_lea.vmem %s462, 8 [#allocation3]
        %811 = vst.msk [vmem:[%s810] sm:$0xff] %vm627, %v809
        %v812 = vpack.c.bf16 %v809, %v809
        %813 = vrot.lane.b32.xlu0 %v626, 88
        %v814 = vpop.permute.xlu0 %813
        %v816 = vsel %vm627, %v812, 0
        %v819 = vsel %vm701, %v814, 0
        %821 = vmatprep.subr.bf16.mxu0 0
        %822 = vmatpush1.bf16.msra.mxu0 0
        %823 = vmatprep.subr.bf16.mxu0 0
        %824 = vmatpush1.bf16.msra.mxu0 0
        %825 = vmatprep.subr.bf16.mxu0 0
        %826 = vmatpush1.bf16.msra.mxu0 0
        %827 = vmatprep.subr.bf16.mxu0 0
        %828 = vmatpush1.bf16.msra.mxu0 0
        %829 = vmatprep.subr.bf16.mxu0 0
        %830 = vmatpush1.bf16.msra.mxu0 0
        %831 = vmatprep.subr.bf16.mxu0 0
        %832 = vmatpush1.bf16.msra.mxu0 0
        %833 = vmatprep.subr.bf16.mxu0 0
        %834 = vmatpush1.bf16.msra.mxu0 0
        %835 = vmatprep.subr.bf16.mxu0 0
        %836 = vmatpush1.bf16.msra.mxu0 %v819
        %837 = vmatprep.subr.bf16.mxu0 0
        %838 = vmatpush2.bf16.msra.mxu0 0
        %839 = vmatprep.subr.bf16.mxu0 0
        %840 = vmatpush2.bf16.msra.mxu0 0
        %841 = vmatprep.subr.bf16.mxu0 0
        %842 = vmatpush2.bf16.msra.mxu0 0
        %843 = vmatprep.subr.bf16.mxu0 0
        %844 = vmatpush2.bf16.msra.mxu0 0
        %845 = vmatprep.subr.bf16.mxu0 0
        %846 = vmatpush2.bf16.msra.mxu0 0
        %847 = vmatprep.subr.bf16.mxu0 0
        %848 = vmatpush2.bf16.msra.mxu0 0
        %849 = vmatprep.subr.bf16.mxu0 0
        %850 = vmatpush2.bf16.msra.mxu0 0
        %851 = vmatprep.subr.bf16.mxu0 0
        %852 = vmatpush2.bf16.msra.mxu0 0
        %853 = vmatprep.mubr.bf16.mxu0 0
        %854 = vmatmul.mubr.bf16.gmra.mxu0 %v816
        %v855 = vpop.f32.mrf.mxu0
        %v856 = vadd.f32 0.0, %v855
        %v857 = vpop.f32.mrf.mxu0
        %v858 = vpop.f32.mrf.mxu0
        %v859 = vpop.f32.mrf.mxu0
        %860 = vdwg.mxu0
        %862 = vrot.lane.b32.xlu0 %v856, 8
        %v863 = vpop.permute.xlu0 %862
        %vm865 = vcmask 130112
        %866 = vst.msk [vmem:[#allocation2] sm:$0xff] %vm865, %v863
        %867 = vrot.lane.b32.xlu0 %v625, 112
        %v868 = vpop.permute.xlu0 %867
        %869 = vrot.lane.b32.xlu0 %v626, 112
        %v870 = vpop.permute.xlu0 %869
        %v872 = vsel %vm627, %v868, 0
        %v875 = vsel %vm627, %v870, 0
        %877 = vmatprep.subr.bf16.mxu0 0
        %878 = vmatpush1.bf16.xpose.msra.mxu0 0
        %879 = vmatprep.subr.bf16.mxu0 0
        %880 = vmatpush1.bf16.xpose.msra.mxu0 0
        %881 = vmatprep.subr.bf16.mxu0 0
        %882 = vmatpush1.bf16.xpose.msra.mxu0 0
        %883 = vmatprep.subr.bf16.mxu0 0
        %884 = vmatpush1.bf16.xpose.msra.mxu0 0
        %885 = vmatprep.subr.bf16.mxu0 0
        %886 = vmatpush1.bf16.xpose.msra.mxu0 0
        %887 = vmatprep.subr.bf16.mxu0 0
        %888 = vmatpush1.bf16.xpose.msra.mxu0 0
        %889 = vmatprep.subr.bf16.mxu0 0
        %890 = vmatpush1.bf16.xpose.msra.mxu0 0
        %891 = vmatprep.subr.bf16.mxu0 0
        %892 = vmatpush1.bf16.xpose.msra.mxu0 %v875
        %893 = vmatprep.subr.bf16.mxu0 0
        %894 = vmatpush2.bf16.xpose.msra.mxu0 0
        %895 = vmatprep.subr.bf16.mxu0 0
        %896 = vmatpush2.bf16.xpose.msra.mxu0 0
        %897 = vmatprep.subr.bf16.mxu0 0
        %898 = vmatpush2.bf16.xpose.msra.mxu0 0
        %899 = vmatprep.subr.bf16.mxu0 0
        %900 = vmatpush2.bf16.xpose.msra.mxu0 0
        %901 = vmatprep.subr.bf16.mxu0 0
        %902 = vmatpush2.bf16.xpose.msra.mxu0 0
        %903 = vmatprep.subr.bf16.mxu0 0
        %904 = vmatpush2.bf16.xpose.msra.mxu0 0
        %905 = vmatprep.subr.bf16.mxu0 0
        %906 = vmatpush2.bf16.xpose.msra.mxu0 0
        %907 = vmatprep.subr.bf16.mxu0 0
        %908 = vmatpush2.bf16.xpose.msra.mxu0 0
        %909 = vmatprep.mubr.bf16.mxu0 0
        %910 = vmatmul.mubr.bf16.gmra.mxu0 %v872
        %v911 = vpop.f32.mrf.mxu0
        %v912 = vadd.f32 0.0, %v911
        %v913 = vpop.f32.mrf.mxu0
        %v914 = vpop.f32.mrf.mxu0
        %v915 = vpop.f32.mrf.mxu0
        %916 = vdwg.mxu0
        %v917 = vsel %vm679, -1e+15, %v912
        %v918 = vsel %vm627, %v917, -inf
        %919 = vmax.xlane.f32.xlu0 %v918
        %v920 = vpop.xlane.xlu0 %919
        %v921 = vsub.f32 %v917, %v920
        %v922 = vmul.f32 %v921, 1.442695
        %v923 = vpow.pop %v922
        %v924 = vsel %vm627, %v923, 0.0
        %925 = vadd.xlane.f32.xlu0 %v924
        %v926 = vpop.xlane.xlu0 %925
        %v927 = vrcp.pop %v926
        %v928 = vmul.f32 1.0, %v927
        %v929 = vmul.f32 %v923, %v928
        %s930 = scalar_lea.vmem %s462, 16 [#allocation3]
        %931 = vst.msk [vmem:[%s930] sm:$0xff] %vm627, %v929
        %v932 = vpack.c.bf16 %v929, %v929
        %933 = vrot.lane.b32.xlu0 %v626, 80
        %v934 = vpop.permute.xlu0 %933
        %v936 = vsel %vm627, %v932, 0
        %v939 = vsel %vm701, %v934, 0
        %941 = vmatprep.subr.bf16.mxu0 0
        %942 = vmatpush1.bf16.msra.mxu0 0
        %943 = vmatprep.subr.bf16.mxu0 0
        %944 = vmatpush1.bf16.msra.mxu0 0
        %945 = vmatprep.subr.bf16.mxu0 0
        %946 = vmatpush1.bf16.msra.mxu0 0
        %947 = vmatprep.subr.bf16.mxu0 0
        %948 = vmatpush1.bf16.msra.mxu0 0
        %949 = vmatprep.subr.bf16.mxu0 0
        %950 = vmatpush1.bf16.msra.mxu0 0
        %951 = vmatprep.subr.bf16.mxu0 0
        %952 = vmatpush1.bf16.msra.mxu0 0
        %953 = vmatprep.subr.bf16.mxu0 0
        %954 = vmatpush1.bf16.msra.mxu0 0
        %955 = vmatprep.subr.bf16.mxu0 0
        %956 = vmatpush1.bf16.msra.mxu0 %v939
        %957 = vmatprep.subr.bf16.mxu0 0
        %958 = vmatpush2.bf16.msra.mxu0 0
        %959 = vmatprep.subr.bf16.mxu0 0
        %960 = vmatpush2.bf16.msra.mxu0 0
        %961 = vmatprep.subr.bf16.mxu0 0
        %962 = vmatpush2.bf16.msra.mxu0 0
        %963 = vmatprep.subr.bf16.mxu0 0
        %964 = vmatpush2.bf16.msra.mxu0 0
        %965 = vmatprep.subr.bf16.mxu0 0
        %966 = vmatpush2.bf16.msra.mxu0 0
        %967 = vmatprep.subr.bf16.mxu0 0
        %968 = vmatpush2.bf16.msra.mxu0 0
        %969 = vmatprep.subr.bf16.mxu0 0
        %970 = vmatpush2.bf16.msra.mxu0 0
        %971 = vmatprep.subr.bf16.mxu0 0
        %972 = vmatpush2.bf16.msra.mxu0 0
        %973 = vmatprep.mubr.bf16.mxu0 0
        %974 = vmatmul.mubr.bf16.gmra.mxu0 %v936
        %v975 = vpop.f32.mrf.mxu0
        %v976 = vadd.f32 0.0, %v975
        %v977 = vpop.f32.mrf.mxu0
        %v978 = vpop.f32.mrf.mxu0
        %v979 = vpop.f32.mrf.mxu0
        %980 = vdwg.mxu0
        %982 = vrot.lane.b32.xlu0 %v976, 16
        %v983 = vpop.permute.xlu0 %982
        %vm985 = vcmask 195712
        %986 = vst.msk [vmem:[#allocation2] sm:$0xff] %vm985, %v983
        %987 = vrot.lane.b32.xlu0 %v625, 104
        %v988 = vpop.permute.xlu0 %987
        %989 = vrot.lane.b32.xlu0 %v626, 104
        %v990 = vpop.permute.xlu0 %989
        %v992 = vsel %vm627, %v988, 0
        %v995 = vsel %vm627, %v990, 0
        %997 = vmatprep.subr.bf16.mxu0 0
        %998 = vmatpush1.bf16.xpose.msra.mxu0 0
        %999 = vmatprep.subr.bf16.mxu0 0
        %1000 = vmatpush1.bf16.xpose.msra.mxu0 0
        %1001 = vmatprep.subr.bf16.mxu0 0
        %1002 = vmatpush1.bf16.xpose.msra.mxu0 0
        %1003 = vmatprep.subr.bf16.mxu0 0
        %1004 = vmatpush1.bf16.xpose.msra.mxu0 0
        %1005 = vmatprep.subr.bf16.mxu0 0
        %1006 = vmatpush1.bf16.xpose.msra.mxu0 0
        %1007 = vmatprep.subr.bf16.mxu0 0
        %1008 = vmatpush1.bf16.xpose.msra.mxu0 0
        %1009 = vmatprep.subr.bf16.mxu0 0
        %1010 = vmatpush1.bf16.xpose.msra.mxu0 0
        %1011 = vmatprep.subr.bf16.mxu0 0
        %1012 = vmatpush1.bf16.xpose.msra.mxu0 %v995
        %1013 = vmatprep.subr.bf16.mxu0 0
        %1014 = vmatpush2.bf16.xpose.msra.mxu0 0
        %1015 = vmatprep.subr.bf16.mxu0 0
        %1016 = vmatpush2.bf16.xpose.msra.mxu0 0
        %1017 = vmatprep.subr.bf16.mxu0 0
        %1018 = vmatpush2.bf16.xpose.msra.mxu0 0
        %1019 = vmatprep.subr.bf16.mxu0 0
        %1020 = vmatpush2.bf16.xpose.msra.mxu0 0
        %1021 = vmatprep.subr.bf16.mxu0 0
        %1022 = vmatpush2.bf16.xpose.msra.mxu0 0
        %1023 = vmatprep.subr.bf16.mxu0 0
        %1024 = vmatpush2.bf16.xpose.msra.mxu0 0
        %1025 = vmatprep.subr.bf16.mxu0 0
        %1026 = vmatpush2.bf16.xpose.msra.mxu0 0
        %1027 = vmatprep.subr.bf16.mxu0 0
        %1028 = vmatpush2.bf16.xpose.msra.mxu0 0
        %1029 = vmatprep.mubr.bf16.mxu0 0
        %1030 = vmatmul.mubr.bf16.gmra.mxu0 %v992
        %v1031 = vpop.f32.mrf.mxu0
        %v1032 = vadd.f32 0.0, %v1031
        %v1033 = vpop.f32.mrf.mxu0
        %v1034 = vpop.f32.mrf.mxu0
        %v1035 = vpop.f32.mrf.mxu0
        %1036 = vdwg.mxu0
        %v1037 = vsel %vm679, -1e+15, %v1032
        %v1038 = vsel %vm627, %v1037, -inf
        %1039 = vmax.xlane.f32.xlu0 %v1038
        %v1040 = vpop.xlane.xlu0 %1039
        %v1041 = vsub.f32 %v1037, %v1040
        %v1042 = vmul.f32 %v1041, 1.442695
        %v1043 = vpow.pop %v1042
        %v1044 = vsel %vm627, %v1043, 0.0
        %1045 = vadd.xlane.f32.xlu0 %v1044
        %v1046 = vpop.xlane.xlu0 %1045
        %v1047 = vrcp.pop %v1046
        %v1048 = vmul.f32 1.0, %v1047
        %v1049 = vmul.f32 %v1043, %v1048
        %s1050 = scalar_lea.vmem %s462, 24 [#allocation3]
        %1051 = vst.msk [vmem:[%s1050] sm:$0xff] %vm627, %v1049
        %v1052 = vpack.c.bf16 %v1049, %v1049
        %1053 = vrot.lane.b32.xlu0 %v626, 72
        %v1054 = vpop.permute.xlu0 %1053
        %v1056 = vsel %vm627, %v1052, 0
        %v1059 = vsel %vm701, %v1054, 0
        %1061 = vmatprep.subr.bf16.mxu0 0
        %1062 = vmatpush1.bf16.msra.mxu0 0
        %1063 = vmatprep.subr.bf16.mxu0 0
        %1064 = vmatpush1.bf16.msra.mxu0 0
        %1065 = vmatprep.subr.bf16.mxu0 0
        %1066 = vmatpush1.bf16.msra.mxu0 0
        %1067 = vmatprep.subr.bf16.mxu0 0
        %1068 = vmatpush1.bf16.msra.mxu0 0
        %1069 = vmatprep.subr.bf16.mxu0 0
        %1070 = vmatpush1.bf16.msra.mxu0 0
        %1071 = vmatprep.subr.bf16.mxu0 0
        %1072 = vmatpush1.bf16.msra.mxu0 0
        %1073 = vmatprep.subr.bf16.mxu0 0
        %1074 = vmatpush1.bf16.msra.mxu0 0
        %1075 = vmatprep.subr.bf16.mxu0 0
        %1076 = vmatpush1.bf16.msra.mxu0 %v1059
        %1077 = vmatprep.subr.bf16.mxu0 0
        %1078 = vmatpush2.bf16.msra.mxu0 0
        %1079 = vmatprep.subr.bf16.mxu0 0
        %1080 = vmatpush2.bf16.msra.mxu0 0
        %1081 = vmatprep.subr.bf16.mxu0 0
        %1082 = vmatpush2.bf16.msra.mxu0 0
        %1083 = vmatprep.subr.bf16.mxu0 0
        %1084 = vmatpush2.bf16.msra.mxu0 0
        %1085 = vmatprep.subr.bf16.mxu0 0
        %1086 = vmatpush2.bf16.msra.mxu0 0
        %1087 = vmatprep.subr.bf16.mxu0 0
        %1088 = vmatpush2.bf16.msra.mxu0 0
        %1089 = vmatprep.subr.bf16.mxu0 0
        %1090 = vmatpush2.bf16.msra.mxu0 0
        %1091 = vmatprep.subr.bf16.mxu0 0
        %1092 = vmatpush2.bf16.msra.mxu0 0
        %1093 = vmatprep.mubr.bf16.mxu0 0
        %1094 = vmatmul.mubr.bf16.gmra.mxu0 %v1056
        %v1095 = vpop.f32.mrf.mxu0
        %v1096 = vadd.f32 0.0, %v1095
        %v1097 = vpop.f32.mrf.mxu0
        %v1098 = vpop.f32.mrf.mxu0
        %v1099 = vpop.f32.mrf.mxu0
        %1100 = vdwg.mxu0
        %1102 = vrot.lane.b32.xlu0 %v1096, 24
        %v1103 = vpop.permute.xlu0 %1102
        %vm1105 = vcmask 261312
        %1106 = vst.msk [vmem:[#allocation2] sm:$0xff] %vm1105, %v1103
        %v1107 = vld [vmem:[#allocation2] sm:$0xff]
        %v1108 = vpack.c.bf16 %v1107, %v1107
        %v1109 = vld [vmem:[%s7] sm:$0xf]
        %v1110 = vld [vmem:[%s7 + $0x4] sm:$0xf]
        %v1111 = vld [vmem:[%s7 + $0x8] sm:$0xf]
        %v1112 = vld [vmem:[%s7 + $0xc] sm:$0xf]
        %v1113 = vld [vmem:[%s8] sm:$0x1]
        %v1115 = vlaneseq
        %v1116 = vshrl.u32 %v1115, 7
        %v1117 = vsub.s32 0, %v1116
        %v1118 = vrot.slane %v1113, %v1117
        %v1124 = vunpack.c.l.b16 %v1109
        %v1125 = vunpack.c.l.b16 %v1110
        %v1126 = vunpack.c.l.b16 %v1111
        %v1127 = vunpack.c.l.b16 %v1112
        %v1128 = vpack.c.b16 %v1125, %v1124
        %v1129 = vpack.c.b16 %v1127, %v1126
        %v1133 = vsel %vm513, %v1108, 0
        %1135 = vmatprep.subr.bf16.mxu0 0
        %1136 = vmatpush1.bf16.msra.mxu0 0
        %1137 = vmatprep.subr.bf16.mxu0 0
        %1138 = vmatpush1.bf16.msra.mxu0 0
        %1139 = vmatprep.subr.bf16.mxu0 0
        %1140 = vmatpush1.bf16.msra.mxu0 0
        %1141 = vmatprep.subr.bf16.mxu0 0
        %1142 = vmatpush1.bf16.msra.mxu0 0
        %1143 = vmatprep.subr.bf16.mxu0 0
        %1144 = vmatpush1.bf16.msra.mxu0 0
        %1145 = vmatprep.subr.bf16.mxu0 0
        %1146 = vmatpush1.bf16.msra.mxu0 0
        %1147 = vmatprep.subr.bf16.mxu0 0
        %1148 = vmatpush1.bf16.msra.mxu0 %v1129
        %1149 = vmatprep.subr.bf16.mxu0 0
        %1150 = vmatpush1.bf16.msra.mxu0 %v1128
        %1151 = vmatprep.subr.bf16.mxu0 0
        %1152 = vmatpush2.bf16.msra.mxu0 0
        %1153 = vmatprep.subr.bf16.mxu0 0
        %1154 = vmatpush2.bf16.msra.mxu0 0
        %1155 = vmatprep.subr.bf16.mxu0 0
        %1156 = vmatpush2.bf16.msra.mxu0 0
        %1157 = vmatprep.subr.bf16.mxu0 0
        %1158 = vmatpush2.bf16.msra.mxu0 0
        %1159 = vmatprep.subr.bf16.mxu0 0
        %1160 = vmatpush2.bf16.msra.mxu0 0
        %1161 = vmatprep.subr.bf16.mxu0 0
        %1162 = vmatpush2.bf16.msra.mxu0 0
        %1163 = vmatprep.subr.bf16.mxu0 0
        %1164 = vmatpush2.bf16.msra.mxu0 0
        %1165 = vmatprep.subr.bf16.mxu0 0
        %1166 = vmatpush2.bf16.msra.mxu0 0
        %1167 = vmatprep.mubr.bf16.mxu0 0
        %1168 = vmatmul.mubr.bf16.gmra.mxu0 %v1133
        %v1169 = vpop.f32.mrf.mxu0
        %v1170 = vadd.f32 %v1118, %v1169
        %v1171 = vpop.f32.mrf.mxu0
        %v1172 = vpop.f32.mrf.mxu0
        %v1173 = vpop.f32.mrf.mxu0
        %1174 = vdwg.mxu0
        %v1175 = vadd.f32 %v1170, %v485
        %v1176 = vsel %vm513, %v1175, 0.0
        %1177 = vadd.xlane.f32.xlu0 %v1176
        %v1178 = vpop.xlane.xlu0 %1177
        %v1179 = vrcp.pop 32.0
        %v1180 = vmul.f32 %v1178, %v1179
        %v1181 = vsub.f32 %v1175, %v1180
        %v1182 = vmul.f32 %v1181, %v1181
        %v1183 = vsel %vm513, %v1182, 0.0
        %1184 = vadd.xlane.f32.xlu0 %v1183
        %v1185 = vpop.xlane.xlu0 %1184
        %v1186 = vmul.f32 %v1185, %v1179
        %v1187 = vadd.f32 %v1186, 1e-05
        %v1188 = vrsqrt.pop %v1187
        %v1189 = vmul.f32 %v1181, %v1188
        %v1190 = vld [vmem:[%s9] sm:$0x1]
        %v1192 = vlaneseq
        %v1193 = vshrl.u32 %v1192, 7
        %v1194 = vsub.s32 0, %v1193
        %v1195 = vrot.slane %v1190, %v1194
        %v1197 = vmul.f32 %v1189, %v1195
        %v1198 = vld [vmem:[%s10] sm:$0x1]
        %v1200 = vlaneseq
        %v1201 = vshrl.u32 %v1200, 7
        %v1202 = vsub.s32 0, %v1201
        %v1203 = vrot.slane %v1198, %v1202
        %v1205 = vadd.f32 %v1197, %v1203
        %1206 = vst.msk [vmem:[%s483] sm:$0xff] %vm513, %v1205
        %p1207 = scmp.lt.s32.totalorder %s31, 1
        %s1208 = scalar_select %p1207, %s31, 1
        %p1209 = scmp.lt.s32.totalorder %s32, 0
        %s1210 = scalar_select %p1209, %s32, 0
        %s1211 = sadd.s32 %s1210, %s1208
        %s1212 = smul.addr %s1211, 8
        %s1213 = scalar_lea.vmem %s11, %s1212
        %s1214 = sand.u32 %s325, 1
        %s1215 = scalar_lea.sflag [#allocation4], %s1214
        %s1216 = sand.u32 %s325, 1
        %s1217 = smul.addr %s1216, 32
        %s1218 = scalar_lea.vmem [#allocation3], %s1217
        // Predicated region
        $region65: #{decoder_block.4} parent=63 // pred_check
          %p1219 = pneg %p307
        $region66: #{decoder_block.4} parent=63 // pred_check_branch
          %1221 = sbr.rel (%p1219) target = $region68
        $region67: #{decoder_block.4} parent=63 // pred_region
          _
        $region68: #{decoder_block.4} parent=63 // pred_fallthru
          _
        // Predicated region
        $region69: #{decoder_block.4} parent=63 // pred_check
          %p1222 = pneg %p335
        $region70: #{decoder_block.4} parent=63 // pred_check_branch
          %1224 = sbr.rel (%p1222) target = $region72
        $region71: #{decoder_block.4} parent=63 // pred_region
          %s1226 = ssub.s32 512, 512
          %1227 = vsyncadd %s1215, %s1226
          %s1228 = smul.addr %s31, 4
          %s1229 = sadd.s32 %s32, %s1228
          %s1230 = smul.addr %s1229, 128
          %s1231 = scalar_lea.hbm %s12, %s1230
          %s1232 = sshll.u32 %s1218, 4
          %s1233 = int_to_ptr.vmem [resolvable:$true] %s1232
          %1238 = dma.vmem_to_hbm [thread:$0]  %s1233, 512, %s1231, %s1215, 128, 128, 8
        $region72: #{decoder_block.4} parent=63 // pred_fallthru
          _
      $region64: #{decoder_block.4} parent=5 // pred_fallthru
        _
      %p1239 = scmp.le.s32.totalorder 2, %s22
      // Predicated region
      $region73: #{decoder_block.4} parent=5 // pred_check
        %p1240 = pneg %p1239
      $region74: #{decoder_block.4} parent=5 // pred_check_branch
        %1242 = sbr.rel (%p1240) target = $region76
      $region75: #{decoder_block.4} parent=5 // pred_region
        %s1243 = ssub.s32 %s22, 2
        // Predicated region
        $region77: #{decoder_block.4} parent=75 // pred_check
          %p1244 = pneg %p313
        $region78: #{decoder_block.4} parent=75 // pred_check_branch
          %1246 = sbr.rel (%p1244) target = $region80
        $region79: #{decoder_block.4} parent=75 // pred_region
          %p1247 = scmp.lt.s32.totalorder %s33, 1
          %s1248 = scalar_select %p1247, %s33, 1
          %p1249 = scmp.lt.s32.totalorder %s34, 0
          %s1250 = scalar_select %p1249, %s34, 0
          %s1251 = sadd.s32 %s1250, %s1248
          %s1252 = smul.addr %s1251, 8
          %s1253 = scalar_lea.vmem %s11, %s1252
        $region80: #{decoder_block.4} parent=75 // pred_fallthru
          _
        // Predicated region
        $region81: #{decoder_block.4} parent=75 // pred_check
          %p1254 = pneg %p341
        $region82: #{decoder_block.4} parent=75 // pred_check_branch
          %1256 = sbr.rel (%p1254) target = $region84
        $region83: #{decoder_block.4} parent=75 // pred_region
          %s1257 = sand.u32 %s326, 1
          %s1258 = scalar_lea.sflag [#allocation4], %s1257
          %s1259 = sand.u32 %s326, 1
          %s1260 = smul.addr %s1259, 32
          %s1261 = scalar_lea.vmem [#allocation3], %s1260
          %1262 = dma.done %s1258, 512
        $region84: #{decoder_block.4} parent=75 // pred_fallthru
          _
      $region76: #{decoder_block.4} parent=5 // pred_fallthru
        _
    $region6: #{decoder_block.4} parent=1 // loop_footer
      %s26 = sadd.s32 1, %s22
    $region7: #{decoder_block.4} parent=1 // loop_footer_branch
      %21 = sbr.rel target = $region3
    $region8: #{decoder_block.4} parent=1 // loop_exit
      _
    %1263 = vsyncpa [#allocation4], 1
    %s1264 = scalar_lea.sflag [#allocation4], 1
    %1265 = vsyncpa %s1264, 1

// kernel: decoder_block.3
$region0: #{decoder_block.3}
  #allocation0 [shape = 'u32[]', space=smem, size = 0x4, offset = 0x4, fixed_abs, tag = 'smem constant byte address 0x4 - core index']
  #allocation1 [shape = 'u32[144,128]{1,0:T(1,128)}', space=vmem, size = 0x12000, scoped, tag = 'internal scratch']
  #allocation2 [shape = 'f32[8,32]{1,0:T(8,128)}', space=vmem, size = 0x1000, scoped, tag = 'scratch operand']
  %s0 = inlined_call_operand.hbm [shape: f32[2,8,32], index: 0, kind: input, shape index: {}, may-alias: {0,1}]
  %s1 = inlined_call_operand.hbm [shape: f32[2,8,32], index: 1, kind: input, shape index: {}, may-alias: {0,1}]
  %s2 = inlined_call_operand.hbm [shape: f32[2,8,8], index: 2, kind: input, shape index: {}]
  %s3 = inlined_call_operand.vmem [shape: bf16[32,32], index: 3, kind: input, shape index: {}]
  %s4 = inlined_call_operand.vmem [shape: f32[1,32], index: 4, kind: input, shape index: {}]
  %s5 = inlined_call_operand.vmem [shape: bf16[32,64], index: 5, kind: input, shape index: {}]
  %s6 = inlined_call_operand.vmem [shape: f32[1,64], index: 6, kind: input, shape index: {}]
  %s7 = inlined_call_operand.hbm [shape: bf16[32,32], index: 7, kind: input, shape index: {}]
  %s8 = inlined_call_operand.vmem [shape: f32[1,32], index: 8, kind: input, shape index: {}]
  %s9 = inlined_call_operand.hbm [shape: f32[1,32], index: 9, kind: input, shape index: {}]
  %s10 = inlined_call_operand.hbm [shape: f32[1,32], index: 10, kind: input, shape index: {}]
  %s11 = inlined_call_operand.vmem [shape: f32[2,8,32], index: 11, kind: output, shape index: {}]
  %s12 = sld [smem:[#allocation0]]
  $region101: #{decoder_block.3} parent=0
    _
  %s14 = ssub.s32 1, %s12
  %s15 = scalar_select 0, %s14, %s12
  $region1: #{decoder_block.3} parent=0
    #allocation3 [shape = 'u8[8192]{0}', space=vmem, size = 0x2000, scoped, tag = 'input window, operand 0']
    #allocation4 [shape = 's32[2]{0}', space=sflag, size = 0x8, scoped, tag = 'scoped memory for decoder_block.3']
    #allocation5 [shape = 'u8[8192]{0}', space=vmem, size = 0x2000, scoped, tag = 'input window, operand 1']
    #allocation6 [shape = 's32[2]{0}', space=sflag, size = 0x8, scoped, tag = 'scoped memory for decoder_block.3']
    #allocation7 [shape = 'u8[8192]{0}', space=vmem, size = 0x2000, scoped, tag = 'input window, operand 2']
    #allocation8 [shape = 'u8[8192]{0}', space=vmem, size = 0x2000, scoped, tag = 'input window, operand 7, single buffered']
    #allocation9 [shape = 's32[1]{0}', space=sflag, size = 0x4, scoped, tag = 'scoped memory for decoder_block.3']
    #allocation10 [shape = 'u8[512]{0}', space=vmem, size = 0x400, scoped, tag = 'input window, operand 9, single buffered']
    #allocation11 [shape = 'u8[512]{0}', space=vmem, size = 0x400, scoped, tag = 'input window, operand 10, single buffered']
    #allocation12 [shape = 's32[1]{0}', space=sflag, size = 0x4, scoped, tag = 'scoped memory for decoder_block.3']
    %16 = vsyncpa [#allocation4], 0
    %s17 = scalar_lea.sflag [#allocation4], 1
    %18 = vsyncpa %s17, 0
    %19 = vsyncpa [#allocation6], 0
    %s20 = scalar_lea.sflag [#allocation6], 1
    %21 = vsyncpa %s20, 0
    %22 = vsyncpa [#allocation9], 0
    %23 = vsyncpa [#allocation12], 0
    loop: start=0, step=1, limit=4
    $region2: #{decoder_block.3} parent=1 // loop_pre_header
      _
    $region3: #{decoder_block.3} parent=1 // loop_header
      %s25 = sphi 0, %s29
      %p26 = scmp.ge.s32.totalorder %s25, 4
      %s32 = sphi 0, %s44
      %s33 = sphi 0, %s40
      %s34 = sphi 0, %s32
      %s35 = sphi 0, %s33
      %s36 = sphi 0, %s34
      %s37 = sphi 0, %s35
      %s49 = sphi 0, %s51
      %s52 = sphi 0, %s49
      %s53 = sphi 0, %s52
      %s69 = sphi 0, %s53
      %s75 = sphi 0, %s77
      %s78 = sphi 0, %s75
      %s79 = sphi 0, %s78
      %s95 = sphi 0, %s79
      %s103 = sphi 0, %s105
      %s106 = sphi 0, %s103
      %s107 = sphi 0, %s106
      %s123 = sphi 0, %s107
      %s127 = sphi 0, %s127
      %s129 = sphi 0, %s127
      %s130 = sphi 0, %s129
      %s144 = sphi 0, %s130
      %s148 = sphi 0, %s148
      %s150 = sphi 0, %s148
      %s151 = sphi 0, %s150
      %s165 = sphi 0, %s151
      %s169 = sphi 0, %s169
      %s171 = sphi 0, %s169
      %s172 = sphi 0, %s171
      %s186 = sphi 0, %s172
      %s190 = sphi 0, %s190
      %s192 = sphi 0, %s190
      %s193 = sphi 0, %s192
      %s207 = sphi 0, %s193
      %s211 = sphi 0, %s211
      %s213 = sphi 0, %s211
      %s214 = sphi 0, %s213
      %s228 = sphi 0, %s214
      %s232 = sphi 0, %s232
      %s234 = sphi 0, %s232
      %s235 = sphi 0, %s234
      %s249 = sphi 0, %s235
      %s253 = sphi 0, %s253
      %s255 = sphi 0, %s253
      %s256 = sphi 0, %s255
      %s270 = sphi 0, %s256
      %s274 = sphi 0, %s274
      %s276 = sphi 0, %s274
      %s277 = sphi 0, %s276
      %s291 = sphi 0, %s277
      %s299 = sphi 0, %s301
      %s302 = sphi 0, %s299
      %s303 = sphi 0, %s302
      %s319 = sphi 0, %s303
    $region4: #{decoder_block.3} parent=1 // loop_header_branch
      %28 = sbr.rel (%p26) target = $region8
    $region5: #{decoder_block.3} parent=1 // loop_body
      %s30 = ssub.s32 %s25, 1
      %s31 = ssub.s32 %s25, 2
      %s38 = sadd.s32 1, %s33
      %p39 = scmp.ge.s32.totalorder %s38, 1
      %s40 = scalar_select %p39, 0, %s38
      %s41 = sadd.s32 1, %s32
      %s42 = scalar_select %p39, %s41, %s32
      %p43 = scmp.ge.s32.totalorder %s42, 2
      %s44 = scalar_select %p43, 0, %s42
      %s45 = ssub.s32 %s32, %s44
      %s46 = ssub.s32 %s33, %s40
      %s47 = sor.u32 %s45, %s46
      %p48 = scmp.eq.s32.totalorder %s47, 0
      %s50 = sadd.s32 %s49, 1
      %s51 = scalar_select %p48, %s49, %s50
      %p54 = pneg %p48
      %p55 = scmp.eq.s32.totalorder %s25, 1
      %p56 = por %p54, %p55
      %p57 = scmp.ne.s32.totalorder %s49, %s52
      %p58 = scmp.eq.s32.totalorder %s25, 0
      %p59 = por %p57, %p58
      %p60 = scmp.ne.s32.totalorder %s49, %s52
      %p61 = scmp.eq.s32.totalorder %s30, 1
      %p62 = por %p60, %p61
      %p63 = scmp.ne.s32.totalorder %s52, %s53
      %p64 = scmp.eq.s32.totalorder %s30, 0
      %p65 = por %p63, %p64
      %p66 = scmp.ne.s32.totalorder %s52, %s53
      %p67 = scmp.eq.s32.totalorder %s31, 1
      %p68 = por %p66, %p67
      %p70 = scmp.ne.s32.totalorder %s53, %s69
      %p71 = scmp.eq.s32.totalorder %s31, 0
      %p72 = por %p70, %p71
      %s73 = ssub.s32 %s32, %s44
      %p74 = scmp.eq.s32.totalorder %s73, 0
      %s76 = sadd.s32 %s75, 1
      %s77 = scalar_select %p74, %s75, %s76
      %p80 = pneg %p74
      %p81 = scmp.eq.s32.totalorder %s25, 1
      %p82 = por %p80, %p81
      %p83 = scmp.ne.s32.totalorder %s75, %s78
      %p84 = scmp.eq.s32.totalorder %s25, 0
      %p85 = por %p83, %p84
      %p86 = scmp.ne.s32.totalorder %s75, %s78
      %p87 = scmp.eq.s32.totalorder %s30, 1
      %p88 = por %p86, %p87
      %p89 = scmp.ne.s32.totalorder %s78, %s79
      %p90 = scmp.eq.s32.totalorder %s30, 0
      %p91 = por %p89, %p90
      %p92 = scmp.ne.s32.totalorder %s78, %s79
      %p93 = scmp.eq.s32.totalorder %s31, 1
      %p94 = por %p92, %p93
      %p96 = scmp.ne.s32.totalorder %s79, %s95
      %p97 = scmp.eq.s32.totalorder %s31, 0
      %p98 = por %p96, %p97
      %s99 = ssub.s32 %s32, %s44
      %s100 = ssub.s32 %s33, %s40
      %s101 = sor.u32 %s99, %s100
      %p102 = scmp.eq.s32.totalorder %s101, 0
      %s104 = sadd.s32 %s103, 1
      %s105 = scalar_select %p102, %s103, %s104
      %p108 = pneg %p102
      %p109 = scmp.eq.s32.totalorder %s25, 1
      %p110 = por %p108, %p109
      %p111 = scmp.ne.s32.totalorder %s103, %s106
      %p112 = scmp.eq.s32.totalorder %s25, 0
      %p113 = por %p111, %p112
      %p114 = scmp.ne.s32.totalorder %s103, %s106
      %p115 = scmp.eq.s32.totalorder %s30, 1
      %p116 = por %p114, %p115
      %p117 = scmp.ne.s32.totalorder %s106, %s107
      %p118 = scmp.eq.s32.totalorder %s30, 0
      %p119 = por %p117, %p118
      %p120 = scmp.ne.s32.totalorder %s106, %s107
      %p121 = scmp.eq.s32.totalorder %s31, 1
      %p122 = por %p120, %p121
      %p124 = scmp.ne.s32.totalorder %s107, %s123
      %p125 = scmp.eq.s32.totalorder %s31, 0
      %p126 = por %p124, %p125
      %s128 = sadd.s32 %s127, 1
      %p131 = scmp.eq.s32.totalorder %s25, 1
      %p132 = scmp.ne.s32.totalorder %s127, %s129
      %p133 = scmp.eq.s32.totalorder %s25, 0
      %p134 = por %p132, %p133
      %p135 = scmp.ne.s32.totalorder %s127, %s129
      %p136 = scmp.eq.s32.totalorder %s30, 1
      %p137 = por %p135, %p136
      %p138 = scmp.ne.s32.totalorder %s129, %s130
      %p139 = scmp.eq.s32.totalorder %s30, 0
      %p140 = por %p138, %p139
      %p141 = scmp.ne.s32.totalorder %s129, %s130
      %p142 = scmp.eq.s32.totalorder %s31, 1
      %p143 = por %p141, %p142
      %p145 = scmp.ne.s32.totalorder %s130, %s144
      %p146 = scmp.eq.s32.totalorder %s31, 0
      %p147 = por %p145, %p146
      %s149 = sadd.s32 %s148, 1
      %p152 = scmp.eq.s32.totalorder %s25, 1
      %p153 = scmp.ne.s32.totalorder %s148, %s150
      %p154 = scmp.eq.s32.totalorder %s25, 0
      %p155 = por %p153, %p154
      %p156 = scmp.ne.s32.totalorder %s148, %s150
      %p157 = scmp.eq.s32.totalorder %s30, 1
      %p158 = por %p156, %p157
      %p159 = scmp.ne.s32.totalorder %s150, %s151
      %p160 = scmp.eq.s32.totalorder %s30, 0
      %p161 = por %p159, %p160
      %p162 = scmp.ne.s32.totalorder %s150, %s151
      %p163 = scmp.eq.s32.totalorder %s31, 1
      %p164 = por %p162, %p163
      %p166 = scmp.ne.s32.totalorder %s151, %s165
      %p167 = scmp.eq.s32.totalorder %s31, 0
      %p168 = por %p166, %p167
      %s170 = sadd.s32 %s169, 1
      %p173 = scmp.eq.s32.totalorder %s25, 1
      %p174 = scmp.ne.s32.totalorder %s169, %s171
      %p175 = scmp.eq.s32.totalorder %s25, 0
      %p176 = por %p174, %p175
      %p177 = scmp.ne.s32.totalorder %s169, %s171
      %p178 = scmp.eq.s32.totalorder %s30, 1
      %p179 = por %p177, %p178
      %p180 = scmp.ne.s32.totalorder %s171, %s172
      %p181 = scmp.eq.s32.totalorder %s30, 0
      %p182 = por %p180, %p181
      %p183 = scmp.ne.s32.totalorder %s171, %s172
      %p184 = scmp.eq.s32.totalorder %s31, 1
      %p185 = por %p183, %p184
      %p187 = scmp.ne.s32.totalorder %s172, %s186
      %p188 = scmp.eq.s32.totalorder %s31, 0
      %p189 = por %p187, %p188
      %s191 = sadd.s32 %s190, 1
      %p194 = scmp.eq.s32.totalorder %s25, 1
      %p195 = scmp.ne.s32.totalorder %s190, %s192
      %p196 = scmp.eq.s32.totalorder %s25, 0
      %p197 = por %p195, %p196
      %p198 = scmp.ne.s32.totalorder %s190, %s192
      %p199 = scmp.eq.s32.totalorder %s30, 1
      %p200 = por %p198, %p199
      %p201 = scmp.ne.s32.totalorder %s192, %s193
      %p202 = scmp.eq.s32.totalorder %s30, 0
      %p203 = por %p201, %p202
      %p204 = scmp.ne.s32.totalorder %s192, %s193
      %p205 = scmp.eq.s32.totalorder %s31, 1
      %p206 = por %p204, %p205
      %p208 = scmp.ne.s32.totalorder %s193, %s207
      %p209 = scmp.eq.s32.totalorder %s31, 0
      %p210 = por %p208, %p209
      %s212 = sadd.s32 %s211, 1
      %p215 = scmp.eq.s32.totalorder %s25, 1
      %p216 = scmp.ne.s32.totalorder %s211, %s213
      %p217 = scmp.eq.s32.totalorder %s25, 0
      %p218 = por %p216, %p217
      %p219 = scmp.ne.s32.totalorder %s211, %s213
      %p220 = scmp.eq.s32.totalorder %s30, 1
      %p221 = por %p219, %p220
      %p222 = scmp.ne.s32.totalorder %s213, %s214
      %p223 = scmp.eq.s32.totalorder %s30, 0
      %p224 = por %p222, %p223
      %p225 = scmp.ne.s32.totalorder %s213, %s214
      %p226 = scmp.eq.s32.totalorder %s31, 1
      %p227 = por %p225, %p226
      %p229 = scmp.ne.s32.totalorder %s214, %s228
      %p230 = scmp.eq.s32.totalorder %s31, 0
      %p231 = por %p229, %p230
      %s233 = sadd.s32 %s232, 1
      %p236 = scmp.eq.s32.totalorder %s25, 1
      %p237 = scmp.ne.s32.totalorder %s232, %s234
      %p238 = scmp.eq.s32.totalorder %s25, 0
      %p239 = por %p237, %p238
      %p240 = scmp.ne.s32.totalorder %s232, %s234
      %p241 = scmp.eq.s32.totalorder %s30, 1
      %p242 = por %p240, %p241
      %p243 = scmp.ne.s32.totalorder %s234, %s235
      %p244 = scmp.eq.s32.totalorder %s30, 0
      %p245 = por %p243, %p244
      %p246 = scmp.ne.s32.totalorder %s234, %s235
      %p247 = scmp.eq.s32.totalorder %s31, 1
      %p248 = por %p246, %p247
      %p250 = scmp.ne.s32.totalorder %s235, %s249
      %p251 = scmp.eq.s32.totalorder %s31, 0
      %p252 = por %p250, %p251
      %s254 = sadd.s32 %s253, 1
      %p257 = scmp.eq.s32.totalorder %s25, 1
      %p258 = scmp.ne.s32.totalorder %s253, %s255
      %p259 = scmp.eq.s32.totalorder %s25, 0
      %p260 = por %p258, %p259
      %p261 = scmp.ne.s32.totalorder %s253, %s255
      %p262 = scmp.eq.s32.totalorder %s30, 1
      %p263 = por %p261, %p262
      %p264 = scmp.ne.s32.totalorder %s255, %s256
      %p265 = scmp.eq.s32.totalorder %s30, 0
      %p266 = por %p264, %p265
      %p267 = scmp.ne.s32.totalorder %s255, %s256
      %p268 = scmp.eq.s32.totalorder %s31, 1
      %p269 = por %p267, %p268
      %p271 = scmp.ne.s32.totalorder %s256, %s270
      %p272 = scmp.eq.s32.totalorder %s31, 0
      %p273 = por %p271, %p272
      %s275 = sadd.s32 %s274, 1
      %p278 = scmp.eq.s32.totalorder %s25, 1
      %p279 = scmp.ne.s32.totalorder %s274, %s276
      %p280 = scmp.eq.s32.totalorder %s25, 0
      %p281 = por %p279, %p280
      %p282 = scmp.ne.s32.totalorder %s274, %s276
      %p283 = scmp.eq.s32.totalorder %s30, 1
      %p284 = por %p282, %p283
      %p285 = scmp.ne.s32.totalorder %s276, %s277
      %p286 = scmp.eq.s32.totalorder %s30, 0
      %p287 = por %p285, %p286
      %p288 = scmp.ne.s32.totalorder %s276, %s277
      %p289 = scmp.eq.s32.totalorder %s31, 1
      %p290 = por %p288, %p289
      %p292 = scmp.ne.s32.totalorder %s277, %s291
      %p293 = scmp.eq.s32.totalorder %s31, 0
      %p294 = por %p292, %p293
      %s295 = ssub.s32 %s32, %s44
      %s296 = ssub.s32 %s33, %s40
      %s297 = sor.u32 %s295, %s296
      %p298 = scmp.eq.s32.totalorder %s297, 0
      %s300 = sadd.s32 %s299, 1
      %s301 = scalar_select %p298, %s299, %s300
      %p304 = pneg %p298
      %p305 = scmp.eq.s32.totalorder %s25, 1
      %p306 = por %p304, %p305
      %p307 = scmp.ne.s32.totalorder %s299, %s302
      %p308 = scmp.eq.s32.totalorder %s25, 0
      %p309 = por %p307, %p308
      %p310 = scmp.ne.s32.totalorder %s299, %s302
      %p311 = scmp.eq.s32.totalorder %s30, 1
      %p312 = por %p310, %p311
      %p313 = scmp.ne.s32.totalorder %s302, %s303
      %p314 = scmp.eq.s32.totalorder %s30, 0
      %p315 = por %p313, %p314
      %p316 = scmp.ne.s32.totalorder %s302, %s303
      %p317 = scmp.eq.s32.totalorder %s31, 1
      %p318 = por %p316, %p317
      %p320 = scmp.ne.s32.totalorder %s303, %s319
      %p321 = scmp.eq.s32.totalorder %s31, 0
      %p322 = por %p320, %p321
      %p323 = scmp.le.s32.totalorder 1, %s25
      %p324 = scmp.lt.s32.totalorder %s25, 3
      %p325 = pnand %p323, %p324
      %p326 = pneg %p325
      // Predicated region
      $region9: #{decoder_block.3} parent=5 // pred_check
        _
      $region10: #{decoder_block.3} parent=5 // pred_check_branch
        %328 = sbr.rel (%p325) target = $region12
      $region11: #{decoder_block.3} parent=5 // pred_region
        %s329 = ssub.s32 %s25, 1
        // Predicated region
        $region13: #{decoder_block.3} parent=11 // pred_check
          %p330 = pneg %p140
        $region14: #{decoder_block.3} parent=11 // pred_check_branch
          %332 = sbr.rel (%p330) target = $region16
        $region15: #{decoder_block.3} parent=11 // pred_region
          _
        $region16: #{decoder_block.3} parent=11 // pred_fallthru
          _
        // Predicated region
        $region17: #{decoder_block.3} parent=11 // pred_check
          %p333 = pneg %p161
        $region18: #{decoder_block.3} parent=11 // pred_check_branch
          %335 = sbr.rel (%p333) target = $region20
        $region19: #{decoder_block.3} parent=11 // pred_region
          _
        $region20: #{decoder_block.3} parent=11 // pred_fallthru
          _
        // Predicated region
        $region21: #{decoder_block.3} parent=11 // pred_check
          %p336 = pneg %p182
        $region22: #{decoder_block.3} parent=11 // pred_check_branch
          %338 = sbr.rel (%p336) target = $region24
        $region23: #{decoder_block.3} parent=11 // pred_region
          _
        $region24: #{decoder_block.3} parent=11 // pred_fallthru
          _
        // Predicated region
        $region25: #{decoder_block.3} parent=11 // pred_check
          %p339 = pneg %p203
        $region26: #{decoder_block.3} parent=11 // pred_check_branch
          %341 = sbr.rel (%p339) target = $region28
        $region27: #{decoder_block.3} parent=11 // pred_region
          _
        $region28: #{decoder_block.3} parent=11 // pred_fallthru
          _
        // Predicated region
        $region29: #{decoder_block.3} parent=11 // pred_check
          %p342 = pneg %p224
        $region30: #{decoder_block.3} parent=11 // pred_check_branch
          %344 = sbr.rel (%p342) target = $region32
        $region31: #{decoder_block.3} parent=11 // pred_region
          %s346 = ssub.s32 256, 256
          %347 = vsyncadd [#allocation9], %s346
          %s348 = sshll.u32 [#allocation8], 4
          %s349 = int_to_ptr.vmem [resolvable:$true] %s348
          %354 = dma.hbm_to_vmem [thread:$0]  %s7, 256, %s349, [#allocation9], 64, 64, 4
        $region32: #{decoder_block.3} parent=11 // pred_fallthru
          _
        // Predicated region
        $region33: #{decoder_block.3} parent=11 // pred_check
          %p355 = pneg %p245
        $region34: #{decoder_block.3} parent=11 // pred_check_branch
          %357 = sbr.rel (%p355) target = $region36
        $region35: #{decoder_block.3} parent=11 // pred_region
          _
        $region36: #{decoder_block.3} parent=11 // pred_fallthru
          _
        // Predicated region
        $region37: #{decoder_block.3} parent=11 // pred_check
          %p358 = pneg %p266
        $region38: #{decoder_block.3} parent=11 // pred_check_branch
          %360 = sbr.rel (%p358) target = $region40
        $region39: #{decoder_block.3} parent=11 // pred_region
          %s362 = ssub.s32 16, 16
          %363 = vsyncadd [#allocation9], %s362
          %s365 = sshll.u32 [#allocation10], 4
          %s366 = int_to_ptr.vmem [resolvable:$true] %s365
          %368 = dma.hbm_to_vmem [thread:$0]  %s9, 16, %s366, [#allocation9]
        $region40: #{decoder_block.3} parent=11 // pred_fallthru
          _
        // Predicated region
        $region41: #{decoder_block.3} parent=11 // pred_check
          %p369 = pneg %p287
        $region42: #{decoder_block.3} parent=11 // pred_check_branch
          %371 = sbr.rel (%p369) target = $region44
        $region43: #{decoder_block.3} parent=11 // pred_region
          %s373 = ssub.s32 16, 16
          %374 = vsyncadd [#allocation12], %s373
          %s376 = sshll.u32 [#allocation11], 4
          %s377 = int_to_ptr.vmem [resolvable:$true] %s376
          %379 = dma.hbm_to_vmem [thread:$0]  %s10, 16, %s377, [#allocation12]
        $region44: #{decoder_block.3} parent=11 // pred_fallthru
          _
      $region12: #{decoder_block.3} parent=5 // pred_fallthru
        _
      %p380 = scmp.lt.s32.totalorder %s25, 2
      // Predicated region
      $region45: #{decoder_block.3} parent=5 // pred_check
        %p381 = pneg %p380
      $region46: #{decoder_block.3} parent=5 // pred_check_branch
        %383 = sbr.rel (%p381) target = $region48
      $region47: #{decoder_block.3} parent=5 // pred_region
        // Predicated region
        $region49: #{decoder_block.3} parent=47 // pred_check
          %p384 = pneg %p59
        $region50: #{decoder_block.3} parent=47 // pred_check_branch
          %386 = sbr.rel (%p384) target = $region52
        $region51: #{decoder_block.3} parent=47 // pred_region
          %s387 = sand.u32 %s49, 1
          %s388 = scalar_lea.sflag [#allocation4], %s387
          %s389 = sand.u32 %s49, 1
          %s390 = smul.addr %s389, 8
          %s391 = scalar_lea.vmem [#allocation3], %s390
          %s393 = ssub.s32 128, 128
          %394 = vsyncadd %s388, %s393
          %s395 = sadd.s32 %s33, %s32
          %s396 = smul.addr %s395, 128
          %s397 = scalar_lea.hbm %s0, %s396
          %s399 = sshll.u32 %s391, 4
          %s400 = int_to_ptr.vmem [resolvable:$true] %s399
          %402 = dma.hbm_to_vmem [thread:$0]  %s397, 128, %s400, %s388
        $region52: #{decoder_block.3} parent=47 // pred_fallthru
          _
        // Predicated region
        $region53: #{decoder_block.3} parent=47 // pred_check
          %p403 = pneg %p85
        $region54: #{decoder_block.3} parent=47 // pred_check_branch
          %405 = sbr.rel (%p403) target = $region56
        $region55: #{decoder_block.3} parent=47 // pred_region
          %s406 = sand.u32 %s25, 1
          %s407 = scalar_lea.sflag [#allocation6], %s406
          %s408 = sand.u32 %s75, 1
          %s409 = smul.addr %s408, 8
          %s410 = scalar_lea.vmem [#allocation5], %s409
          %s412 = ssub.s32 128, 128
          %413 = vsyncadd %s407, %s412
          %s414 = smul.addr %s32, 128
          %s415 = scalar_lea.hbm %s1, %s414
          %s417 = sshll.u32 %s410, 4
          %s418 = int_to_ptr.vmem [resolvable:$true] %s417
          %420 = dma.hbm_to_vmem [thread:$0]  %s415, 128, %s418, %s407
        $region56: #{decoder_block.3} parent=47 // pred_fallthru
          _
        // Predicated region
        $region57: #{decoder_block.3} parent=47 // pred_check
          %p421 = pneg %p113
        $region58: #{decoder_block.3} parent=47 // pred_check_branch
          %423 = sbr.rel (%p421) target = $region60
        $region59: #{decoder_block.3} parent=47 // pred_region
          %s424 = sand.u32 %s25, 1
          %s425 = scalar_lea.sflag [#allocation6], %s424
          %s426 = sand.u32 %s103, 1
          %s427 = smul.addr %s426, 8
          %s428 = scalar_lea.vmem [#allocation7], %s427
          %s430 = ssub.s32 128, 128
          %431 = vsyncadd %s425, %s430
          %s432 = sadd.s32 %s33, %s32
          %s433 = smul.addr %s432, 128
          %s434 = scalar_lea.hbm %s2, %s433
          %s436 = sshll.u32 %s428, 4
          %s437 = int_to_ptr.vmem [resolvable:$true] %s436
          %439 = dma.hbm_to_vmem [thread:$0]  %s434, 128, %s437, %s425
        $region60: #{decoder_block.3} parent=47 // pred_fallthru
          _
      $region48: #{decoder_block.3} parent=5 // pred_fallthru
        _
      %p440 = scmp.le.s32.totalorder 1, %s25
      %p441 = scmp.lt.s32.totalorder %s25, 3
      %p442 = pnand %p440, %p441
      %p443 = pneg %p442
      // Predicated region
      $region61: #{decoder_block.3} parent=5 // pred_check
        _
      $region62: #{decoder_block.3} parent=5 // pred_check_branch
        %445 = sbr.rel (%p442) target = $region64
      $region63: #{decoder_block.3} parent=5 // pred_region
        %s446 = ssub.s32 %s25, 1
        %s447 = sand.u32 %s52, 1
        %s448 = scalar_lea.sflag [#allocation4], %s447
        %s449 = sand.u32 %s52, 1
        %s450 = smul.addr %s449, 8
        %s451 = scalar_lea.vmem [#allocation3], %s450
        // Predicated region
        $region65: #{decoder_block.3} parent=63 // pred_check
          %p452 = pneg %p65
        $region66: #{decoder_block.3} parent=63 // pred_check_branch
          %454 = sbr.rel (%p452) target = $region68
        $region67: #{decoder_block.3} parent=63 // pred_region
          %455 = dma.done %s448, 128
        $region68: #{decoder_block.3} parent=63 // pred_fallthru
          _
        %s456 = sand.u32 %s30, 1
        %s457 = scalar_lea.sflag [#allocation6], %s456
        %s458 = sand.u32 %s78, 1
        %s459 = smul.addr %s458, 8
        %s460 = scalar_lea.vmem [#allocation5], %s459
        // Predicated region
        $region69: #{decoder_block.3} parent=63 // pred_check
          %p461 = pneg %p91
        $region70: #{decoder_block.3} parent=63 // pred_check_branch
          %463 = sbr.rel (%p461) target = $region72
        $region71: #{decoder_block.3} parent=63 // pred_region
          %464 = dma.done %s457, 128
        $region72: #{decoder_block.3} parent=63 // pred_fallthru
          _
        %s465 = sand.u32 %s30, 1
        %s466 = scalar_lea.sflag [#allocation6], %s465
        %s467 = sand.u32 %s106, 1
        %s468 = smul.addr %s467, 8
        %s469 = scalar_lea.vmem [#allocation7], %s468
        // Predicated region
        $region73: #{decoder_block.3} parent=63 // pred_check
          %p470 = pneg %p119
        $region74: #{decoder_block.3} parent=63 // pred_check_branch
          %472 = sbr.rel (%p470) target = $region76
        $region75: #{decoder_block.3} parent=63 // pred_region
          %473 = dma.done %s466, 128
        $region76: #{decoder_block.3} parent=63 // pred_fallthru
          _
        // Predicated region
        $region77: #{decoder_block.3} parent=63 // pred_check
          %p474 = pneg %p224
        $region78: #{decoder_block.3} parent=63 // pred_check_branch
          %476 = sbr.rel (%p474) target = $region80
        $region79: #{decoder_block.3} parent=63 // pred_region
          %477 = dma.done [#allocation9], 256
        $region80: #{decoder_block.3} parent=63 // pred_fallthru
          _
        // Predicated region
        $region81: #{decoder_block.3} parent=63 // pred_check
          %p478 = pneg %p266
        $region82: #{decoder_block.3} parent=63 // pred_check_branch
          %480 = sbr.rel (%p478) target = $region84
        $region83: #{decoder_block.3} parent=63 // pred_region
          %481 = dma.done [#allocation9], 16
        $region84: #{decoder_block.3} parent=63 // pred_fallthru
          _
        // Predicated region
        $region85: #{decoder_block.3} parent=63 // pred_check
          %p482 = pneg %p287
        $region86: #{decoder_block.3} parent=63 // pred_check_branch
          %484 = sbr.rel (%p482) target = $region88
        $region87: #{decoder_block.3} parent=63 // pred_region
          %485 = dma.done [#allocation12], 16
        $region88: #{decoder_block.3} parent=63 // pred_fallthru
          _
        %s486 = sand.u32 %s52, 1
        %s487 = scalar_lea.sflag [#allocation4], %s486
        %s488 = sand.u32 %s52, 1
        %s489 = smul.addr %s488, 8
        %s490 = scalar_lea.vmem [#allocation3], %s489
        %p491 = pneg %p65
        %p492 = pneg %p62
        %s493 = sand.u32 %s30, 1
        %s494 = scalar_lea.sflag [#allocation6], %s493
        %s495 = sand.u32 %s78, 1
        %s496 = smul.addr %s495, 8
        %s497 = scalar_lea.vmem [#allocation5], %s496
        %p498 = pneg %p91
        %p499 = pneg %p88
        %s500 = sand.u32 %s30, 1
        %s501 = scalar_lea.sflag [#allocation6], %s500
        %s502 = sand.u32 %s106, 1
        %s503 = smul.addr %s502, 8
        %s504 = scalar_lea.vmem [#allocation7], %s503
        %p505 = pneg %p119
        %p506 = pneg %p116
        %p507 = pneg %p140
        %p508 = pneg %p137
        %p509 = pneg %p161
        %p510 = pneg %p158
        %p511 = pneg %p182
        %p512 = pneg %p179
        %p513 = pneg %p203
        %p514 = pneg %p200
        %p515 = pneg %p224
        %p516 = pneg %p221
        %p517 = pneg %p245
        %p518 = pneg %p242
        %p519 = pneg %p266
        %p520 = pneg %p263
        %p521 = pneg %p287
        %p522 = pneg %p284
        %p523 = pneg %p315
        %p524 = pneg %p312
        %p525 = scmp.lt.s32.totalorder %s34, 1
        %s526 = scalar_select %p525, %s34, 1
        %p527 = scmp.lt.s32.totalorder %s35, 0
        %s528 = scalar_select %p527, %s35, 0
        %s529 = sadd.s32 %s528, %s526
        %s530 = smul.addr %s529, 8
        %s531 = scalar_lea.vmem %s11, %s530
        %p532 = scmp.lt.s32.totalorder %s34, 1
        %s533 = scalar_select %p532, %s34, 1
        %p534 = scmp.lt.s32.totalorder %s35, 0
        %s535 = scalar_select %p534, %s35, 0
        %s536 = sadd.s32 %s535, %s533
        %s537 = smul.addr %s536, 8
        %s538 = scalar_lea.vmem %s11, %s537
        %v540 = vld [vmem:[%s451] sm:$0xff]
        %v541 = vld [vmem:[%s460] sm:$0xff]
        %v542 = vld [vmem:[%s469] sm:$0xff]
        %vm543 = vcmp.eq.f32.partialorder %v542, 0.0
        %v544 = vpack.c.bf16 %v540, %v540
        %v545 = vld [vmem:[%s3] sm:$0xf]
        %v546 = vld [vmem:[%s3 + $0x4] sm:$0xf]
        %v547 = vld [vmem:[%s3 + $0x8] sm:$0xf]
        %v548 = vld [vmem:[%s3 + $0xc] sm:$0xf]
        %v549 = vld [vmem:[%s4] sm:$0x1]
        %v551 = vlaneseq
        %v552 = vshrl.u32 %v551, 7
        %v553 = vsub.s32 0, %v552
        %v554 = vrot.slane %v549, %v553
        %v560 = vunpack.c.l.b16 %v545
        %v561 = vunpack.c.l.b16 %v546
        %v562 = vunpack.c.l.b16 %v547
        %v563 = vunpack.c.l.b16 %v548
        %v564 = vpack.c.b16 %v561, %v560
        %v565 = vpack.c.b16 %v563, %v562
        %vm568 = vcmask 261120
        %v570 = vsel %vm568, %v544, 0
        %572 = vmatprep.subr.bf16.mxu0 0
        %573 = vmatpush1.bf16.msra.mxu0 0
        %574 = vmatprep.subr.bf16.mxu0 0
        %575 = vmatpush1.bf16.msra.mxu0 0
        %576 = vmatprep.subr.bf16.mxu0 0
        %577 = vmatpush1.bf16.msra.mxu0 0
        %578 = vmatprep.subr.bf16.mxu0 0
        %579 = vmatpush1.bf16.msra.mxu0 0
        %580 = vmatprep.subr.bf16.mxu0 0
        %581 = vmatpush1.bf16.msra.mxu0 0
        %582 = vmatprep.subr.bf16.mxu0 0
        %583 = vmatpush1.bf16.msra.mxu0 0
        %584 = vmatprep.subr.bf16.mxu0 0
        %585 = vmatpush1.bf16.msra.mxu0 %v565
        %586 = vmatprep.subr.bf16.mxu0 0
        %587 = vmatpush1.bf16.msra.mxu0 %v564
        %588 = vmatprep.subr.bf16.mxu0 0
        %589 = vmatpush2.bf16.msra.mxu0 0
        %590 = vmatprep.subr.bf16.mxu0 0
        %591 = vmatpush2.bf16.msra.mxu0 0
        %592 = vmatprep.subr.bf16.mxu0 0
        %593 = vmatpush2.bf16.msra.mxu0 0
        %594 = vmatprep.subr.bf16.mxu0 0
        %595 = vmatpush2.bf16.msra.mxu0 0
        %596 = vmatprep.subr.bf16.mxu0 0
        %597 = vmatpush2.bf16.msra.mxu0 0
        %598 = vmatprep.subr.bf16.mxu0 0
        %599 = vmatpush2.bf16.msra.mxu0 0
        %600 = vmatprep.subr.bf16.mxu0 0
        %601 = vmatpush2.bf16.msra.mxu0 0
        %602 = vmatprep.subr.bf16.mxu0 0
        %603 = vmatpush2.bf16.msra.mxu0 0
        %604 = vmatprep.mubr.bf16.mxu0 0
        %605 = vmatmul.mubr.bf16.gmra.mxu0 %v570
        %v606 = vpop.f32.mrf.mxu0
        %v607 = vadd.f32 %v554, %v606
        %v608 = vpop.f32.mrf.mxu0
        %v609 = vpop.f32.mrf.mxu0
        %v610 = vpop.f32.mrf.mxu0
        %611 = vdwg.mxu0
        %v612 = vmul.f32 %v607, 0.35355338
        %v613 = vpack.c.bf16 %v541, %v541
        %v614 = vld [vmem:[%s5] sm:$0xf]
        %v615 = vld [vmem:[%s5 + $0x4] sm:$0xf]
        %v616 = vld [vmem:[%s5 + $0x8] sm:$0xf]
        %v617 = vld [vmem:[%s5 + $0xc] sm:$0xf]
        %v618 = vld [vmem:[%s6] sm:$0x1]
        %v620 = vlaneseq
        %v621 = vshrl.u32 %v620, 7
        %v622 = vsub.s32 0, %v621
        %v623 = vrot.slane %v618, %v622
        %v629 = vunpack.c.l.b16 %v614
        %v630 = vunpack.c.l.b16 %v615
        %v631 = vunpack.c.l.b16 %v616
        %v632 = vunpack.c.l.b16 %v617
        %v633 = vpack.c.b16 %v630, %v629
        %v634 = vpack.c.b16 %v632, %v631
        %v638 = vsel %vm568, %v613, 0
        %640 = vmatprep.subr.bf16.mxu0 0
        %641 = vmatpush1.bf16.msra.mxu0 0
        %642 = vmatprep.subr.bf16.mxu0 0
        %643 = vmatpush1.bf16.msra.mxu0 0
        %644 = vmatprep.subr.bf16.mxu0 0
        %645 = vmatpush1.bf16.msra.mxu0 0
        %646 = vmatprep.subr.bf16.mxu0 0
        %647 = vmatpush1.bf16.msra.mxu0 0
        %648 = vmatprep.subr.bf16.mxu0 0
        %649 = vmatpush1.bf16.msra.mxu0 0
        %650 = vmatprep.subr.bf16.mxu0 0
        %651 = vmatpush1.bf16.msra.mxu0 0
        %652 = vmatprep.subr.bf16.mxu0 0
        %653 = vmatpush1.bf16.msra.mxu0 %v634
        %654 = vmatprep.subr.bf16.mxu0 0
        %655 = vmatpush1.bf16.msra.mxu0 %v633
        %656 = vmatprep.subr.bf16.mxu0 0
        %657 = vmatpush2.bf16.msra.mxu0 0
        %658 = vmatprep.subr.bf16.mxu0 0
        %659 = vmatpush2.bf16.msra.mxu0 0
        %660 = vmatprep.subr.bf16.mxu0 0
        %661 = vmatpush2.bf16.msra.mxu0 0
        %662 = vmatprep.subr.bf16.mxu0 0
        %663 = vmatpush2.bf16.msra.mxu0 0
        %664 = vmatprep.subr.bf16.mxu0 0
        %665 = vmatpush2.bf16.msra.mxu0 0
        %666 = vmatprep.subr.bf16.mxu0 0
        %667 = vmatpush2.bf16.msra.mxu0 0
        %668 = vmatprep.subr.bf16.mxu0 0
        %669 = vmatpush2.bf16.msra.mxu0 0
        %670 = vmatprep.subr.bf16.mxu0 0
        %671 = vmatpush2.bf16.msra.mxu0 0
        %672 = vmatprep.mubr.bf16.mxu0 0
        %673 = vmatmul.mubr.bf16.gmra.mxu0 %v638
        %v674 = vpop.f32.mrf.mxu0
        %v675 = vadd.f32 %v623, %v674
        %v676 = vpop.f32.mrf.mxu0
        %v677 = vpop.f32.mrf.mxu0
        %v678 = vpop.f32.mrf.mxu0
        %679 = vdwg.mxu0
        %v680 = vpack.c.bf16 %v612, %v612
        %v681 = vpack.c.bf16 %v675, %v675
        %vm682 = vcmask 64512
        %v684 = vsel %vm682, %v680, 0
        %v687 = vsel %vm682, %v681, 0
        %689 = vmatprep.subr.bf16.mxu0 0
        %690 = vmatpush1.bf16.xpose.msra.mxu0 0
        %691 = vmatprep.subr.bf16.mxu0 0
        %692 = vmatpush1.bf16.xpose.msra.mxu0 0
        %693 = vmatprep.subr.bf16.mxu0 0
        %694 = vmatpush1.bf16.xpose.msra.mxu0 0
        %695 = vmatprep.subr.bf16.mxu0 0
        %696 = vmatpush1.bf16.xpose.msra.mxu0 0
        %697 = vmatprep.subr.bf16.mxu0 0
        %698 = vmatpush1.bf16.xpose.msra.mxu0 0
        %699 = vmatprep.subr.bf16.mxu0 0
        %700 = vmatpush1.bf16.xpose.msra.mxu0 0
        %701 = vmatprep.subr.bf16.mxu0 0
        %702 = vmatpush1.bf16.xpose.msra.mxu0 0
        %703 = vmatprep.subr.bf16.mxu0 0
        %704 = vmatpush1.bf16.xpose.msra.mxu0 %v687
        %705 = vmatprep.subr.bf16.mxu0 0
        %706 = vmatpush2.bf16.xpose.msra.mxu0 0
        %707 = vmatprep.subr.bf16.mxu0 0
        %708 = vmatpush2.bf16.xpose.msra.mxu0 0
        %709 = vmatprep.subr.bf16.mxu0 0
        %710 = vmatpush2.bf16.xpose.msra.mxu0 0
        %711 = vmatprep.subr.bf16.mxu0 0
        %712 = vmatpush2.bf16.xpose.msra.mxu0 0
        %713 = vmatprep.subr.bf16.mxu0 0
        %714 = vmatpush2.bf16.xpose.msra.mxu0 0
        %715 = vmatprep.subr.bf16.mxu0 0
        %716 = vmatpush2.bf16.xpose.msra.mxu0 0
        %717 = vmatprep.subr.bf16.mxu0 0
        %718 = vmatpush2.bf16.xpose.msra.mxu0 0
        %719 = vmatprep.subr.bf16.mxu0 0
        %720 = vmatpush2.bf16.xpose.msra.mxu0 0
        %721 = vmatprep.mubr.bf16.mxu0 0
        %722 = vmatmul.mubr.bf16.gmra.mxu0 %v684
        %v723 = vpop.f32.mrf.mxu0
        %v724 = vadd.f32 0.0, %v723
        %v725 = vpop.f32.mrf.mxu0
        %v726 = vpop.f32.mrf.mxu0
        %v727 = vpop.f32.mrf.mxu0
        %728 = vdwg.mxu0
        %v729 = vsel %vm543, -1e+15, %v724
        %v730 = vsel %vm682, %v729, -inf
        %731 = vmax.xlane.f32.xlu0 %v730
        %v732 = vpop.xlane.xlu0 %731
        %v733 = vsub.f32 %v729, %v732
        %v734 = vmul.f32 %v733, 1.442695
        %v735 = vpow.pop %v734
        %v736 = vsel %vm682, %v735, 0.0
        %737 = vadd.xlane.f32.xlu0 %v736
        %v738 = vpop.xlane.xlu0 %737
        %v739 = vrcp.pop %v738
        %v740 = vmul.f32 %v735, %v739
        %v741 = vpack.c.bf16 %v740, %v740
        %743 = vrot.lane.b32.xlu0 %v681, 96
        %v744 = vpop.permute.xlu0 %743
        %v746 = vsel %vm682, %v741, 0
        %vm748 = vcmask 1043456
        %v750 = vsel %vm748, %v744, 0
        %752 = vmatprep.subr.bf16.mxu0 0
        %753 = vmatpush1.bf16.msra.mxu0 0
        %754 = vmatprep.subr.bf16.mxu0 0
        %755 = vmatpush1.bf16.msra.mxu0 0
        %756 = vmatprep.subr.bf16.mxu0 0
        %757 = vmatpush1.bf16.msra.mxu0 0
        %758 = vmatprep.subr.bf16.mxu0 0
        %759 = vmatpush1.bf16.msra.mxu0 0
        %760 = vmatprep.subr.bf16.mxu0 0
        %761 = vmatpush1.bf16.msra.mxu0 0
        %762 = vmatprep.subr.bf16.mxu0 0
        %763 = vmatpush1.bf16.msra.mxu0 0
        %764 = vmatprep.subr.bf16.mxu0 0
        %765 = vmatpush1.bf16.msra.mxu0 0
        %766 = vmatprep.subr.bf16.mxu0 0
        %767 = vmatpush1.bf16.msra.mxu0 %v750
        %768 = vmatprep.subr.bf16.mxu0 0
        %769 = vmatpush2.bf16.msra.mxu0 0
        %770 = vmatprep.subr.bf16.mxu0 0
        %771 = vmatpush2.bf16.msra.mxu0 0
        %772 = vmatprep.subr.bf16.mxu0 0
        %773 = vmatpush2.bf16.msra.mxu0 0
        %774 = vmatprep.subr.bf16.mxu0 0
        %775 = vmatpush2.bf16.msra.mxu0 0
        %776 = vmatprep.subr.bf16.mxu0 0
        %777 = vmatpush2.bf16.msra.mxu0 0
        %778 = vmatprep.subr.bf16.mxu0 0
        %779 = vmatpush2.bf16.msra.mxu0 0
        %780 = vmatprep.subr.bf16.mxu0 0
        %781 = vmatpush2.bf16.msra.mxu0 0
        %782 = vmatprep.subr.bf16.mxu0 0
        %783 = vmatpush2.bf16.msra.mxu0 0
        %784 = vmatprep.mubr.bf16.mxu0 0
        %785 = vmatmul.mubr.bf16.gmra.mxu0 %v746
        %v786 = vpop.f32.mrf.mxu0
        %v787 = vadd.f32 0.0, %v786
        %v788 = vpop.f32.mrf.mxu0
        %v789 = vpop.f32.mrf.mxu0
        %v790 = vpop.f32.mrf.mxu0
        %791 = vdwg.mxu0
        %792 = vst.msk [vmem:[#allocation2] sm:$0xff] %vm682, %v787
        %794 = vrot.lane.b32.xlu0 %v680, 120
        %v795 = vpop.permute.xlu0 %794
        %796 = vrot.lane.b32.xlu0 %v681, 120
        %v797 = vpop.permute.xlu0 %796
        %v799 = vsel %vm682, %v795, 0
        %v802 = vsel %vm682, %v797, 0
        %804 = vmatprep.subr.bf16.mxu0 0
        %805 = vmatpush1.bf16.xpose.msra.mxu0 0
        %806 = vmatprep.subr.bf16.mxu0 0
        %807 = vmatpush1.bf16.xpose.msra.mxu0 0
        %808 = vmatprep.subr.bf16.mxu0 0
        %809 = vmatpush1.bf16.xpose.msra.mxu0 0
        %810 = vmatprep.subr.bf16.mxu0 0
        %811 = vmatpush1.bf16.xpose.msra.mxu0 0
        %812 = vmatprep.subr.bf16.mxu0 0
        %813 = vmatpush1.bf16.xpose.msra.mxu0 0
        %814 = vmatprep.subr.bf16.mxu0 0
        %815 = vmatpush1.bf16.xpose.msra.mxu0 0
        %816 = vmatprep.subr.bf16.mxu0 0
        %817 = vmatpush1.bf16.xpose.msra.mxu0 0
        %818 = vmatprep.subr.bf16.mxu0 0
        %819 = vmatpush1.bf16.xpose.msra.mxu0 %v802
        %820 = vmatprep.subr.bf16.mxu0 0
        %821 = vmatpush2.bf16.xpose.msra.mxu0 0
        %822 = vmatprep.subr.bf16.mxu0 0
        %823 = vmatpush2.bf16.xpose.msra.mxu0 0
        %824 = vmatprep.subr.bf16.mxu0 0
        %825 = vmatpush2.bf16.xpose.msra.mxu0 0
        %826 = vmatprep.subr.bf16.mxu0 0
        %827 = vmatpush2.bf16.xpose.msra.mxu0 0
        %828 = vmatprep.subr.bf16.mxu0 0
        %829 = vmatpush2.bf16.xpose.msra.mxu0 0
        %830 = vmatprep.subr.bf16.mxu0 0
        %831 = vmatpush2.bf16.xpose.msra.mxu0 0
        %832 = vmatprep.subr.bf16.mxu0 0
        %833 = vmatpush2.bf16.xpose.msra.mxu0 0
        %834 = vmatprep.subr.bf16.mxu0 0
        %835 = vmatpush2.bf16.xpose.msra.mxu0 0
        %836 = vmatprep.mubr.bf16.mxu0 0
        %837 = vmatmul.mubr.bf16.gmra.mxu0 %v799
        %v838 = vpop.f32.mrf.mxu0
        %v839 = vadd.f32 0.0, %v838
        %v840 = vpop.f32.mrf.mxu0
        %v841 = vpop.f32.mrf.mxu0
        %v842 = vpop.f32.mrf.mxu0
        %843 = vdwg.mxu0
        %v844 = vsel %vm543, -1e+15, %v839
        %v845 = vsel %vm682, %v844, -inf
        %846 = vmax.xlane.f32.xlu0 %v845
        %v847 = vpop.xlane.xlu0 %846
        %v848 = vsub.f32 %v844, %v847
        %v849 = vmul.f32 %v848, 1.442695
        %v850 = vpow.pop %v849
        %v851 = vsel %vm682, %v850, 0.0
        %852 = vadd.xlane.f32.xlu0 %v851
        %v853 = vpop.xlane.xlu0 %852
        %v854 = vrcp.pop %v853
        %v855 = vmul.f32 %v850, %v854
        %v856 = vpack.c.bf16 %v855, %v855
        %857 = vrot.lane.b32.xlu0 %v681, 88
        %v858 = vpop.permute.xlu0 %857
        %v860 = vsel %vm682, %v856, 0
        %v863 = vsel %vm748, %v858, 0
        %865 = vmatprep.subr.bf16.mxu0 0
        %866 = vmatpush1.bf16.msra.mxu0 0
        %867 = vmatprep.subr.bf16.mxu0 0
        %868 = vmatpush1.bf16.msra.mxu0 0
        %869 = vmatprep.subr.bf16.mxu0 0
        %870 = vmatpush1.bf16.msra.mxu0 0
        %871 = vmatprep.subr.bf16.mxu0 0
        %872 = vmatpush1.bf16.msra.mxu0 0
        %873 = vmatprep.subr.bf16.mxu0 0
        %874 = vmatpush1.bf16.msra.mxu0 0
        %875 = vmatprep.subr.bf16.mxu0 0
        %876 = vmatpush1.bf16.msra.mxu0 0
        %877 = vmatprep.subr.bf16.mxu0 0
        %878 = vmatpush1.bf16.msra.mxu0 0
        %879 = vmatprep.subr.bf16.mxu0 0
        %880 = vmatpush1.bf16.msra.mxu0 %v863
        %881 = vmatprep.subr.bf16.mxu0 0
        %882 = vmatpush2.bf16.msra.mxu0 0
        %883 = vmatprep.subr.bf16.mxu0 0
        %884 = vmatpush2.bf16.msra.mxu0 0
        %885 = vmatprep.subr.bf16.mxu0 0
        %886 = vmatpush2.bf16.msra.mxu0 0
        %887 = vmatprep.subr.bf16.mxu0 0
        %888 = vmatpush2.bf16.msra.mxu0 0
        %889 = vmatprep.subr.bf16.mxu0 0
        %890 = vmatpush2.bf16.msra.mxu0 0
        %891 = vmatprep.subr.bf16.mxu0 0
        %892 = vmatpush2.bf16.msra.mxu0 0
        %893 = vmatprep.subr.bf16.mxu0 0
        %894 = vmatpush2.bf16.msra.mxu0 0
        %895 = vmatprep.subr.bf16.mxu0 0
        %896 = vmatpush2.bf16.msra.mxu0 0
        %897 = vmatprep.mubr.bf16.mxu0 0
        %898 = vmatmul.mubr.bf16.gmra.mxu0 %v860
        %v899 = vpop.f32.mrf.mxu0
        %v900 = vadd.f32 0.0, %v899
        %v901 = vpop.f32.mrf.mxu0
        %v902 = vpop.f32.mrf.mxu0
        %v903 = vpop.f32.mrf.mxu0
        %904 = vdwg.mxu0
        %906 = vrot.lane.b32.xlu0 %v900, 8
        %v907 = vpop.permute.xlu0 %906
        %vm909 = vcmask 130112
        %910 = vst.msk [vmem:[#allocation2] sm:$0xff] %vm909, %v907
        %911 = vrot.lane.b32.xlu0 %v680, 112
        %v912 = vpop.permute.xlu0 %911
        %913 = vrot.lane.b32.xlu0 %v681, 112
        %v914 = vpop.permute.xlu0 %913
        %v916 = vsel %vm682, %v912, 0
        %v919 = vsel %vm682, %v914, 0
        %921 = vmatprep.subr.bf16.mxu0 0
        %922 = vmatpush1.bf16.xpose.msra.mxu0 0
        %923 = vmatprep.subr.bf16.mxu0 0
        %924 = vmatpush1.bf16.xpose.msra.mxu0 0
        %925 = vmatprep.subr.bf16.mxu0 0
        %926 = vmatpush1.bf16.xpose.msra.mxu0 0
        %927 = vmatprep.subr.bf16.mxu0 0
        %928 = vmatpush1.bf16.xpose.msra.mxu0 0
        %929 = vmatprep.subr.bf16.mxu0 0
        %930 = vmatpush1.bf16.xpose.msra.mxu0 0
        %931 = vmatprep.subr.bf16.mxu0 0
        %932 = vmatpush1.bf16.xpose.msra.mxu0 0
        %933 = vmatprep.subr.bf16.mxu0 0
        %934 = vmatpush1.bf16.xpose.msra.mxu0 0
        %935 = vmatprep.subr.bf16.mxu0 0
        %936 = vmatpush1.bf16.xpose.msra.mxu0 %v919
        %937 = vmatprep.subr.bf16.mxu0 0
        %938 = vmatpush2.bf16.xpose.msra.mxu0 0
        %939 = vmatprep.subr.bf16.mxu0 0
        %940 = vmatpush2.bf16.xpose.msra.mxu0 0
        %941 = vmatprep.subr.bf16.mxu0 0
        %942 = vmatpush2.bf16.xpose.msra.mxu0 0
        %943 = vmatprep.subr.bf16.mxu0 0
        %944 = vmatpush2.bf16.xpose.msra.mxu0 0
        %945 = vmatprep.subr.bf16.mxu0 0
        %946 = vmatpush2.bf16.xpose.msra.mxu0 0
        %947 = vmatprep.subr.bf16.mxu0 0
        %948 = vmatpush2.bf16.xpose.msra.mxu0 0
        %949 = vmatprep.subr.bf16.mxu0 0
        %950 = vmatpush2.bf16.xpose.msra.mxu0 0
        %951 = vmatprep.subr.bf16.mxu0 0
        %952 = vmatpush2.bf16.xpose.msra.mxu0 0
        %953 = vmatprep.mubr.bf16.mxu0 0
        %954 = vmatmul.mubr.bf16.gmra.mxu0 %v916
        %v955 = vpop.f32.mrf.mxu0
        %v956 = vadd.f32 0.0, %v955
        %v957 = vpop.f32.mrf.mxu0
        %v958 = vpop.f32.mrf.mxu0
        %v959 = vpop.f32.mrf.mxu0
        %960 = vdwg.mxu0
        %v961 = vsel %vm543, -1e+15, %v956
        %v962 = vsel %vm682, %v961, -inf
        %963 = vmax.xlane.f32.xlu0 %v962
        %v964 = vpop.xlane.xlu0 %963
        %v965 = vsub.f32 %v961, %v964
        %v966 = vmul.f32 %v965, 1.442695
        %v967 = vpow.pop %v966
        %v968 = vsel %vm682, %v967, 0.0
        %969 = vadd.xlane.f32.xlu0 %v968
        %v970 = vpop.xlane.xlu0 %969
        %v971 = vrcp.pop %v970
        %v972 = vmul.f32 %v967, %v971
        %v973 = vpack.c.bf16 %v972, %v972
        %974 = vrot.lane.b32.xlu0 %v681, 80
        %v975 = vpop.permute.xlu0 %974
        %v977 = vsel %vm682, %v973, 0
        %v980 = vsel %vm748, %v975, 0
        %982 = vmatprep.subr.bf16.mxu0 0
        %983 = vmatpush1.bf16.msra.mxu0 0
        %984 = vmatprep.subr.bf16.mxu0 0
        %985 = vmatpush1.bf16.msra.mxu0 0
        %986 = vmatprep.subr.bf16.mxu0 0
        %987 = vmatpush1.bf16.msra.mxu0 0
        %988 = vmatprep.subr.bf16.mxu0 0
        %989 = vmatpush1.bf16.msra.mxu0 0
        %990 = vmatprep.subr.bf16.mxu0 0
        %991 = vmatpush1.bf16.msra.mxu0 0
        %992 = vmatprep.subr.bf16.mxu0 0
        %993 = vmatpush1.bf16.msra.mxu0 0
        %994 = vmatprep.subr.bf16.mxu0 0
        %995 = vmatpush1.bf16.msra.mxu0 0
        %996 = vmatprep.subr.bf16.mxu0 0
        %997 = vmatpush1.bf16.msra.mxu0 %v980
        %998 = vmatprep.subr.bf16.mxu0 0
        %999 = vmatpush2.bf16.msra.mxu0 0
        %1000 = vmatprep.subr.bf16.mxu0 0
        %1001 = vmatpush2.bf16.msra.mxu0 0
        %1002 = vmatprep.subr.bf16.mxu0 0
        %1003 = vmatpush2.bf16.msra.mxu0 0
        %1004 = vmatprep.subr.bf16.mxu0 0
        %1005 = vmatpush2.bf16.msra.mxu0 0
        %1006 = vmatprep.subr.bf16.mxu0 0
        %1007 = vmatpush2.bf16.msra.mxu0 0
        %1008 = vmatprep.subr.bf16.mxu0 0
        %1009 = vmatpush2.bf16.msra.mxu0 0
        %1010 = vmatprep.subr.bf16.mxu0 0
        %1011 = vmatpush2.bf16.msra.mxu0 0
        %1012 = vmatprep.subr.bf16.mxu0 0
        %1013 = vmatpush2.bf16.msra.mxu0 0
        %1014 = vmatprep.mubr.bf16.mxu0 0
        %1015 = vmatmul.mubr.bf16.gmra.mxu0 %v977
        %v1016 = vpop.f32.mrf.mxu0
        %v1017 = vadd.f32 0.0, %v1016
        %v1018 = vpop.f32.mrf.mxu0
        %v1019 = vpop.f32.mrf.mxu0
        %v1020 = vpop.f32.mrf.mxu0
        %1021 = vdwg.mxu0
        %1023 = vrot.lane.b32.xlu0 %v1017, 16
        %v1024 = vpop.permute.xlu0 %1023
        %vm1026 = vcmask 195712
        %1027 = vst.msk [vmem:[#allocation2] sm:$0xff] %vm1026, %v1024
        %1028 = vrot.lane.b32.xlu0 %v680, 104
        %v1029 = vpop.permute.xlu0 %1028
        %1030 = vrot.lane.b32.xlu0 %v681, 104
        %v1031 = vpop.permute.xlu0 %1030
        %v1033 = vsel %vm682, %v1029, 0
        %v1036 = vsel %vm682, %v1031, 0
        %1038 = vmatprep.subr.bf16.mxu0 0
        %1039 = vmatpush1.bf16.xpose.msra.mxu0 0
        %1040 = vmatprep.subr.bf16.mxu0 0
        %1041 = vmatpush1.bf16.xpose.msra.mxu0 0
        %1042 = vmatprep.subr.bf16.mxu0 0
        %1043 = vmatpush1.bf16.xpose.msra.mxu0 0
        %1044 = vmatprep.subr.bf16.mxu0 0
        %1045 = vmatpush1.bf16.xpose.msra.mxu0 0
        %1046 = vmatprep.subr.bf16.mxu0 0
        %1047 = vmatpush1.bf16.xpose.msra.mxu0 0
        %1048 = vmatprep.subr.bf16.mxu0 0
        %1049 = vmatpush1.bf16.xpose.msra.mxu0 0
        %1050 = vmatprep.subr.bf16.mxu0 0
        %1051 = vmatpush1.bf16.xpose.msra.mxu0 0
        %1052 = vmatprep.subr.bf16.mxu0 0
        %1053 = vmatpush1.bf16.xpose.msra.mxu0 %v1036
        %1054 = vmatprep.subr.bf16.mxu0 0
        %1055 = vmatpush2.bf16.xpose.msra.mxu0 0
        %1056 = vmatprep.subr.bf16.mxu0 0
        %1057 = vmatpush2.bf16.xpose.msra.mxu0 0
        %1058 = vmatprep.subr.bf16.mxu0 0
        %1059 = vmatpush2.bf16.xpose.msra.mxu0 0
        %1060 = vmatprep.subr.bf16.mxu0 0
        %1061 = vmatpush2.bf16.xpose.msra.mxu0 0
        %1062 = vmatprep.subr.bf16.mxu0 0
        %1063 = vmatpush2.bf16.xpose.msra.mxu0 0
        %1064 = vmatprep.subr.bf16.mxu0 0
        %1065 = vmatpush2.bf16.xpose.msra.mxu0 0
        %1066 = vmatprep.subr.bf16.mxu0 0
        %1067 = vmatpush2.bf16.xpose.msra.mxu0 0
        %1068 = vmatprep.subr.bf16.mxu0 0
        %1069 = vmatpush2.bf16.xpose.msra.mxu0 0
        %1070 = vmatprep.mubr.bf16.mxu0 0
        %1071 = vmatmul.mubr.bf16.gmra.mxu0 %v1033
        %v1072 = vpop.f32.mrf.mxu0
        %v1073 = vadd.f32 0.0, %v1072
        %v1074 = vpop.f32.mrf.mxu0
        %v1075 = vpop.f32.mrf.mxu0
        %v1076 = vpop.f32.mrf.mxu0
        %1077 = vdwg.mxu0
        %v1078 = vsel %vm543, -1e+15, %v1073
        %v1079 = vsel %vm682, %v1078, -inf
        %1080 = vmax.xlane.f32.xlu0 %v1079
        %v1081 = vpop.xlane.xlu0 %1080
        %v1082 = vsub.f32 %v1078, %v1081
        %v1083 = vmul.f32 %v1082, 1.442695
        %v1084 = vpow.pop %v1083
        %v1085 = vsel %vm682, %v1084, 0.0
        %1086 = vadd.xlane.f32.xlu0 %v1085
        %v1087 = vpop.xlane.xlu0 %1086
        %v1088 = vrcp.pop %v1087
        %v1089 = vmul.f32 %v1084, %v1088
        %v1090 = vpack.c.bf16 %v1089, %v1089
        %1091 = vrot.lane.b32.xlu0 %v681, 72
        %v1092 = vpop.permute.xlu0 %1091
        %v1094 = vsel %vm682, %v1090, 0
        %v1097 = vsel %vm748, %v1092, 0
        %1099 = vmatprep.subr.bf16.mxu0 0
        %1100 = vmatpush1.bf16.msra.mxu0 0
        %1101 = vmatprep.subr.bf16.mxu0 0
        %1102 = vmatpush1.bf16.msra.mxu0 0
        %1103 = vmatprep.subr.bf16.mxu0 0
        %1104 = vmatpush1.bf16.msra.mxu0 0
        %1105 = vmatprep.subr.bf16.mxu0 0
        %1106 = vmatpush1.bf16.msra.mxu0 0
        %1107 = vmatprep.subr.bf16.mxu0 0
        %1108 = vmatpush1.bf16.msra.mxu0 0
        %1109 = vmatprep.subr.bf16.mxu0 0
        %1110 = vmatpush1.bf16.msra.mxu0 0
        %1111 = vmatprep.subr.bf16.mxu0 0
        %1112 = vmatpush1.bf16.msra.mxu0 0
        %1113 = vmatprep.subr.bf16.mxu0 0
        %1114 = vmatpush1.bf16.msra.mxu0 %v1097
        %1115 = vmatprep.subr.bf16.mxu0 0
        %1116 = vmatpush2.bf16.msra.mxu0 0
        %1117 = vmatprep.subr.bf16.mxu0 0
        %1118 = vmatpush2.bf16.msra.mxu0 0
        %1119 = vmatprep.subr.bf16.mxu0 0
        %1120 = vmatpush2.bf16.msra.mxu0 0
        %1121 = vmatprep.subr.bf16.mxu0 0
        %1122 = vmatpush2.bf16.msra.mxu0 0
        %1123 = vmatprep.subr.bf16.mxu0 0
        %1124 = vmatpush2.bf16.msra.mxu0 0
        %1125 = vmatprep.subr.bf16.mxu0 0
        %1126 = vmatpush2.bf16.msra.mxu0 0
        %1127 = vmatprep.subr.bf16.mxu0 0
        %1128 = vmatpush2.bf16.msra.mxu0 0
        %1129 = vmatprep.subr.bf16.mxu0 0
        %1130 = vmatpush2.bf16.msra.mxu0 0
        %1131 = vmatprep.mubr.bf16.mxu0 0
        %1132 = vmatmul.mubr.bf16.gmra.mxu0 %v1094
        %v1133 = vpop.f32.mrf.mxu0
        %v1134 = vadd.f32 0.0, %v1133
        %v1135 = vpop.f32.mrf.mxu0
        %v1136 = vpop.f32.mrf.mxu0
        %v1137 = vpop.f32.mrf.mxu0
        %1138 = vdwg.mxu0
        %1140 = vrot.lane.b32.xlu0 %v1134, 24
        %v1141 = vpop.permute.xlu0 %1140
        %vm1143 = vcmask 261312
        %1144 = vst.msk [vmem:[#allocation2] sm:$0xff] %vm1143, %v1141
        %v1145 = vld [vmem:[#allocation2] sm:$0xff]
        %v1146 = vpack.c.bf16 %v1145, %v1145
        %v1147 = vld [vmem:[#allocation8] sm:$0xf]
        %v1148 = vld [vmem:[#allocation8 + $0x4] sm:$0xf]
        %v1149 = vld [vmem:[#allocation8 + $0x8] sm:$0xf]
        %v1150 = vld [vmem:[#allocation8 + $0xc] sm:$0xf]
        %v1151 = vld [vmem:[%s8] sm:$0x1]
        %v1153 = vlaneseq
        %v1154 = vshrl.u32 %v1153, 7
        %v1155 = vsub.s32 0, %v1154
        %v1156 = vrot.slane %v1151, %v1155
        %v1162 = vunpack.c.l.b16 %v1147
        %v1163 = vunpack.c.l.b16 %v1148
        %v1164 = vunpack.c.l.b16 %v1149
        %v1165 = vunpack.c.l.b16 %v1150
        %v1166 = vpack.c.b16 %v1163, %v1162
        %v1167 = vpack.c.b16 %v1165, %v1164
        %v1171 = vsel %vm568, %v1146, 0
        %1173 = vmatprep.subr.bf16.mxu0 0
        %1174 = vmatpush1.bf16.msra.mxu0 0
        %1175 = vmatprep.subr.bf16.mxu0 0
        %1176 = vmatpush1.bf16.msra.mxu0 0
        %1177 = vmatprep.subr.bf16.mxu0 0
        %1178 = vmatpush1.bf16.msra.mxu0 0
        %1179 = vmatprep.subr.bf16.mxu0 0
        %1180 = vmatpush1.bf16.msra.mxu0 0
        %1181 = vmatprep.subr.bf16.mxu0 0
        %1182 = vmatpush1.bf16.msra.mxu0 0
        %1183 = vmatprep.subr.bf16.mxu0 0
        %1184 = vmatpush1.bf16.msra.mxu0 0
        %1185 = vmatprep.subr.bf16.mxu0 0
        %1186 = vmatpush1.bf16.msra.mxu0 %v1167
        %1187 = vmatprep.subr.bf16.mxu0 0
        %1188 = vmatpush1.bf16.msra.mxu0 %v1166
        %1189 = vmatprep.subr.bf16.mxu0 0
        %1190 = vmatpush2.bf16.msra.mxu0 0
        %1191 = vmatprep.subr.bf16.mxu0 0
        %1192 = vmatpush2.bf16.msra.mxu0 0
        %1193 = vmatprep.subr.bf16.mxu0 0
        %1194 = vmatpush2.bf16.msra.mxu0 0
        %1195 = vmatprep.subr.bf16.mxu0 0
        %1196 = vmatpush2.bf16.msra.mxu0 0
        %1197 = vmatprep.subr.bf16.mxu0 0
        %1198 = vmatpush2.bf16.msra.mxu0 0
        %1199 = vmatprep.subr.bf16.mxu0 0
        %1200 = vmatpush2.bf16.msra.mxu0 0
        %1201 = vmatprep.subr.bf16.mxu0 0
        %1202 = vmatpush2.bf16.msra.mxu0 0
        %1203 = vmatprep.subr.bf16.mxu0 0
        %1204 = vmatpush2.bf16.msra.mxu0 0
        %1205 = vmatprep.mubr.bf16.mxu0 0
        %1206 = vmatmul.mubr.bf16.gmra.mxu0 %v1171
        %v1207 = vpop.f32.mrf.mxu0
        %v1208 = vadd.f32 %v1156, %v1207
        %v1209 = vpop.f32.mrf.mxu0
        %v1210 = vpop.f32.mrf.mxu0
        %v1211 = vpop.f32.mrf.mxu0
        %1212 = vdwg.mxu0
        %v1213 = vadd.f32 %v1208, %v540
        %v1214 = vsel %vm568, %v1213, 0.0
        %1215 = vadd.xlane.f32.xlu0 %v1214
        %v1216 = vpop.xlane.xlu0 %1215
        %v1217 = vrcp.pop 32.0
        %v1218 = vmul.f32 %v1216, %v1217
        %v1219 = vsub.f32 %v1213, %v1218
        %v1220 = vmul.f32 %v1219, %v1219
        %v1221 = vsel %vm568, %v1220, 0.0
        %1222 = vadd.xlane.f32.xlu0 %v1221
        %v1223 = vpop.xlane.xlu0 %1222
        %v1224 = vmul.f32 %v1223, %v1217
        %v1225 = vadd.f32 %v1224, 1e-05
        %v1226 = vrsqrt.pop %v1225
        %v1227 = vmul.f32 %v1219, %v1226
        %v1228 = vld [vmem:[#allocation10] sm:$0x1]
        %v1230 = vlaneseq
        %v1231 = vshrl.u32 %v1230, 7
        %v1232 = vsub.s32 0, %v1231
        %v1233 = vrot.slane %v1228, %v1232
        %v1235 = vmul.f32 %v1227, %v1233
        %v1236 = vld [vmem:[#allocation11] sm:$0x1]
        %v1238 = vlaneseq
        %v1239 = vshrl.u32 %v1238, 7
        %v1240 = vsub.s32 0, %v1239
        %v1241 = vrot.slane %v1236, %v1240
        %v1243 = vadd.f32 %v1235, %v1241
        %1244 = vst.msk [vmem:[%s538] sm:$0xff] %vm568, %v1243
        %p1245 = scmp.lt.s32.totalorder %s34, 1
        %s1246 = scalar_select %p1245, %s34, 1
        %p1247 = scmp.lt.s32.totalorder %s35, 0
        %s1248 = scalar_select %p1247, %s35, 0
        %s1249 = sadd.s32 %s1248, %s1246
        %s1250 = smul.addr %s1249, 8
        %s1251 = scalar_lea.vmem %s11, %s1250
        // Predicated region
        $region89: #{decoder_block.3} parent=63 // pred_check
          %p1252 = pneg %p312
        $region90: #{decoder_block.3} parent=63 // pred_check_branch
          %1254 = sbr.rel (%p1252) target = $region92
        $region91: #{decoder_block.3} parent=63 // pred_region
          _
        $region92: #{decoder_block.3} parent=63 // pred_fallthru
          _
      $region64: #{decoder_block.3} parent=5 // pred_fallthru
        _
      %p1255 = scmp.le.s32.totalorder 2, %s25
      // Predicated region
      $region93: #{decoder_block.3} parent=5 // pred_check
        %p1256 = pneg %p1255
      $region94: #{decoder_block.3} parent=5 // pred_check_branch
        %1258 = sbr.rel (%p1256) target = $region96
      $region95: #{decoder_block.3} parent=5 // pred_region
        %s1259 = ssub.s32 %s25, 2
        // Predicated region
        $region97: #{decoder_block.3} parent=95 // pred_check
          %p1260 = pneg %p318
        $region98: #{decoder_block.3} parent=95 // pred_check_branch
          %1262 = sbr.rel (%p1260) target = $region100
        $region99: #{decoder_block.3} parent=95 // pred_region
          %p1263 = scmp.lt.s32.totalorder %s36, 1
          %s1264 = scalar_select %p1263, %s36, 1
          %p1265 = scmp.lt.s32.totalorder %s37, 0
          %s1266 = scalar_select %p1265, %s37, 0
          %s1267 = sadd.s32 %s1266, %s1264
          %s1268 = smul.addr %s1267, 8
          %s1269 = scalar_lea.vmem %s11, %s1268
        $region100: #{decoder_block.3} parent=95 // pred_fallthru
          _
      $region96: #{decoder_block.3} parent=5 // pred_fallthru
        _
    $region6: #{decoder_block.3} parent=1 // loop_footer
      %s29 = sadd.s32 1, %s25
    $region7: #{decoder_block.3} parent=1 // loop_footer_branch
      %24 = sbr.rel target = $region3
    $region8: #{decoder_block.3} parent=1 // loop_exit
      _
    %1270 = vsyncpa [#allocation4], 1
    %s1271 = scalar_lea.sflag [#allocation4], 1
    %1272 = vsyncpa %s1271, 1
    %1273 = vsyncpa [#allocation6], 1
    %s1274 = scalar_lea.sflag [#allocation6], 1
    %1275 = vsyncpa %s1274, 1
    %1276 = vsyncpa [#allocation9], 1
    %1277 = vsyncpa [#allocation12], 1

</llo_original>
